<compile_context>
chip_gen: v6e
topology: v6e:2x2x1
jax: 0.10.0
libtpu: 0.0.40
codegen_flags: <defaults>
</compile_context>

<pallas_src>
import functools

import jax
import jax.numpy as jnp
from jax import lax
from jax.experimental import pallas as pl
from jax.experimental.pallas import tpu as pltpu

EPS = 1e-5
LANE = 128


def _round_up(x, m):
    return (x + m - 1) // m * m


# ----------------------------------------------------------------------------
# Pallas kernel: conv1 (in-VMEM im2col, 1 matmul) + bn1 + relu
#              + conv2 (halo-padded scratch, in-VMEM im2col, 1 matmul) + bn2
#              + shortcut (1x1 matmul + bn, or identity) + add + relu
# ----------------------------------------------------------------------------
def _make_kernel(N, Ho, Wo, Cp, Pp, stride, has_sc_conv):
    M = N * Ho * Wo

    def bn(y, g_ref, b_ref, relu=False):
        # One-pass batch stats (mean + E[x^2]) in f32 -> half the XLU reduction passes.
        m = jnp.mean(y, axis=0, keepdims=True)
        v = jnp.mean(y * y, axis=0, keepdims=True) - m * m
        out = (y - m) * (g_ref[...] * lax.rsqrt(v + EPS)) + b_ref[...]
        return jnp.maximum(out, 0.0) if relu else out

    def kernel(*refs):
        if has_sc_conv:
            (x_ref, w1_ref, w2_ref, g1_ref, b1_ref, g2_ref, b2_ref,
             ws_ref, gs_ref, bs_ref, out_ref, pad_ref) = refs
        else:
            (x_ref, w1_ref, w2_ref, g1_ref, b1_ref, g2_ref, b2_ref,
             out_ref, pad_ref) = refs

        # ---- conv1: in-VMEM im2col from the phase-decomposed input.
        # Every tap is a static stride-1 slice with lane-dense channels, then a
        # SINGLE (M, 9*Cp) x (9*Cp, Pp) bf16 MXU matmul with f32 accumulation.
        taps = []
        for kh in range(3):
            ah, rh = divmod(kh, stride)
            for kw in range(3):
                aw, rw = divmod(kw, stride)
                patch = x_ref[rh * stride + rw, :, ah:ah + Ho, aw:aw + Wo, :]
                taps.append(patch.reshape(M, Cp))
        cols1 = jnp.concatenate(taps, axis=-1)                        # (M, 9*Cp) bf16
        y1 = jnp.dot(cols1, w1_ref[...], preferred_element_type=jnp.float32)

        # ---- bn1 (training-mode batch stats) + relu (f32)
        y1 = bn(y1, g1_ref, b1_ref, relu=True)

        # ---- conv2: write interior into padded scratch, zero ONLY the 1-px halo.
        zrow = jnp.zeros((N, 1, Wo + 2, Pp), pad_ref.dtype)
        zcol = jnp.zeros((N, Ho, 1, Pp), pad_ref.dtype)
        pad_ref[:, 0:1, :, :] = zrow
        pad_ref[:, Ho + 1:Ho + 2, :, :] = zrow
        pad_ref[:, 1:Ho + 1, 0:1, :] = zcol
        pad_ref[:, 1:Ho + 1, Wo + 1:Wo + 2, :] = zcol
        pad_ref[:, 1:Ho + 1, 1:Wo + 1, :] = y1.reshape(N, Ho, Wo, Pp)

        # conv2 as ONE K = 9*Pp matmul on an in-VMEM im2col (bf16 operands).
        cols2 = jnp.concatenate(
            [pad_ref[:, kh:kh + Ho, kw:kw + Wo, :].reshape(M, Pp)
             for kh in range(3) for kw in range(3)], axis=-1)         # (M, 9*Pp)
        y2 = jnp.dot(cols2.astype(jnp.bfloat16), w2_ref[...],
                     preferred_element_type=jnp.float32)
        y2 = bn(y2, g2_ref, b2_ref)

        # ---- shortcut: reads the same phase-decomposed input (no extra DMA).
        # 1x1 conv / identity reads x at padded position stride*ho + 1.
        off, r = divmod(1, stride)
        x_sc = x_ref[r * stride + r, :, off:off + Ho, off:off + Wo, :].reshape(M, Cp)
        if has_sc_conv:
            sc = jnp.dot(x_sc, ws_ref[...], preferred_element_type=jnp.float32)
            sc = bn(sc, gs_ref, bs_ref)
        else:
            sc = x_sc.astype(jnp.float32)          # identity path (Cp == Pp here)

        out_ref[...] = jnp.maximum(y2 + sc, 0.0).astype(out_ref.dtype)

    return kernel


# ----------------------------------------------------------------------------
# Wrapper: layout / padding / phase decomposition in plain JAX, then one fused
# Pallas call.  Public interface is NCHW to match the PyTorch module.
# ----------------------------------------------------------------------------
def basic_block_pallas(x_nchw, params, stride):
    N, Cin, H, W = x_nchw.shape
    P = params["w1"].shape[-1]
    Ho = (H - 1) // stride + 1
    Wo = (W - 1) // stride + 1
    M = N * Ho * Wo
    has_sc_conv = (stride != 1) or (Cin != P)

    Cp = _round_up(Cin, LANE)      # lane-dense input channels
    Pp = _round_up(P, LANE)        # lane-dense output channels

    # NHWC, zero-pad: 1-px conv halo, channels -> Cp, and bottom/right so that
    # (H+2, W+2) are multiples of `stride` for the phase split.
    x = jnp.transpose(x_nchw, (0, 2, 3, 1)).astype(jnp.float32)
    Hp, Wp = _round_up(H + 2, stride), _round_up(W + 2, stride)
    xp = jnp.pad(x, ((0, 0), (1, Hp - H - 1), (1, Wp - W - 1), (0, Cp - Cin)))
    Hs, Ws = Hp // stride, Wp // stride
    # Phase decomposition (space-to-depth): xph[rh*s+rw, n, i, j, c] = xp[n, i*s+rh, j*s+rw, c].
    # Total HBM bytes == padded input (no 9x im2col expansion); all kernel-side
    # conv taps become static stride-1 slices.
    xph = xp.reshape(N, Hs, stride, Ws, stride, Cp).transpose(2, 4, 0, 1, 3, 5)
    xph = xph.reshape(stride * stride, N, Hs, Ws, Cp).astype(jnp.bfloat16)

    # Conv weights: HWIO -> zero-pad channels -> (9*C, P) matrices, bf16 MXU operands.
    w1 = jnp.pad(params["w1"], ((0, 0), (0, 0), (0, Cp - Cin), (0, Pp - P)))
    w1m = w1.reshape(9 * Cp, Pp).astype(jnp.bfloat16)
    w2 = jnp.pad(params["w2"], ((0, 0), (0, 0), (0, Pp - P), (0, Pp - P)))
    w2m = w2.reshape(9 * Pp, Pp).astype(jnp.bfloat16)

    def pvec(v):   # BN gamma/beta -> (1, Pp) f32, zero-padded channels
        return jnp.pad(v.reshape(1, -1).astype(jnp.float32), ((0, 0), (0, Pp - P)))

    args = [xph, w1m, w2m, pvec(params["g1"]), pvec(params["b1"]),
            pvec(params["g2"]), pvec(params["b2"])]
    if has_sc_conv:   # skip dead shortcut-parameter DMAs on identity blocks
        wsm = jnp.pad(params["ws"], ((0, Cp - Cin), (0, Pp - P))).astype(jnp.bfloat16)
        args += [wsm, pvec(params["gs"]), pvec(params["bs"])]

    kernel = _make_kernel(N, Ho, Wo, Cp, Pp, stride, has_sc_conv)
    vspec = pl.BlockSpec(memory_space=pltpu.MemorySpace.VMEM)

    # TODO(synk): for production-size layers, tile M over a grid with a two-pass
    # BatchNorm (stats pass + normalize pass) so DMA overlaps MXU work and the
    # working set fits v7x's 64 MiB VMEM; at these shapes the whole fused block
    # fits comfortably in VMEM, so a single invocation is used.
    out_flat = pl.pallas_call(
        kernel,
        out_shape=jax.ShapeDtypeStruct((M, Pp), jnp.float32),
        in_specs=[vspec] * len(args),
        out_specs=vspec,
        scratch_shapes=[pltpu.VMEM((N, Ho + 2, Wo + 2, Pp), jnp.float32)],
        compiler_params=pltpu.CompilerParams(vmem_limit_bytes=32 * 1024 * 1024),
    )(*args)

    out = out_flat.reshape(N, Ho, Wo, Pp)[:, :, :, :P]
    # TODO(synk): when chaining blocks, keep NHWC end-to-end to drop these transposes.
    return jnp.transpose(out, (0, 3, 1, 2))


# ----------------------------------------------------------------------------
# Pure-JAX reference (same precision policy as the kernel: bf16 conv operands,
# f32 accumulation, f32 training-mode BatchNorm) -- for correctness check only.
# ----------------------------------------------------------------------------
def _bn_train(y, g, b):
    m = jnp.mean(y, axis=(0, 1, 2), keepdims=True)
    v = jnp.mean(jnp.square(y - m), axis=(0, 1, 2), keepdims=True)
    return (y - m) * g.reshape(1, 1, 1, -1) * lax.rsqrt(v + EPS) + b.reshape(1, 1, 1, -1)


def basic_block_reference(x_nchw, params, stride):
    Cin = x_nchw.shape[1]
    P = params["w1"].shape[-1]
    bf = jnp.bfloat16
    dn = ("NHWC", "HWIO", "NHWC")

    def conv(a, w, s, pad):
        return lax.conv_general_dilated(a.astype(bf), w.astype(bf), (s, s), pad,
                                        dimension_numbers=dn,
                                        preferred_element_type=jnp.float32)

    x = jnp.transpose(x_nchw, (0, 2, 3, 1)).astype(jnp.float32)
    y = conv(x, params["w1"], stride, ((1, 1), (1, 1)))
    y = jnp.maximum(_bn_train(y, params["g1"], params["b1"]), 0.0)
    y = conv(y, params["w2"], 1, ((1, 1), (1, 1)))
    y = _bn_train(y, params["g2"], params["b2"])
    if stride != 1 or Cin != P:
        sc = conv(x, params["ws"].reshape(1, 1, Cin, P), stride, ((0, 0), (0, 0)))
        sc = _bn_train(sc, params["gs"], params["bs"])
    else:
        sc = x.astype(bf).astype(jnp.float32)   # kernel feeds identity path through bf16 too
    return jnp.transpose(jnp.maximum(y + sc, 0.0), (0, 3, 1, 2))


# ----------------------------------------------------------------------------
if __name__ == "__main__":
    def make_params(key, cin, planes):
        ks = jax.random.split(key, 9)
        return {
            "w1": 0.1 * jax.random.normal(ks[0], (3, 3, cin, planes), jnp.float32),
            "w2": 0.1 * jax.random.normal(ks[1], (3, 3, planes, planes), jnp.float32),
            "ws": 0.1 * jax.random.normal(ks[2], (cin, planes), jnp.float32),
            "g1": 1.0 + 0.1 * jax.random.normal(ks[3], (planes,), jnp.float32),
            "b1": 0.1 * jax.random.normal(ks[4], (planes,), jnp.float32),
            "g2": 1.0 + 0.1 * jax.random.normal(ks[5], (planes,), jnp.float32),
            "b2": 0.1 * jax.random.normal(ks[6], (planes,), jnp.float32),
            "gs": 1.0 + 0.1 * jax.random.normal(ks[7], (planes,), jnp.float32),
            "bs": 0.1 * jax.random.normal(ks[8], (planes,), jnp.float32),
        }

    key = jax.random.PRNGKey(0)
    k_pa, k_pb, k_xa, k_xb = jax.random.split(key, 4)

    # Config A: downsampling block (stride=2, channel change) -> conv shortcut.
    N, CIN, PLANES, H, W, STRIDE = 2, 4, 8, 16, 16, 2
    params_a = make_params(k_pa, CIN, PLANES)
    x_a = jax.random.normal(k_xa, (N, CIN, H, W), jnp.float32)
    fwd_a = jax.jit(functools.partial(basic_block_pallas, stride=STRIDE))
    out_a = jax.block_until_ready(fwd_a(x_a, params_a))
    ref_a = basic_block_reference(x_a, params_a, STRIDE)
    assert out_a.shape == (N, PLANES, H // STRIDE, W // STRIDE), out_a.shape
    err_a = float(jnp.max(jnp.abs(out_a - ref_a)))
    assert err_a < 5e-3, f"config A mismatch vs reference: max abs err {err_a}"

    # Config B: identity-shortcut block (stride=1, same channels).
    params_b = make_params(k_pb, PLANES, PLANES)
    x_b = jax.random.normal(k_xb, (N, PLANES, H, W), jnp.float32)
    fwd_b = jax.jit(functools.partial(basic_block_pallas, stride=1))
    out_b = jax.block_until_ready(fwd_b(x_b, params_b))
    ref_b = basic_block_reference(x_b, params_b, 1)
    assert out_b.shape == (N, PLANES, H, W), out_b.shape
    err_b = float(jnp.max(jnp.abs(out_b - ref_b)))
    assert err_b < 5e-3, f"config B mismatch vs reference: max abs err {err_b}"

    print("KERNEL_OK")
</pallas_src>

<mosaic_0001>
module attributes {stable_mosaic.version = 11 : i64} {
  func.func @kernel(%arg0: memref<4x2x9x9x128xbf16, #tpu.memory_space<vmem>>, %arg1: memref<1152x128xbf16, #tpu.memory_space<vmem>>, %arg2: memref<1152x128xbf16, #tpu.memory_space<vmem>>, %arg3: memref<1x128xf32, #tpu.memory_space<vmem>>, %arg4: memref<1x128xf32, #tpu.memory_space<vmem>>, %arg5: memref<1x128xf32, #tpu.memory_space<vmem>>, %arg6: memref<1x128xf32, #tpu.memory_space<vmem>>, %arg7: memref<128x128xbf16, #tpu.memory_space<vmem>>, %arg8: memref<1x128xf32, #tpu.memory_space<vmem>>, %arg9: memref<1x128xf32, #tpu.memory_space<vmem>>, %arg10: memref<128x128xf32, #tpu.memory_space<vmem>>, %arg11: memref<2x10x10x128xf32, #tpu.memory_space<vmem>>) attributes {dimension_semantics = [], scalar_prefetch = 0 : i64, scratch_operands = 1 : i64, tpu.core_type = #tpu.core_type<tc>} {
    %c0 = arith.constant 0 : index
    %c0_0 = arith.constant 0 : index
    %c0_1 = arith.constant 0 : index
    %c0_2 = arith.constant 0 : index
    %c0_3 = arith.constant 0 : index
    %0 = vector.load %arg0[%c0, %c0_0, %c0_1, %c0_2, %c0_3] : memref<4x2x9x9x128xbf16, #tpu.memory_space<vmem>>, vector<1x2x8x8x128xbf16>
    %1 = vector.shape_cast %0 : vector<1x2x8x8x128xbf16> to vector<2x8x8x128xbf16>
    %2 = vector.shape_cast %1 : vector<2x8x8x128xbf16> to vector<128x128xbf16>
    %c1 = arith.constant 1 : index
    %c0_4 = arith.constant 0 : index
    %c0_5 = arith.constant 0 : index
    %c0_6 = arith.constant 0 : index
    %c0_7 = arith.constant 0 : index
    %3 = vector.load %arg0[%c1, %c0_4, %c0_5, %c0_6, %c0_7] : memref<4x2x9x9x128xbf16, #tpu.memory_space<vmem>>, vector<1x2x8x8x128xbf16>
    %4 = vector.shape_cast %3 : vector<1x2x8x8x128xbf16> to vector<2x8x8x128xbf16>
    %5 = vector.shape_cast %4 : vector<2x8x8x128xbf16> to vector<128x128xbf16>
    %c0_8 = arith.constant 0 : index
    %c0_9 = arith.constant 0 : index
    %c0_10 = arith.constant 0 : index
    %c1_11 = arith.constant 1 : index
    %c0_12 = arith.constant 0 : index
    %6 = vector.load %arg0[%c0_8, %c0_9, %c0_10, %c1_11, %c0_12] : memref<4x2x9x9x128xbf16, #tpu.memory_space<vmem>>, vector<1x2x8x8x128xbf16>
    %7 = vector.shape_cast %6 : vector<1x2x8x8x128xbf16> to vector<2x8x8x128xbf16>
    %8 = vector.shape_cast %7 : vector<2x8x8x128xbf16> to vector<128x128xbf16>
    %c2 = arith.constant 2 : index
    %c0_13 = arith.constant 0 : index
    %c0_14 = arith.constant 0 : index
    %c0_15 = arith.constant 0 : index
    %c0_16 = arith.constant 0 : index
    %9 = vector.load %arg0[%c2, %c0_13, %c0_14, %c0_15, %c0_16] : memref<4x2x9x9x128xbf16, #tpu.memory_space<vmem>>, vector<1x2x8x8x128xbf16>
    %10 = vector.shape_cast %9 : vector<1x2x8x8x128xbf16> to vector<2x8x8x128xbf16>
    %11 = vector.shape_cast %10 : vector<2x8x8x128xbf16> to vector<128x128xbf16>
    %c3 = arith.constant 3 : index
    %c0_17 = arith.constant 0 : index
    %c0_18 = arith.constant 0 : index
    %c0_19 = arith.constant 0 : index
    %c0_20 = arith.constant 0 : index
    %12 = vector.load %arg0[%c3, %c0_17, %c0_18, %c0_19, %c0_20] : memref<4x2x9x9x128xbf16, #tpu.memory_space<vmem>>, vector<1x2x8x8x128xbf16>
    %13 = vector.shape_cast %12 : vector<1x2x8x8x128xbf16> to vector<2x8x8x128xbf16>
    %14 = vector.shape_cast %13 : vector<2x8x8x128xbf16> to vector<128x128xbf16>
    %c2_21 = arith.constant 2 : index
    %c0_22 = arith.constant 0 : index
    %c0_23 = arith.constant 0 : index
    %c1_24 = arith.constant 1 : index
    %c0_25 = arith.constant 0 : index
    %15 = vector.load %arg0[%c2_21, %c0_22, %c0_23, %c1_24, %c0_25] : memref<4x2x9x9x128xbf16, #tpu.memory_space<vmem>>, vector<1x2x8x8x128xbf16>
    %16 = vector.shape_cast %15 : vector<1x2x8x8x128xbf16> to vector<2x8x8x128xbf16>
    %17 = vector.shape_cast %16 : vector<2x8x8x128xbf16> to vector<128x128xbf16>
    %c0_26 = arith.constant 0 : index
    %c0_27 = arith.constant 0 : index
    %c1_28 = arith.constant 1 : index
    %c0_29 = arith.constant 0 : index
    %c0_30 = arith.constant 0 : index
    %18 = vector.load %arg0[%c0_26, %c0_27, %c1_28, %c0_29, %c0_30] : memref<4x2x9x9x128xbf16, #tpu.memory_space<vmem>>, vector<1x2x8x8x128xbf16>
    %19 = vector.shape_cast %18 : vector<1x2x8x8x128xbf16> to vector<2x8x8x128xbf16>
    %20 = vector.shape_cast %19 : vector<2x8x8x128xbf16> to vector<128x128xbf16>
    %c1_31 = arith.constant 1 : index
    %c0_32 = arith.constant 0 : index
    %c1_33 = arith.constant 1 : index
    %c0_34 = arith.constant 0 : index
    %c0_35 = arith.constant 0 : index
    %21 = vector.load %arg0[%c1_31, %c0_32, %c1_33, %c0_34, %c0_35] : memref<4x2x9x9x128xbf16, #tpu.memory_space<vmem>>, vector<1x2x8x8x128xbf16>
    %22 = vector.shape_cast %21 : vector<1x2x8x8x128xbf16> to vector<2x8x8x128xbf16>
    %23 = vector.shape_cast %22 : vector<2x8x8x128xbf16> to vector<128x128xbf16>
    %c0_36 = arith.constant 0 : index
    %c0_37 = arith.constant 0 : index
    %c1_38 = arith.constant 1 : index
    %c1_39 = arith.constant 1 : index
    %c0_40 = arith.constant 0 : index
    %24 = vector.load %arg0[%c0_36, %c0_37, %c1_38, %c1_39, %c0_40] : memref<4x2x9x9x128xbf16, #tpu.memory_space<vmem>>, vector<1x2x8x8x128xbf16>
    %25 = vector.shape_cast %24 : vector<1x2x8x8x128xbf16> to vector<2x8x8x128xbf16>
    %26 = vector.shape_cast %25 : vector<2x8x8x128xbf16> to vector<128x128xbf16>
    %27 = tpu.concatenate %2, %5, %8, %11, %14, %17, %20, %23, %26 in 1 : vector<128x128xbf16>, vector<128x128xbf16>, vector<128x128xbf16>, vector<128x128xbf16>, vector<128x128xbf16>, vector<128x128xbf16>, vector<128x128xbf16>, vector<128x128xbf16>, vector<128x128xbf16> -> vector<128x1152xbf16>
    %c0_41 = arith.constant 0 : index
    %c0_42 = arith.constant 0 : index
    %28 = vector.load %arg1[%c0_41, %c0_42] : memref<1152x128xbf16, #tpu.memory_space<vmem>>, vector<1152x128xbf16>
    %cst = arith.constant dense<0.000000e+00> : vector<128x128xf32>
    %29 = tpu.matmul %27, %28, %cst {dimension_numbers = #tpu.dot_dimension_numbers<[1], [0], [0], [1], [0, 0, 1, 1], [], []>} : vector<128x1152xbf16>, vector<1152x128xbf16>, vector<128x128xf32> -> vector<128x128xf32>
    %cst_43 = arith.constant dense<0.000000e+00> : vector<128xf32>
    %30 = vector.multi_reduction <add>, %29, %cst_43 [0] : vector<128x128xf32> to vector<128xf32>
    %31 = vector.shape_cast %30 : vector<128xf32> to vector<1x128xf32>
    %cst_44 = arith.constant 1.280000e+02 : f32
    %32 = vector.broadcast %cst_44 : f32 to vector<1x128xf32>
    %33 = arith.divf %31, %32 : vector<1x128xf32>
    %34 = arith.mulf %29, %29 : vector<128x128xf32>
    %cst_45 = arith.constant dense<0.000000e+00> : vector<128xf32>
    %35 = vector.multi_reduction <add>, %34, %cst_45 [0] : vector<128x128xf32> to vector<128xf32>
    %36 = vector.shape_cast %35 : vector<128xf32> to vector<1x128xf32>
    %cst_46 = arith.constant 1.280000e+02 : f32
    %37 = vector.broadcast %cst_46 : f32 to vector<1x128xf32>
    %38 = arith.divf %36, %37 : vector<1x128xf32>
    %39 = arith.mulf %33, %33 : vector<1x128xf32>
    %40 = arith.subf %38, %39 : vector<1x128xf32>
    %41 = vector.broadcast %33 : vector<1x128xf32> to vector<128x128xf32>
    %42 = arith.subf %29, %41 : vector<128x128xf32>
    %c0_47 = arith.constant 0 : index
    %c0_48 = arith.constant 0 : index
    %43 = vector.load %arg3[%c0_47, %c0_48] : memref<1x128xf32, #tpu.memory_space<vmem>>, vector<1x128xf32>
    %cst_49 = arith.constant 9.99999974E-6 : f32
    %44 = vector.broadcast %cst_49 : f32 to vector<1x128xf32>
    %45 = arith.addf %40, %44 : vector<1x128xf32>
    %46 = math.rsqrt %45 : vector<1x128xf32>
    %47 = arith.mulf %43, %46 : vector<1x128xf32>
    %48 = vector.broadcast %47 : vector<1x128xf32> to vector<128x128xf32>
    %49 = arith.mulf %42, %48 : vector<128x128xf32>
    %c0_50 = arith.constant 0 : index
    %c0_51 = arith.constant 0 : index
    %50 = vector.load %arg4[%c0_50, %c0_51] : memref<1x128xf32, #tpu.memory_space<vmem>>, vector<1x128xf32>
    %51 = vector.broadcast %50 : vector<1x128xf32> to vector<128x128xf32>
    %52 = arith.addf %49, %51 : vector<128x128xf32>
    %cst_52 = arith.constant 0.000000e+00 : f32
    %53 = vector.broadcast %cst_52 : f32 to vector<128x128xf32>
    %54 = arith.maximumf %52, %53 : vector<128x128xf32>
    %cst_53 = arith.constant 0.000000e+00 : f32
    %55 = vector.broadcast %cst_53 : f32 to vector<2x1x10x128xf32>
    %cst_54 = arith.constant 0.000000e+00 : f32
    %56 = vector.broadcast %cst_54 : f32 to vector<2x8x1x128xf32>
    %c0_55 = arith.constant 0 : index
    %c0_56 = arith.constant 0 : index
    %c0_57 = arith.constant 0 : index
    %c0_58 = arith.constant 0 : index
    %57 = vector.load %arg11[%c0_55, %c0_56, %c0_57, %c0_58] : memref<2x10x10x128xf32, #tpu.memory_space<vmem>>, vector<2x1x10x128xf32>
    tpu.vector_store %arg11[%c0_55, %c0_56, %c0_57, %c0_58], %55 {strides = array<i32>} : memref<2x10x10x128xf32, #tpu.memory_space<vmem>>, vector<2x1x10x128xf32>,
    %c0_59 = arith.constant 0 : index
    %c9 = arith.constant 9 : index
    %c0_60 = arith.constant 0 : index
    %c0_61 = arith.constant 0 : index
    %58 = vector.load %arg11[%c0_59, %c9, %c0_60, %c0_61] : memref<2x10x10x128xf32, #tpu.memory_space<vmem>>, vector<2x1x10x128xf32>
    tpu.vector_store %arg11[%c0_59, %c9, %c0_60, %c0_61], %55 {strides = array<i32>} : memref<2x10x10x128xf32, #tpu.memory_space<vmem>>, vector<2x1x10x128xf32>,
    %c0_62 = arith.constant 0 : index
    %c1_63 = arith.constant 1 : index
    %c0_64 = arith.constant 0 : index
    %c0_65 = arith.constant 0 : index
    %59 = vector.load %arg11[%c0_62, %c1_63, %c0_64, %c0_65] : memref<2x10x10x128xf32, #tpu.memory_space<vmem>>, vector<2x8x1x128xf32>
    tpu.vector_store %arg11[%c0_62, %c1_63, %c0_64, %c0_65], %56 {strides = array<i32>} : memref<2x10x10x128xf32, #tpu.memory_space<vmem>>, vector<2x8x1x128xf32>,
    %c0_66 = arith.constant 0 : index
    %c1_67 = arith.constant 1 : index
    %c9_68 = arith.constant 9 : index
    %c0_69 = arith.constant 0 : index
    %60 = vector.load %arg11[%c0_66, %c1_67, %c9_68, %c0_69] : memref<2x10x10x128xf32, #tpu.memory_space<vmem>>, vector<2x8x1x128xf32>
    tpu.vector_store %arg11[%c0_66, %c1_67, %c9_68, %c0_69], %56 {strides = array<i32>} : memref<2x10x10x128xf32, #tpu.memory_space<vmem>>, vector<2x8x1x128xf32>,
    %61 = vector.shape_cast %54 : vector<128x128xf32> to vector<2x8x8x128xf32>
    %c0_70 = arith.constant 0 : index
    %c1_71 = arith.constant 1 : index
    %c1_72 = arith.constant 1 : index
    %c0_73 = arith.constant 0 : index
    %62 = vector.load %arg11[%c0_70, %c1_71, %c1_72, %c0_73] : memref<2x10x10x128xf32, #tpu.memory_space<vmem>>, vector<2x8x8x128xf32>
    tpu.vector_store %arg11[%c0_70, %c1_71, %c1_72, %c0_73], %61 {strides = array<i32>} : memref<2x10x10x128xf32, #tpu.memory_space<vmem>>, vector<2x8x8x128xf32>,
    %c0_74 = arith.constant 0 : index
    %c0_75 = arith.constant 0 : index
    %c0_76 = arith.constant 0 : index
    %c0_77 = arith.constant 0 : index
    %63 = vector.load %arg11[%c0_74, %c0_75, %c0_76, %c0_77] : memref<2x10x10x128xf32, #tpu.memory_space<vmem>>, vector<2x8x8x128xf32>
    %64 = vector.shape_cast %63 : vector<2x8x8x128xf32> to vector<128x128xf32>
    %c0_78 = arith.constant 0 : index
    %c0_79 = arith.constant 0 : index
    %c1_80 = arith.constant 1 : index
    %c0_81 = arith.constant 0 : index
    %65 = vector.load %arg11[%c0_78, %c0_79, %c1_80, %c0_81] : memref<2x10x10x128xf32, #tpu.memory_space<vmem>>, vector<2x8x8x128xf32>
    %66 = vector.shape_cast %65 : vector<2x8x8x128xf32> to vector<128x128xf32>
    %c0_82 = arith.constant 0 : index
    %c0_83 = arith.constant 0 : index
    %c2_84 = arith.constant 2 : index
    %c0_85 = arith.constant 0 : index
    %67 = vector.load %arg11[%c0_82, %c0_83, %c2_84, %c0_85] : memref<2x10x10x128xf32, #tpu.memory_space<vmem>>, vector<2x8x8x128xf32>
    %68 = vector.shape_cast %67 : vector<2x8x8x128xf32> to vector<128x128xf32>
    %c0_86 = arith.constant 0 : index
    %c1_87 = arith.constant 1 : index
    %c0_88 = arith.constant 0 : index
    %c0_89 = arith.constant 0 : index
    %69 = vector.load %arg11[%c0_86, %c1_87, %c0_88, %c0_89] : memref<2x10x10x128xf32, #tpu.memory_space<vmem>>, vector<2x8x8x128xf32>
    %70 = vector.shape_cast %69 : vector<2x8x8x128xf32> to vector<128x128xf32>
    %c0_90 = arith.constant 0 : index
    %c1_91 = arith.constant 1 : index
    %c1_92 = arith.constant 1 : index
    %c0_93 = arith.constant 0 : index
    %71 = vector.load %arg11[%c0_90, %c1_91, %c1_92, %c0_93] : memref<2x10x10x128xf32, #tpu.memory_space<vmem>>, vector<2x8x8x128xf32>
    %72 = vector.shape_cast %71 : vector<2x8x8x128xf32> to vector<128x128xf32>
    %c0_94 = arith.constant 0 : index
    %c1_95 = arith.constant 1 : index
    %c2_96 = arith.constant 2 : index
    %c0_97 = arith.constant 0 : index
    %73 = vector.load %arg11[%c0_94, %c1_95, %c2_96, %c0_97] : memref<2x10x10x128xf32, #tpu.memory_space<vmem>>, vector<2x8x8x128xf32>
    %74 = vector.shape_cast %73 : vector<2x8x8x128xf32> to vector<128x128xf32>
    %c0_98 = arith.constant 0 : index
    %c2_99 = arith.constant 2 : index
    %c0_100 = arith.constant 0 : index
    %c0_101 = arith.constant 0 : index
    %75 = vector.load %arg11[%c0_98, %c2_99, %c0_100, %c0_101] : memref<2x10x10x128xf32, #tpu.memory_space<vmem>>, vector<2x8x8x128xf32>
    %76 = vector.shape_cast %75 : vector<2x8x8x128xf32> to vector<128x128xf32>
    %c0_102 = arith.constant 0 : index
    %c2_103 = arith.constant 2 : index
    %c1_104 = arith.constant 1 : index
    %c0_105 = arith.constant 0 : index
    %77 = vector.load %arg11[%c0_102, %c2_103, %c1_104, %c0_105] : memref<2x10x10x128xf32, #tpu.memory_space<vmem>>, vector<2x8x8x128xf32>
    %78 = vector.shape_cast %77 : vector<2x8x8x128xf32> to vector<128x128xf32>
    %c0_106 = arith.constant 0 : index
    %c2_107 = arith.constant 2 : index
    %c2_108 = arith.constant 2 : index
    %c0_109 = arith.constant 0 : index
    %79 = vector.load %arg11[%c0_106, %c2_107, %c2_108, %c0_109] : memref<2x10x10x128xf32, #tpu.memory_space<vmem>>, vector<2x8x8x128xf32>
    %80 = vector.shape_cast %79 : vector<2x8x8x128xf32> to vector<128x128xf32>
    %81 = tpu.concatenate %64, %66, %68, %70, %72, %74, %76, %78, %80 in 1 : vector<128x128xf32>, vector<128x128xf32>, vector<128x128xf32>, vector<128x128xf32>, vector<128x128xf32>, vector<128x128xf32>, vector<128x128xf32>, vector<128x128xf32>, vector<128x128xf32> -> vector<128x1152xf32>
    %82 = arith.truncf %81 : vector<128x1152xf32> to vector<128x1152xbf16>
    %c0_110 = arith.constant 0 : index
    %c0_111 = arith.constant 0 : index
    %83 = vector.load %arg2[%c0_110, %c0_111] : memref<1152x128xbf16, #tpu.memory_space<vmem>>, vector<1152x128xbf16>
    %cst_112 = arith.constant dense<0.000000e+00> : vector<128x128xf32>
    %84 = tpu.matmul %82, %83, %cst_112 {dimension_numbers = #tpu.dot_dimension_numbers<[1], [0], [0], [1], [0, 0, 1, 1], [], []>} : vector<128x1152xbf16>, vector<1152x128xbf16>, vector<128x128xf32> -> vector<128x128xf32>
    %cst_113 = arith.constant dense<0.000000e+00> : vector<128xf32>
    %85 = vector.multi_reduction <add>, %84, %cst_113 [0] : vector<128x128xf32> to vector<128xf32>
    %86 = vector.shape_cast %85 : vector<128xf32> to vector<1x128xf32>
    %cst_114 = arith.constant 1.280000e+02 : f32
    %87 = vector.broadcast %cst_114 : f32 to vector<1x128xf32>
    %88 = arith.divf %86, %87 : vector<1x128xf32>
    %89 = arith.mulf %84, %84 : vector<128x128xf32>
    %cst_115 = arith.constant dense<0.000000e+00> : vector<128xf32>
    %90 = vector.multi_reduction <add>, %89, %cst_115 [0] : vector<128x128xf32> to vector<128xf32>
    %91 = vector.shape_cast %90 : vector<128xf32> to vector<1x128xf32>
    %cst_116 = arith.constant 1.280000e+02 : f32
    %92 = vector.broadcast %cst_116 : f32 to vector<1x128xf32>
    %93 = arith.divf %91, %92 : vector<1x128xf32>
    %94 = arith.mulf %88, %88 : vector<1x128xf32>
    %95 = arith.subf %93, %94 : vector<1x128xf32>
    %96 = vector.broadcast %88 : vector<1x128xf32> to vector<128x128xf32>
    %97 = arith.subf %84, %96 : vector<128x128xf32>
    %c0_117 = arith.constant 0 : index
    %c0_118 = arith.constant 0 : index
    %98 = vector.load %arg5[%c0_117, %c0_118] : memref<1x128xf32, #tpu.memory_space<vmem>>, vector<1x128xf32>
    %cst_119 = arith.constant 9.99999974E-6 : f32
    %99 = vector.broadcast %cst_119 : f32 to vector<1x128xf32>
    %100 = arith.addf %95, %99 : vector<1x128xf32>
    %101 = math.rsqrt %100 : vector<1x128xf32>
    %102 = arith.mulf %98, %101 : vector<1x128xf32>
    %103 = vector.broadcast %102 : vector<1x128xf32> to vector<128x128xf32>
    %104 = arith.mulf %97, %103 : vector<128x128xf32>
    %c0_120 = arith.constant 0 : index
    %c0_121 = arith.constant 0 : index
    %105 = vector.load %arg6[%c0_120, %c0_121] : memref<1x128xf32, #tpu.memory_space<vmem>>, vector<1x128xf32>
    %106 = vector.broadcast %105 : vector<1x128xf32> to vector<128x128xf32>
    %107 = arith.addf %104, %106 : vector<128x128xf32>
    %c3_122 = arith.constant 3 : index
    %c0_123 = arith.constant 0 : index
    %c0_124 = arith.constant 0 : index
    %c0_125 = arith.constant 0 : index
    %c0_126 = arith.constant 0 : index
    %108 = vector.load %arg0[%c3_122, %c0_123, %c0_124, %c0_125, %c0_126] : memref<4x2x9x9x128xbf16, #tpu.memory_space<vmem>>, vector<1x2x8x8x128xbf16>
    %109 = vector.shape_cast %108 : vector<1x2x8x8x128xbf16> to vector<2x8x8x128xbf16>
    %110 = vector.shape_cast %109 : vector<2x8x8x128xbf16> to vector<128x128xbf16>
    %c0_127 = arith.constant 0 : index
    %c0_128 = arith.constant 0 : index
    %111 = vector.load %arg7[%c0_127, %c0_128] : memref<128x128xbf16, #tpu.memory_space<vmem>>, vector<128x128xbf16>
    %cst_129 = arith.constant dense<0.000000e+00> : vector<128x128xf32>
    %112 = tpu.matmul %110, %111, %cst_129 {dimension_numbers = #tpu.dot_dimension_numbers<[1], [0], [0], [1], [0, 0, 1, 1], [], []>} : vector<128x128xbf16>, vector<128x128xbf16>, vector<128x128xf32> -> vector<128x128xf32>
    %cst_130 = arith.constant dense<0.000000e+00> : vector<128xf32>
    %113 = vector.multi_reduction <add>, %112, %cst_130 [0] : vector<128x128xf32> to vector<128xf32>
    %114 = vector.shape_cast %113 : vector<128xf32> to vector<1x128xf32>
    %cst_131 = arith.constant 1.280000e+02 : f32
    %115 = vector.broadcast %cst_131 : f32 to vector<1x128xf32>
    %116 = arith.divf %114, %115 : vector<1x128xf32>
    %117 = arith.mulf %112, %112 : vector<128x128xf32>
    %cst_132 = arith.constant dense<0.000000e+00> : vector<128xf32>
    %118 = vector.multi_reduction <add>, %117, %cst_132 [0] : vector<128x128xf32> to vector<128xf32>
    %119 = vector.shape_cast %118 : vector<128xf32> to vector<1x128xf32>
    %cst_133 = arith.constant 1.280000e+02 : f32
    %120 = vector.broadcast %cst_133 : f32 to vector<1x128xf32>
    %121 = arith.divf %119, %120 : vector<1x128xf32>
    %122 = arith.mulf %116, %116 : vector<1x128xf32>
    %123 = arith.subf %121, %122 : vector<1x128xf32>
    %124 = vector.broadcast %116 : vector<1x128xf32> to vector<128x128xf32>
    %125 = arith.subf %112, %124 : vector<128x128xf32>
    %c0_134 = arith.constant 0 : index
    %c0_135 = arith.constant 0 : index
    %126 = vector.load %arg8[%c0_134, %c0_135] : memref<1x128xf32, #tpu.memory_space<vmem>>, vector<1x128xf32>
    %cst_136 = arith.constant 9.99999974E-6 : f32
    %127 = vector.broadcast %cst_136 : f32 to vector<1x128xf32>
    %128 = arith.addf %123, %127 : vector<1x128xf32>
    %129 = math.rsqrt %128 : vector<1x128xf32>
    %130 = arith.mulf %126, %129 : vector<1x128xf32>
    %131 = vector.broadcast %130 : vector<1x128xf32> to vector<128x128xf32>
    %132 = arith.mulf %125, %131 : vector<128x128xf32>
    %c0_137 = arith.constant 0 : index
    %c0_138 = arith.constant 0 : index
    %133 = vector.load %arg9[%c0_137, %c0_138] : memref<1x128xf32, #tpu.memory_space<vmem>>, vector<1x128xf32>
    %134 = vector.broadcast %133 : vector<1x128xf32> to vector<128x128xf32>
    %135 = arith.addf %132, %134 : vector<128x128xf32>
    %136 = arith.addf %107, %135 : vector<128x128xf32>
    %cst_139 = arith.constant 0.000000e+00 : f32
    %137 = vector.broadcast %cst_139 : f32 to vector<128x128xf32>
    %138 = arith.maximumf %136, %137 : vector<128x128xf32>
    %c0_140 = arith.constant 0 : index
    %c0_141 = arith.constant 0 : index
    %139 = vector.load %arg10[%c0_140, %c0_141] : memref<128x128xf32, #tpu.memory_space<vmem>>, vector<128x128xf32>
    tpu.vector_store %arg10[%c0_140, %c0_141], %138 {strides = array<i32>} : memref<128x128xf32, #tpu.memory_space<vmem>>, vector<128x128xf32>,
    return
  }
}

</mosaic_0001>

<llo_original>
// kernel: basic_block_pallas.1
$region0: #{basic_block_pallas.1}
  #allocation0 [shape = 'u32[]', space=smem, size = 0x4, offset = 0x4, fixed_abs, tag = 'smem constant byte address 0x4 - core index']
  #allocation1 [shape = 'u32[144,128]{1,0:T(1,128)}', space=vmem, size = 0x12000, scoped, tag = 'internal scratch']
  #allocation2 [shape = 'f32[2,10,10,128]{3,2,1,0:T(8,128)}', space=vmem, size = 0x28000, scoped, tag = 'scratch operand']
  %s0 = inlined_call_operand.vmem [shape: bf16[4,2,9,9,128], index: 0, kind: input, shape index: {}]
  %s1 = inlined_call_operand.vmem [shape: bf16[1152,128], index: 1, kind: input, shape index: {}]
  %s2 = inlined_call_operand.vmem [shape: bf16[1152,128], index: 2, kind: input, shape index: {}]
  %s3 = inlined_call_operand.vmem [shape: f32[1,128], index: 3, kind: input, shape index: {}]
  %s4 = inlined_call_operand.vmem [shape: f32[1,128], index: 4, kind: input, shape index: {}]
  %s5 = inlined_call_operand.vmem [shape: f32[1,128], index: 5, kind: input, shape index: {}]
  %s6 = inlined_call_operand.vmem [shape: f32[1,128], index: 6, kind: input, shape index: {}]
  %s7 = inlined_call_operand.vmem [shape: bf16[128,128], index: 7, kind: input, shape index: {}]
  %s8 = inlined_call_operand.vmem [shape: f32[1,128], index: 8, kind: input, shape index: {}]
  %s9 = inlined_call_operand.vmem [shape: f32[1,128], index: 9, kind: input, shape index: {}]
  %s10 = inlined_call_operand.vmem [shape: f32[128,128], index: 10, kind: output, shape index: {}]
  %s11 = sld [smem:[#allocation0]]
  $region50: #{basic_block_pallas.1} parent=0
    _
  %s13 = ssub.s32 1, %s11
  %s14 = scalar_select 0, %s13, %s11
  // Predicated region
  $region2: #{basic_block_pallas.1} parent=0 // pred_check
    _
  $region3: #{basic_block_pallas.1} parent=0 // pred_check_branch
    %16 = sbr.rel (0) target = $region5
  $region4: #{basic_block_pallas.1} parent=0 // pred_region
    _
  $region5: #{basic_block_pallas.1} parent=0 // pred_fallthru
    _
  // Predicated region
  $region6: #{basic_block_pallas.1} parent=0 // pred_check
    _
  $region7: #{basic_block_pallas.1} parent=0 // pred_check_branch
    %18 = sbr.rel (0) target = $region9
  $region8: #{basic_block_pallas.1} parent=0 // pred_region
    _
  $region9: #{basic_block_pallas.1} parent=0 // pred_fallthru
    _
  // Predicated region
  $region10: #{basic_block_pallas.1} parent=0 // pred_check
    _
  $region11: #{basic_block_pallas.1} parent=0 // pred_check_branch
    %20 = sbr.rel (0) target = $region13
  $region12: #{basic_block_pallas.1} parent=0 // pred_region
    _
  $region13: #{basic_block_pallas.1} parent=0 // pred_fallthru
    _
  // Predicated region
  $region14: #{basic_block_pallas.1} parent=0 // pred_check
    _
  $region15: #{basic_block_pallas.1} parent=0 // pred_check_branch
    %22 = sbr.rel (0) target = $region17
  $region16: #{basic_block_pallas.1} parent=0 // pred_region
    _
  $region17: #{basic_block_pallas.1} parent=0 // pred_fallthru
    _
  // Predicated region
  $region18: #{basic_block_pallas.1} parent=0 // pred_check
    _
  $region19: #{basic_block_pallas.1} parent=0 // pred_check_branch
    %24 = sbr.rel (0) target = $region21
  $region20: #{basic_block_pallas.1} parent=0 // pred_region
    _
  $region21: #{basic_block_pallas.1} parent=0 // pred_fallthru
    _
  // Predicated region
  $region22: #{basic_block_pallas.1} parent=0 // pred_check
    _
  $region23: #{basic_block_pallas.1} parent=0 // pred_check_branch
    %26 = sbr.rel (0) target = $region25
  $region24: #{basic_block_pallas.1} parent=0 // pred_region
    _
  $region25: #{basic_block_pallas.1} parent=0 // pred_fallthru
    _
  // Predicated region
  $region26: #{basic_block_pallas.1} parent=0 // pred_check
    _
  $region27: #{basic_block_pallas.1} parent=0 // pred_check_branch
    %28 = sbr.rel (0) target = $region29
  $region28: #{basic_block_pallas.1} parent=0 // pred_region
    _
  $region29: #{basic_block_pallas.1} parent=0 // pred_fallthru
    _
  // Predicated region
  $region30: #{basic_block_pallas.1} parent=0 // pred_check
    _
  $region31: #{basic_block_pallas.1} parent=0 // pred_check_branch
    %30 = sbr.rel (0) target = $region33
  $region32: #{basic_block_pallas.1} parent=0 // pred_region
    _
  $region33: #{basic_block_pallas.1} parent=0 // pred_fallthru
    _
  // Predicated region
  $region34: #{basic_block_pallas.1} parent=0 // pred_check
    _
  $region35: #{basic_block_pallas.1} parent=0 // pred_check_branch
    %32 = sbr.rel (0) target = $region37
  $region36: #{basic_block_pallas.1} parent=0 // pred_region
    _
  $region37: #{basic_block_pallas.1} parent=0 // pred_fallthru
    _
  // Predicated region
  $region38: #{basic_block_pallas.1} parent=0 // pred_check
    _
  $region39: #{basic_block_pallas.1} parent=0 // pred_check_branch
    %34 = sbr.rel (0) target = $region41
  $region40: #{basic_block_pallas.1} parent=0 // pred_region
    _
  $region41: #{basic_block_pallas.1} parent=0 // pred_fallthru
    _
  %v36 = vld [vmem:[%s0] sm:$0xf]
  %v37 = vld [vmem:[%s0 + $0x8] sm:$0xf]
  %v38 = vld [vmem:[%s0 + $0x10] sm:$0xf]
  %v39 = vld [vmem:[%s0 + $0x18] sm:$0xf]
  %v40 = vld [vmem:[%s0 + $0x20] sm:$0xf]
  %v41 = vld [vmem:[%s0 + $0x28] sm:$0xf]
  %v42 = vld [vmem:[%s0 + $0x30] sm:$0xf]
  %v43 = vld [vmem:[%s0 + $0x38] sm:$0xf]
  %v44 = vld [vmem:[%s0 + $0x48] sm:$0xf]
  %v45 = vld [vmem:[%s0 + $0x50] sm:$0xf]
  %v46 = vld [vmem:[%s0 + $0x58] sm:$0xf]
  %v47 = vld [vmem:[%s0 + $0x60] sm:$0xf]
  %v48 = vld [vmem:[%s0 + $0x68] sm:$0xf]
  %v49 = vld [vmem:[%s0 + $0x70] sm:$0xf]
  %v50 = vld [vmem:[%s0 + $0x78] sm:$0xf]
  %v51 = vld [vmem:[%s0 + $0x80] sm:$0xf]
  %s52 = scalar_lea.vmem %s0, 144
  %v53 = vld [vmem:[%s52] sm:$0xf]
  %v54 = vld [vmem:[%s52 + $0x8] sm:$0xf]
  %v55 = vld [vmem:[%s52 + $0x10] sm:$0xf]
  %v56 = vld [vmem:[%s52 + $0x18] sm:$0xf]
  %v57 = vld [vmem:[%s52 + $0x20] sm:$0xf]
  %v58 = vld [vmem:[%s52 + $0x28] sm:$0xf]
  %v59 = vld [vmem:[%s52 + $0x30] sm:$0xf]
  %v60 = vld [vmem:[%s52 + $0x38] sm:$0xf]
  %v61 = vld [vmem:[%s52 + $0x48] sm:$0xf]
  %v62 = vld [vmem:[%s52 + $0x50] sm:$0xf]
  %v63 = vld [vmem:[%s52 + $0x58] sm:$0xf]
  %v64 = vld [vmem:[%s52 + $0x60] sm:$0xf]
  %v65 = vld [vmem:[%s52 + $0x68] sm:$0xf]
  %v66 = vld [vmem:[%s52 + $0x70] sm:$0xf]
  %v67 = vld [vmem:[%s52 + $0x78] sm:$0xf]
  %v68 = vld [vmem:[%s52 + $0x80] sm:$0xf]
  %v69 = vld [vmem:[%s0 + $0x4] sm:$0x1]
  %v70 = vld [vmem:[%s0 + $0xc] sm:$0x1]
  %v71 = vld [vmem:[%s0 + $0x14] sm:$0x1]
  %v72 = vld [vmem:[%s0 + $0x1c] sm:$0x1]
  %v73 = vld [vmem:[%s0 + $0x24] sm:$0x1]
  %v74 = vld [vmem:[%s0 + $0x2c] sm:$0x1]
  %v75 = vld [vmem:[%s0 + $0x34] sm:$0x1]
  %v76 = vld [vmem:[%s0 + $0x3c] sm:$0x1]
  %v77 = vld [vmem:[%s0 + $0x4c] sm:$0x1]
  %v78 = vld [vmem:[%s0 + $0x54] sm:$0x1]
  %v79 = vld [vmem:[%s0 + $0x5c] sm:$0x1]
  %v80 = vld [vmem:[%s0 + $0x64] sm:$0x1]
  %v81 = vld [vmem:[%s0 + $0x6c] sm:$0x1]
  %v82 = vld [vmem:[%s0 + $0x74] sm:$0x1]
  %v83 = vld [vmem:[%s0 + $0x7c] sm:$0x1]
  %v84 = vld [vmem:[%s0 + $0x84] sm:$0x1]
  %vm85 = vsmask.f32 3328
  %vm86 = vsmask.f32 7440
  %vm87 = vmor %vm85, %vm86
  %v89 = vshrl.u32 %v36, 16
  %v91 = vrot.slane %v89, 4
  %v92 = vshll.u32 %v36, 16
  %v94 = vrot.slane %v92, 5
  %v95 = vor.u32 %v91, %v94
  %v96 = vrot.slane %v95, 4
  %v98 = vshll.u32 %v69, 16
  %v100 = vrot.slane %v98, 5
  %v101 = vsel %vm87, %v96, %v100
  %v103 = vshrl.u32 %v37, 16
  %v105 = vrot.slane %v103, 4
  %v106 = vshll.u32 %v37, 16
  %v108 = vrot.slane %v106, 5
  %v109 = vor.u32 %v105, %v108
  %v110 = vrot.slane %v109, 4
  %v112 = vshll.u32 %v70, 16
  %v114 = vrot.slane %v112, 5
  %v115 = vsel %vm87, %v110, %v114
  %v117 = vshrl.u32 %v38, 16
  %v119 = vrot.slane %v117, 4
  %v120 = vshll.u32 %v38, 16
  %v122 = vrot.slane %v120, 5
  %v123 = vor.u32 %v119, %v122
  %v124 = vrot.slane %v123, 4
  %v126 = vshll.u32 %v71, 16
  %v128 = vrot.slane %v126, 5
  %v129 = vsel %vm87, %v124, %v128
  %v131 = vshrl.u32 %v39, 16
  %v133 = vrot.slane %v131, 4
  %v134 = vshll.u32 %v39, 16
  %v136 = vrot.slane %v134, 5
  %v137 = vor.u32 %v133, %v136
  %v138 = vrot.slane %v137, 4
  %v140 = vshll.u32 %v72, 16
  %v142 = vrot.slane %v140, 5
  %v143 = vsel %vm87, %v138, %v142
  %v145 = vshrl.u32 %v40, 16
  %v147 = vrot.slane %v145, 4
  %v148 = vshll.u32 %v40, 16
  %v150 = vrot.slane %v148, 5
  %v151 = vor.u32 %v147, %v150
  %v152 = vrot.slane %v151, 4
  %v154 = vshll.u32 %v73, 16
  %v156 = vrot.slane %v154, 5
  %v157 = vsel %vm87, %v152, %v156
  %v159 = vshrl.u32 %v41, 16
  %v161 = vrot.slane %v159, 4
  %v162 = vshll.u32 %v41, 16
  %v164 = vrot.slane %v162, 5
  %v165 = vor.u32 %v161, %v164
  %v166 = vrot.slane %v165, 4
  %v168 = vshll.u32 %v74, 16
  %v170 = vrot.slane %v168, 5
  %v171 = vsel %vm87, %v166, %v170
  %v173 = vshrl.u32 %v42, 16
  %v175 = vrot.slane %v173, 4
  %v176 = vshll.u32 %v42, 16
  %v178 = vrot.slane %v176, 5
  %v179 = vor.u32 %v175, %v178
  %v180 = vrot.slane %v179, 4
  %v182 = vshll.u32 %v75, 16
  %v184 = vrot.slane %v182, 5
  %v185 = vsel %vm87, %v180, %v184
  %v187 = vshrl.u32 %v43, 16
  %v189 = vrot.slane %v187, 4
  %v190 = vshll.u32 %v43, 16
  %v192 = vrot.slane %v190, 5
  %v193 = vor.u32 %v189, %v192
  %v194 = vrot.slane %v193, 4
  %v196 = vshll.u32 %v76, 16
  %v198 = vrot.slane %v196, 5
  %v199 = vsel %vm87, %v194, %v198
  %v201 = vshrl.u32 %v44, 16
  %v203 = vrot.slane %v201, 4
  %v204 = vshll.u32 %v44, 16
  %v206 = vrot.slane %v204, 5
  %v207 = vor.u32 %v203, %v206
  %v208 = vrot.slane %v207, 4
  %v210 = vshll.u32 %v77, 16
  %v212 = vrot.slane %v210, 5
  %v213 = vsel %vm87, %v208, %v212
  %v215 = vshrl.u32 %v45, 16
  %v217 = vrot.slane %v215, 4
  %v218 = vshll.u32 %v45, 16
  %v220 = vrot.slane %v218, 5
  %v221 = vor.u32 %v217, %v220
  %v222 = vrot.slane %v221, 4
  %v224 = vshll.u32 %v78, 16
  %v226 = vrot.slane %v224, 5
  %v227 = vsel %vm87, %v222, %v226
  %v229 = vshrl.u32 %v46, 16
  %v231 = vrot.slane %v229, 4
  %v232 = vshll.u32 %v46, 16
  %v234 = vrot.slane %v232, 5
  %v235 = vor.u32 %v231, %v234
  %v236 = vrot.slane %v235, 4
  %v238 = vshll.u32 %v79, 16
  %v240 = vrot.slane %v238, 5
  %v241 = vsel %vm87, %v236, %v240
  %v243 = vshrl.u32 %v47, 16
  %v245 = vrot.slane %v243, 4
  %v246 = vshll.u32 %v47, 16
  %v248 = vrot.slane %v246, 5
  %v249 = vor.u32 %v245, %v248
  %v250 = vrot.slane %v249, 4
  %v252 = vshll.u32 %v80, 16
  %v254 = vrot.slane %v252, 5
  %v255 = vsel %vm87, %v250, %v254
  %v257 = vshrl.u32 %v48, 16
  %v259 = vrot.slane %v257, 4
  %v260 = vshll.u32 %v48, 16
  %v262 = vrot.slane %v260, 5
  %v263 = vor.u32 %v259, %v262
  %v264 = vrot.slane %v263, 4
  %v266 = vshll.u32 %v81, 16
  %v268 = vrot.slane %v266, 5
  %v269 = vsel %vm87, %v264, %v268
  %v271 = vshrl.u32 %v49, 16
  %v273 = vrot.slane %v271, 4
  %v274 = vshll.u32 %v49, 16
  %v276 = vrot.slane %v274, 5
  %v277 = vor.u32 %v273, %v276
  %v278 = vrot.slane %v277, 4
  %v280 = vshll.u32 %v82, 16
  %v282 = vrot.slane %v280, 5
  %v283 = vsel %vm87, %v278, %v282
  %v285 = vshrl.u32 %v50, 16
  %v287 = vrot.slane %v285, 4
  %v288 = vshll.u32 %v50, 16
  %v290 = vrot.slane %v288, 5
  %v291 = vor.u32 %v287, %v290
  %v292 = vrot.slane %v291, 4
  %v294 = vshll.u32 %v83, 16
  %v296 = vrot.slane %v294, 5
  %v297 = vsel %vm87, %v292, %v296
  %v299 = vshrl.u32 %v51, 16
  %v301 = vrot.slane %v299, 4
  %v302 = vshll.u32 %v51, 16
  %v304 = vrot.slane %v302, 5
  %v305 = vor.u32 %v301, %v304
  %v306 = vrot.slane %v305, 4
  %v308 = vshll.u32 %v84, 16
  %v310 = vrot.slane %v308, 5
  %v311 = vsel %vm87, %v306, %v310
  %s312 = scalar_lea.vmem %s0, 288
  %v313 = vld [vmem:[%s312] sm:$0xf]
  %v314 = vld [vmem:[%s312 + $0x8] sm:$0xf]
  %v315 = vld [vmem:[%s312 + $0x10] sm:$0xf]
  %v316 = vld [vmem:[%s312 + $0x18] sm:$0xf]
  %v317 = vld [vmem:[%s312 + $0x20] sm:$0xf]
  %v318 = vld [vmem:[%s312 + $0x28] sm:$0xf]
  %v319 = vld [vmem:[%s312 + $0x30] sm:$0xf]
  %v320 = vld [vmem:[%s312 + $0x38] sm:$0xf]
  %v321 = vld [vmem:[%s312 + $0x48] sm:$0xf]
  %v322 = vld [vmem:[%s312 + $0x50] sm:$0xf]
  %v323 = vld [vmem:[%s312 + $0x58] sm:$0xf]
  %v324 = vld [vmem:[%s312 + $0x60] sm:$0xf]
  %v325 = vld [vmem:[%s312 + $0x68] sm:$0xf]
  %v326 = vld [vmem:[%s312 + $0x70] sm:$0xf]
  %v327 = vld [vmem:[%s312 + $0x78] sm:$0xf]
  %v328 = vld [vmem:[%s312 + $0x80] sm:$0xf]
  %s329 = scalar_lea.vmem %s0, 432
  %v330 = vld [vmem:[%s329] sm:$0xf]
  %v331 = vld [vmem:[%s329 + $0x8] sm:$0xf]
  %v332 = vld [vmem:[%s329 + $0x10] sm:$0xf]
  %v333 = vld [vmem:[%s329 + $0x18] sm:$0xf]
  %v334 = vld [vmem:[%s329 + $0x20] sm:$0xf]
  %v335 = vld [vmem:[%s329 + $0x28] sm:$0xf]
  %v336 = vld [vmem:[%s329 + $0x30] sm:$0xf]
  %v337 = vld [vmem:[%s329 + $0x38] sm:$0xf]
  %v338 = vld [vmem:[%s329 + $0x48] sm:$0xf]
  %v339 = vld [vmem:[%s329 + $0x50] sm:$0xf]
  %v340 = vld [vmem:[%s329 + $0x58] sm:$0xf]
  %v341 = vld [vmem:[%s329 + $0x60] sm:$0xf]
  %v342 = vld [vmem:[%s329 + $0x68] sm:$0xf]
  %v343 = vld [vmem:[%s329 + $0x70] sm:$0xf]
  %v344 = vld [vmem:[%s329 + $0x78] sm:$0xf]
  %v345 = vld [vmem:[%s329 + $0x80] sm:$0xf]
  %v346 = vld [vmem:[%s312 + $0x4] sm:$0x1]
  %v347 = vld [vmem:[%s312 + $0xc] sm:$0x1]
  %v348 = vld [vmem:[%s312 + $0x14] sm:$0x1]
  %v349 = vld [vmem:[%s312 + $0x1c] sm:$0x1]
  %v350 = vld [vmem:[%s312 + $0x24] sm:$0x1]
  %v351 = vld [vmem:[%s312 + $0x2c] sm:$0x1]
  %v352 = vld [vmem:[%s312 + $0x34] sm:$0x1]
  %v353 = vld [vmem:[%s312 + $0x3c] sm:$0x1]
  %v354 = vld [vmem:[%s312 + $0x4c] sm:$0x1]
  %v355 = vld [vmem:[%s312 + $0x54] sm:$0x1]
  %v356 = vld [vmem:[%s312 + $0x5c] sm:$0x1]
  %v357 = vld [vmem:[%s312 + $0x64] sm:$0x1]
  %v358 = vld [vmem:[%s312 + $0x6c] sm:$0x1]
  %v359 = vld [vmem:[%s312 + $0x74] sm:$0x1]
  %v360 = vld [vmem:[%s312 + $0x7c] sm:$0x1]
  %v361 = vld [vmem:[%s312 + $0x84] sm:$0x1]
  %v363 = vshrl.u32 %v313, 16
  %v365 = vrot.slane %v363, 4
  %v366 = vshll.u32 %v313, 16
  %v368 = vrot.slane %v366, 5
  %v369 = vor.u32 %v365, %v368
  %v370 = vrot.slane %v369, 4
  %v372 = vshll.u32 %v346, 16
  %v374 = vrot.slane %v372, 5
  %v375 = vsel %vm87, %v370, %v374
  %v377 = vshrl.u32 %v314, 16
  %v379 = vrot.slane %v377, 4
  %v380 = vshll.u32 %v314, 16
  %v382 = vrot.slane %v380, 5
  %v383 = vor.u32 %v379, %v382
  %v384 = vrot.slane %v383, 4
  %v386 = vshll.u32 %v347, 16
  %v388 = vrot.slane %v386, 5
  %v389 = vsel %vm87, %v384, %v388
  %v391 = vshrl.u32 %v315, 16
  %v393 = vrot.slane %v391, 4
  %v394 = vshll.u32 %v315, 16
  %v396 = vrot.slane %v394, 5
  %v397 = vor.u32 %v393, %v396
  %v398 = vrot.slane %v397, 4
  %v400 = vshll.u32 %v348, 16
  %v402 = vrot.slane %v400, 5
  %v403 = vsel %vm87, %v398, %v402
  %v405 = vshrl.u32 %v316, 16
  %v407 = vrot.slane %v405, 4
  %v408 = vshll.u32 %v316, 16
  %v410 = vrot.slane %v408, 5
  %v411 = vor.u32 %v407, %v410
  %v412 = vrot.slane %v411, 4
  %v414 = vshll.u32 %v349, 16
  %v416 = vrot.slane %v414, 5
  %v417 = vsel %vm87, %v412, %v416
  %v419 = vshrl.u32 %v317, 16
  %v421 = vrot.slane %v419, 4
  %v422 = vshll.u32 %v317, 16
  %v424 = vrot.slane %v422, 5
  %v425 = vor.u32 %v421, %v424
  %v426 = vrot.slane %v425, 4
  %v428 = vshll.u32 %v350, 16
  %v430 = vrot.slane %v428, 5
  %v431 = vsel %vm87, %v426, %v430
  %v433 = vshrl.u32 %v318, 16
  %v435 = vrot.slane %v433, 4
  %v436 = vshll.u32 %v318, 16
  %v438 = vrot.slane %v436, 5
  %v439 = vor.u32 %v435, %v438
  %v440 = vrot.slane %v439, 4
  %v442 = vshll.u32 %v351, 16
  %v444 = vrot.slane %v442, 5
  %v445 = vsel %vm87, %v440, %v444
  %v447 = vshrl.u32 %v319, 16
  %v449 = vrot.slane %v447, 4
  %v450 = vshll.u32 %v319, 16
  %v452 = vrot.slane %v450, 5
  %v453 = vor.u32 %v449, %v452
  %v454 = vrot.slane %v453, 4
  %v456 = vshll.u32 %v352, 16
  %v458 = vrot.slane %v456, 5
  %v459 = vsel %vm87, %v454, %v458
  %v461 = vshrl.u32 %v320, 16
  %v463 = vrot.slane %v461, 4
  %v464 = vshll.u32 %v320, 16
  %v466 = vrot.slane %v464, 5
  %v467 = vor.u32 %v463, %v466
  %v468 = vrot.slane %v467, 4
  %v470 = vshll.u32 %v353, 16
  %v472 = vrot.slane %v470, 5
  %v473 = vsel %vm87, %v468, %v472
  %v475 = vshrl.u32 %v321, 16
  %v477 = vrot.slane %v475, 4
  %v478 = vshll.u32 %v321, 16
  %v480 = vrot.slane %v478, 5
  %v481 = vor.u32 %v477, %v480
  %v482 = vrot.slane %v481, 4
  %v484 = vshll.u32 %v354, 16
  %v486 = vrot.slane %v484, 5
  %v487 = vsel %vm87, %v482, %v486
  %v489 = vshrl.u32 %v322, 16
  %v491 = vrot.slane %v489, 4
  %v492 = vshll.u32 %v322, 16
  %v494 = vrot.slane %v492, 5
  %v495 = vor.u32 %v491, %v494
  %v496 = vrot.slane %v495, 4
  %v498 = vshll.u32 %v355, 16
  %v500 = vrot.slane %v498, 5
  %v501 = vsel %vm87, %v496, %v500
  %v503 = vshrl.u32 %v323, 16
  %v505 = vrot.slane %v503, 4
  %v506 = vshll.u32 %v323, 16
  %v508 = vrot.slane %v506, 5
  %v509 = vor.u32 %v505, %v508
  %v510 = vrot.slane %v509, 4
  %v512 = vshll.u32 %v356, 16
  %v514 = vrot.slane %v512, 5
  %v515 = vsel %vm87, %v510, %v514
  %v517 = vshrl.u32 %v324, 16
  %v519 = vrot.slane %v517, 4
  %v520 = vshll.u32 %v324, 16
  %v522 = vrot.slane %v520, 5
  %v523 = vor.u32 %v519, %v522
  %v524 = vrot.slane %v523, 4
  %v526 = vshll.u32 %v357, 16
  %v528 = vrot.slane %v526, 5
  %v529 = vsel %vm87, %v524, %v528
  %v531 = vshrl.u32 %v325, 16
  %v533 = vrot.slane %v531, 4
  %v534 = vshll.u32 %v325, 16
  %v536 = vrot.slane %v534, 5
  %v537 = vor.u32 %v533, %v536
  %v538 = vrot.slane %v537, 4
  %v540 = vshll.u32 %v358, 16
  %v542 = vrot.slane %v540, 5
  %v543 = vsel %vm87, %v538, %v542
  %v545 = vshrl.u32 %v326, 16
  %v547 = vrot.slane %v545, 4
  %v548 = vshll.u32 %v326, 16
  %v550 = vrot.slane %v548, 5
  %v551 = vor.u32 %v547, %v550
  %v552 = vrot.slane %v551, 4
  %v554 = vshll.u32 %v359, 16
  %v556 = vrot.slane %v554, 5
  %v557 = vsel %vm87, %v552, %v556
  %v559 = vshrl.u32 %v327, 16
  %v561 = vrot.slane %v559, 4
  %v562 = vshll.u32 %v327, 16
  %v564 = vrot.slane %v562, 5
  %v565 = vor.u32 %v561, %v564
  %v566 = vrot.slane %v565, 4
  %v568 = vshll.u32 %v360, 16
  %v570 = vrot.slane %v568, 5
  %v571 = vsel %vm87, %v566, %v570
  %v573 = vshrl.u32 %v328, 16
  %v575 = vrot.slane %v573, 4
  %v576 = vshll.u32 %v328, 16
  %v578 = vrot.slane %v576, 5
  %v579 = vor.u32 %v575, %v578
  %v580 = vrot.slane %v579, 4
  %v582 = vshll.u32 %v361, 16
  %v584 = vrot.slane %v582, 5
  %v585 = vsel %vm87, %v580, %v584
  %s586 = scalar_lea.vmem %s0, 8
  %v587 = vld [vmem:[%s586] sm:$0xf]
  %v588 = vld [vmem:[%s586 + $0x8] sm:$0xf]
  %v589 = vld [vmem:[%s586 + $0x10] sm:$0xf]
  %v590 = vld [vmem:[%s586 + $0x18] sm:$0xf]
  %v591 = vld [vmem:[%s586 + $0x20] sm:$0xf]
  %v592 = vld [vmem:[%s586 + $0x28] sm:$0xf]
  %v593 = vld [vmem:[%s586 + $0x30] sm:$0xf]
  %v594 = vld [vmem:[%s586 + $0x38] sm:$0xf]
  %v595 = vld [vmem:[%s586 + $0x48] sm:$0xf]
  %v596 = vld [vmem:[%s586 + $0x50] sm:$0xf]
  %v597 = vld [vmem:[%s586 + $0x58] sm:$0xf]
  %v598 = vld [vmem:[%s586 + $0x60] sm:$0xf]
  %v599 = vld [vmem:[%s586 + $0x68] sm:$0xf]
  %v600 = vld [vmem:[%s586 + $0x70] sm:$0xf]
  %v601 = vld [vmem:[%s586 + $0x78] sm:$0xf]
  %v602 = vld [vmem:[%s586 + $0x80] sm:$0xf]
  %s603 = scalar_lea.vmem %s0, 152
  %v604 = vld [vmem:[%s603] sm:$0xf]
  %v605 = vld [vmem:[%s603 + $0x8] sm:$0xf]
  %v606 = vld [vmem:[%s603 + $0x10] sm:$0xf]
  %v607 = vld [vmem:[%s603 + $0x18] sm:$0xf]
  %v608 = vld [vmem:[%s603 + $0x20] sm:$0xf]
  %v609 = vld [vmem:[%s603 + $0x28] sm:$0xf]
  %v610 = vld [vmem:[%s603 + $0x30] sm:$0xf]
  %v611 = vld [vmem:[%s603 + $0x38] sm:$0xf]
  %v612 = vld [vmem:[%s603 + $0x48] sm:$0xf]
  %v613 = vld [vmem:[%s603 + $0x50] sm:$0xf]
  %v614 = vld [vmem:[%s603 + $0x58] sm:$0xf]
  %v615 = vld [vmem:[%s603 + $0x60] sm:$0xf]
  %v616 = vld [vmem:[%s603 + $0x68] sm:$0xf]
  %v617 = vld [vmem:[%s603 + $0x70] sm:$0xf]
  %v618 = vld [vmem:[%s603 + $0x78] sm:$0xf]
  %v619 = vld [vmem:[%s603 + $0x80] sm:$0xf]
  %v620 = vld [vmem:[%s586 + $0x4] sm:$0x1]
  %v621 = vld [vmem:[%s586 + $0xc] sm:$0x1]
  %v622 = vld [vmem:[%s586 + $0x14] sm:$0x1]
  %v623 = vld [vmem:[%s586 + $0x1c] sm:$0x1]
  %v624 = vld [vmem:[%s586 + $0x24] sm:$0x1]
  %v625 = vld [vmem:[%s586 + $0x2c] sm:$0x1]
  %v626 = vld [vmem:[%s586 + $0x34] sm:$0x1]
  %v627 = vld [vmem:[%s586 + $0x3c] sm:$0x1]
  %v628 = vld [vmem:[%s586 + $0x4c] sm:$0x1]
  %v629 = vld [vmem:[%s586 + $0x54] sm:$0x1]
  %v630 = vld [vmem:[%s586 + $0x5c] sm:$0x1]
  %v631 = vld [vmem:[%s586 + $0x64] sm:$0x1]
  %v632 = vld [vmem:[%s586 + $0x6c] sm:$0x1]
  %v633 = vld [vmem:[%s586 + $0x74] sm:$0x1]
  %v634 = vld [vmem:[%s586 + $0x7c] sm:$0x1]
  %v635 = vld [vmem:[%s586 + $0x84] sm:$0x1]
  %v637 = vshrl.u32 %v587, 16
  %v639 = vrot.slane %v637, 4
  %v640 = vshll.u32 %v587, 16
  %v642 = vrot.slane %v640, 5
  %v643 = vor.u32 %v639, %v642
  %v644 = vrot.slane %v643, 4
  %v646 = vshll.u32 %v620, 16
  %v648 = vrot.slane %v646, 5
  %v649 = vsel %vm87, %v644, %v648
  %v651 = vshrl.u32 %v588, 16
  %v653 = vrot.slane %v651, 4
  %v654 = vshll.u32 %v588, 16
  %v656 = vrot.slane %v654, 5
  %v657 = vor.u32 %v653, %v656
  %v658 = vrot.slane %v657, 4
  %v660 = vshll.u32 %v621, 16
  %v662 = vrot.slane %v660, 5
  %v663 = vsel %vm87, %v658, %v662
  %v665 = vshrl.u32 %v589, 16
  %v667 = vrot.slane %v665, 4
  %v668 = vshll.u32 %v589, 16
  %v670 = vrot.slane %v668, 5
  %v671 = vor.u32 %v667, %v670
  %v672 = vrot.slane %v671, 4
  %v674 = vshll.u32 %v622, 16
  %v676 = vrot.slane %v674, 5
  %v677 = vsel %vm87, %v672, %v676
  %v679 = vshrl.u32 %v590, 16
  %v681 = vrot.slane %v679, 4
  %v682 = vshll.u32 %v590, 16
  %v684 = vrot.slane %v682, 5
  %v685 = vor.u32 %v681, %v684
  %v686 = vrot.slane %v685, 4
  %v688 = vshll.u32 %v623, 16
  %v690 = vrot.slane %v688, 5
  %v691 = vsel %vm87, %v686, %v690
  %v693 = vshrl.u32 %v591, 16
  %v695 = vrot.slane %v693, 4
  %v696 = vshll.u32 %v591, 16
  %v698 = vrot.slane %v696, 5
  %v699 = vor.u32 %v695, %v698
  %v700 = vrot.slane %v699, 4
  %v702 = vshll.u32 %v624, 16
  %v704 = vrot.slane %v702, 5
  %v705 = vsel %vm87, %v700, %v704
  %v707 = vshrl.u32 %v592, 16
  %v709 = vrot.slane %v707, 4
  %v710 = vshll.u32 %v592, 16
  %v712 = vrot.slane %v710, 5
  %v713 = vor.u32 %v709, %v712
  %v714 = vrot.slane %v713, 4
  %v716 = vshll.u32 %v625, 16
  %v718 = vrot.slane %v716, 5
  %v719 = vsel %vm87, %v714, %v718
  %v721 = vshrl.u32 %v593, 16
  %v723 = vrot.slane %v721, 4
  %v724 = vshll.u32 %v593, 16
  %v726 = vrot.slane %v724, 5
  %v727 = vor.u32 %v723, %v726
  %v728 = vrot.slane %v727, 4
  %v730 = vshll.u32 %v626, 16
  %v732 = vrot.slane %v730, 5
  %v733 = vsel %vm87, %v728, %v732
  %v735 = vshrl.u32 %v594, 16
  %v737 = vrot.slane %v735, 4
  %v738 = vshll.u32 %v594, 16
  %v740 = vrot.slane %v738, 5
  %v741 = vor.u32 %v737, %v740
  %v742 = vrot.slane %v741, 4
  %v744 = vshll.u32 %v627, 16
  %v746 = vrot.slane %v744, 5
  %v747 = vsel %vm87, %v742, %v746
  %v749 = vshrl.u32 %v595, 16
  %v751 = vrot.slane %v749, 4
  %v752 = vshll.u32 %v595, 16
  %v754 = vrot.slane %v752, 5
  %v755 = vor.u32 %v751, %v754
  %v756 = vrot.slane %v755, 4
  %v758 = vshll.u32 %v628, 16
  %v760 = vrot.slane %v758, 5
  %v761 = vsel %vm87, %v756, %v760
  %v763 = vshrl.u32 %v596, 16
  %v765 = vrot.slane %v763, 4
  %v766 = vshll.u32 %v596, 16
  %v768 = vrot.slane %v766, 5
  %v769 = vor.u32 %v765, %v768
  %v770 = vrot.slane %v769, 4
  %v772 = vshll.u32 %v629, 16
  %v774 = vrot.slane %v772, 5
  %v775 = vsel %vm87, %v770, %v774
  %v777 = vshrl.u32 %v597, 16
  %v779 = vrot.slane %v777, 4
  %v780 = vshll.u32 %v597, 16
  %v782 = vrot.slane %v780, 5
  %v783 = vor.u32 %v779, %v782
  %v784 = vrot.slane %v783, 4
  %v786 = vshll.u32 %v630, 16
  %v788 = vrot.slane %v786, 5
  %v789 = vsel %vm87, %v784, %v788
  %v791 = vshrl.u32 %v598, 16
  %v793 = vrot.slane %v791, 4
  %v794 = vshll.u32 %v598, 16
  %v796 = vrot.slane %v794, 5
  %v797 = vor.u32 %v793, %v796
  %v798 = vrot.slane %v797, 4
  %v800 = vshll.u32 %v631, 16
  %v802 = vrot.slane %v800, 5
  %v803 = vsel %vm87, %v798, %v802
  %v805 = vshrl.u32 %v599, 16
  %v807 = vrot.slane %v805, 4
  %v808 = vshll.u32 %v599, 16
  %v810 = vrot.slane %v808, 5
  %v811 = vor.u32 %v807, %v810
  %v812 = vrot.slane %v811, 4
  %v814 = vshll.u32 %v632, 16
  %v816 = vrot.slane %v814, 5
  %v817 = vsel %vm87, %v812, %v816
  %v819 = vshrl.u32 %v600, 16
  %v821 = vrot.slane %v819, 4
  %v822 = vshll.u32 %v600, 16
  %v824 = vrot.slane %v822, 5
  %v825 = vor.u32 %v821, %v824
  %v826 = vrot.slane %v825, 4
  %v828 = vshll.u32 %v633, 16
  %v830 = vrot.slane %v828, 5
  %v831 = vsel %vm87, %v826, %v830
  %v833 = vshrl.u32 %v601, 16
  %v835 = vrot.slane %v833, 4
  %v836 = vshll.u32 %v601, 16
  %v838 = vrot.slane %v836, 5
  %v839 = vor.u32 %v835, %v838
  %v840 = vrot.slane %v839, 4
  %v842 = vshll.u32 %v634, 16
  %v844 = vrot.slane %v842, 5
  %v845 = vsel %vm87, %v840, %v844
  %v847 = vshrl.u32 %v602, 16
  %v849 = vrot.slane %v847, 4
  %v850 = vshll.u32 %v602, 16
  %v852 = vrot.slane %v850, 5
  %v853 = vor.u32 %v849, %v852
  %v854 = vrot.slane %v853, 4
  %v856 = vshll.u32 %v635, 16
  %v858 = vrot.slane %v856, 5
  %v859 = vsel %vm87, %v854, %v858
  %v876 = vunpack.c.l.b16 %v36
  %v877 = vunpack.c.l.b16 %v37
  %v878 = vunpack.c.l.b16 %v38
  %v879 = vunpack.c.l.b16 %v39
  %v880 = vunpack.c.l.b16 %v40
  %v881 = vunpack.c.l.b16 %v41
  %v882 = vunpack.c.l.b16 %v42
  %v883 = vunpack.c.l.b16 %v43
  %v884 = vunpack.c.l.b16 %v44
  %v885 = vunpack.c.l.b16 %v45
  %v886 = vunpack.c.l.b16 %v46
  %v887 = vunpack.c.l.b16 %v47
  %v888 = vunpack.c.l.b16 %v48
  %v889 = vunpack.c.l.b16 %v49
  %v890 = vunpack.c.l.b16 %v50
  %v891 = vunpack.c.l.b16 %v51
  %v892 = vpack.c.b16 %v877, %v876
  %v893 = vpack.c.b16 %v879, %v878
  %v894 = vpack.c.b16 %v881, %v880
  %v895 = vpack.c.b16 %v883, %v882
  %v896 = vpack.c.b16 %v885, %v884
  %v897 = vpack.c.b16 %v887, %v886
  %v898 = vpack.c.b16 %v889, %v888
  %v899 = vpack.c.b16 %v891, %v890
  %v924 = vunpack.c.l.b16 %v53
  %v925 = vunpack.c.l.b16 %v54
  %v926 = vunpack.c.l.b16 %v55
  %v927 = vunpack.c.l.b16 %v56
  %v928 = vunpack.c.l.b16 %v57
  %v929 = vunpack.c.l.b16 %v58
  %v930 = vunpack.c.l.b16 %v59
  %v931 = vunpack.c.l.b16 %v60
  %v932 = vunpack.c.l.b16 %v61
  %v933 = vunpack.c.l.b16 %v62
  %v934 = vunpack.c.l.b16 %v63
  %v935 = vunpack.c.l.b16 %v64
  %v936 = vunpack.c.l.b16 %v65
  %v937 = vunpack.c.l.b16 %v66
  %v938 = vunpack.c.l.b16 %v67
  %v939 = vunpack.c.l.b16 %v68
  %v940 = vpack.c.b16 %v925, %v924
  %v941 = vpack.c.b16 %v927, %v926
  %v942 = vpack.c.b16 %v929, %v928
  %v943 = vpack.c.b16 %v931, %v930
  %v944 = vpack.c.b16 %v933, %v932
  %v945 = vpack.c.b16 %v935, %v934
  %v946 = vpack.c.b16 %v937, %v936
  %v947 = vpack.c.b16 %v939, %v938
  %v956 = vunpack.c.l.b16 %v101
  %v957 = vunpack.c.l.b16 %v115
  %v958 = vunpack.c.l.b16 %v129
  %v959 = vunpack.c.l.b16 %v143
  %v960 = vunpack.c.l.b16 %v157
  %v961 = vunpack.c.l.b16 %v171
  %v962 = vunpack.c.l.b16 %v185
  %v963 = vunpack.c.l.b16 %v199
  %v964 = vunpack.c.l.b16 %v213
  %v965 = vunpack.c.l.b16 %v227
  %v966 = vunpack.c.l.b16 %v241
  %v967 = vunpack.c.l.b16 %v255
  %v968 = vunpack.c.l.b16 %v269
  %v969 = vunpack.c.l.b16 %v283
  %v970 = vunpack.c.l.b16 %v297
  %v971 = vunpack.c.l.b16 %v311
  %v972 = vpack.c.b16 %v957, %v956
  %v973 = vpack.c.b16 %v959, %v958
  %v974 = vpack.c.b16 %v961, %v960
  %v975 = vpack.c.b16 %v963, %v962
  %v976 = vpack.c.b16 %v965, %v964
  %v977 = vpack.c.b16 %v967, %v966
  %v978 = vpack.c.b16 %v969, %v968
  %v979 = vpack.c.b16 %v971, %v970
  %v1004 = vunpack.c.l.b16 %v313
  %v1005 = vunpack.c.l.b16 %v314
  %v1006 = vunpack.c.l.b16 %v315
  %v1007 = vunpack.c.l.b16 %v316
  %v1008 = vunpack.c.l.b16 %v317
  %v1009 = vunpack.c.l.b16 %v318
  %v1010 = vunpack.c.l.b16 %v319
  %v1011 = vunpack.c.l.b16 %v320
  %v1012 = vunpack.c.l.b16 %v321
  %v1013 = vunpack.c.l.b16 %v322
  %v1014 = vunpack.c.l.b16 %v323
  %v1015 = vunpack.c.l.b16 %v324
  %v1016 = vunpack.c.l.b16 %v325
  %v1017 = vunpack.c.l.b16 %v326
  %v1018 = vunpack.c.l.b16 %v327
  %v1019 = vunpack.c.l.b16 %v328
  %v1020 = vpack.c.b16 %v1005, %v1004
  %v1021 = vpack.c.b16 %v1007, %v1006
  %v1022 = vpack.c.b16 %v1009, %v1008
  %v1023 = vpack.c.b16 %v1011, %v1010
  %v1024 = vpack.c.b16 %v1013, %v1012
  %v1025 = vpack.c.b16 %v1015, %v1014
  %v1026 = vpack.c.b16 %v1017, %v1016
  %v1027 = vpack.c.b16 %v1019, %v1018
  %v1052 = vunpack.c.l.b16 %v330
  %v1053 = vunpack.c.l.b16 %v331
  %v1054 = vunpack.c.l.b16 %v332
  %v1055 = vunpack.c.l.b16 %v333
  %v1056 = vunpack.c.l.b16 %v334
  %v1057 = vunpack.c.l.b16 %v335
  %v1058 = vunpack.c.l.b16 %v336
  %v1059 = vunpack.c.l.b16 %v337
  %v1060 = vunpack.c.l.b16 %v338
  %v1061 = vunpack.c.l.b16 %v339
  %v1062 = vunpack.c.l.b16 %v340
  %v1063 = vunpack.c.l.b16 %v341
  %v1064 = vunpack.c.l.b16 %v342
  %v1065 = vunpack.c.l.b16 %v343
  %v1066 = vunpack.c.l.b16 %v344
  %v1067 = vunpack.c.l.b16 %v345
  %v1068 = vpack.c.b16 %v1053, %v1052
  %v1069 = vpack.c.b16 %v1055, %v1054
  %v1070 = vpack.c.b16 %v1057, %v1056
  %v1071 = vpack.c.b16 %v1059, %v1058
  %v1072 = vpack.c.b16 %v1061, %v1060
  %v1073 = vpack.c.b16 %v1063, %v1062
  %v1074 = vpack.c.b16 %v1065, %v1064
  %v1075 = vpack.c.b16 %v1067, %v1066
  %v1084 = vunpack.c.l.b16 %v375
  %v1085 = vunpack.c.l.b16 %v389
  %v1086 = vunpack.c.l.b16 %v403
  %v1087 = vunpack.c.l.b16 %v417
  %v1088 = vunpack.c.l.b16 %v431
  %v1089 = vunpack.c.l.b16 %v445
  %v1090 = vunpack.c.l.b16 %v459
  %v1091 = vunpack.c.l.b16 %v473
  %v1092 = vunpack.c.l.b16 %v487
  %v1093 = vunpack.c.l.b16 %v501
  %v1094 = vunpack.c.l.b16 %v515
  %v1095 = vunpack.c.l.b16 %v529
  %v1096 = vunpack.c.l.b16 %v543
  %v1097 = vunpack.c.l.b16 %v557
  %v1098 = vunpack.c.l.b16 %v571
  %v1099 = vunpack.c.l.b16 %v585
  %v1100 = vpack.c.b16 %v1085, %v1084
  %v1101 = vpack.c.b16 %v1087, %v1086
  %v1102 = vpack.c.b16 %v1089, %v1088
  %v1103 = vpack.c.b16 %v1091, %v1090
  %v1104 = vpack.c.b16 %v1093, %v1092
  %v1105 = vpack.c.b16 %v1095, %v1094
  %v1106 = vpack.c.b16 %v1097, %v1096
  %v1107 = vpack.c.b16 %v1099, %v1098
  %v1132 = vunpack.c.l.b16 %v587
  %v1133 = vunpack.c.l.b16 %v588
  %v1134 = vunpack.c.l.b16 %v589
  %v1135 = vunpack.c.l.b16 %v590
  %v1136 = vunpack.c.l.b16 %v591
  %v1137 = vunpack.c.l.b16 %v592
  %v1138 = vunpack.c.l.b16 %v593
  %v1139 = vunpack.c.l.b16 %v594
  %v1140 = vunpack.c.l.b16 %v595
  %v1141 = vunpack.c.l.b16 %v596
  %v1142 = vunpack.c.l.b16 %v597
  %v1143 = vunpack.c.l.b16 %v598
  %v1144 = vunpack.c.l.b16 %v599
  %v1145 = vunpack.c.l.b16 %v600
  %v1146 = vunpack.c.l.b16 %v601
  %v1147 = vunpack.c.l.b16 %v602
  %v1148 = vpack.c.b16 %v1133, %v1132
  %v1149 = vpack.c.b16 %v1135, %v1134
  %v1150 = vpack.c.b16 %v1137, %v1136
  %v1151 = vpack.c.b16 %v1139, %v1138
  %v1152 = vpack.c.b16 %v1141, %v1140
  %v1153 = vpack.c.b16 %v1143, %v1142
  %v1154 = vpack.c.b16 %v1145, %v1144
  %v1155 = vpack.c.b16 %v1147, %v1146
  %v1180 = vunpack.c.l.b16 %v604
  %v1181 = vunpack.c.l.b16 %v605
  %v1182 = vunpack.c.l.b16 %v606
  %v1183 = vunpack.c.l.b16 %v607
  %v1184 = vunpack.c.l.b16 %v608
  %v1185 = vunpack.c.l.b16 %v609
  %v1186 = vunpack.c.l.b16 %v610
  %v1187 = vunpack.c.l.b16 %v611
  %v1188 = vunpack.c.l.b16 %v612
  %v1189 = vunpack.c.l.b16 %v613
  %v1190 = vunpack.c.l.b16 %v614
  %v1191 = vunpack.c.l.b16 %v615
  %v1192 = vunpack.c.l.b16 %v616
  %v1193 = vunpack.c.l.b16 %v617
  %v1194 = vunpack.c.l.b16 %v618
  %v1195 = vunpack.c.l.b16 %v619
  %v1196 = vpack.c.b16 %v1181, %v1180
  %v1197 = vpack.c.b16 %v1183, %v1182
  %v1198 = vpack.c.b16 %v1185, %v1184
  %v1199 = vpack.c.b16 %v1187, %v1186
  %v1200 = vpack.c.b16 %v1189, %v1188
  %v1201 = vpack.c.b16 %v1191, %v1190
  %v1202 = vpack.c.b16 %v1193, %v1192
  %v1203 = vpack.c.b16 %v1195, %v1194
  %v1212 = vunpack.c.l.b16 %v649
  %v1213 = vunpack.c.l.b16 %v663
  %v1214 = vunpack.c.l.b16 %v677
  %v1215 = vunpack.c.l.b16 %v691
  %v1216 = vunpack.c.l.b16 %v705
  %v1217 = vunpack.c.l.b16 %v719
  %v1218 = vunpack.c.l.b16 %v733
  %v1219 = vunpack.c.l.b16 %v747
  %v1220 = vunpack.c.l.b16 %v761
  %v1221 = vunpack.c.l.b16 %v775
  %v1222 = vunpack.c.l.b16 %v789
  %v1223 = vunpack.c.l.b16 %v803
  %v1224 = vunpack.c.l.b16 %v817
  %v1225 = vunpack.c.l.b16 %v831
  %v1226 = vunpack.c.l.b16 %v845
  %v1227 = vunpack.c.l.b16 %v859
  %v1228 = vpack.c.b16 %v1213, %v1212
  %v1229 = vpack.c.b16 %v1215, %v1214
  %v1230 = vpack.c.b16 %v1217, %v1216
  %v1231 = vpack.c.b16 %v1219, %v1218
  %v1232 = vpack.c.b16 %v1221, %v1220
  %v1233 = vpack.c.b16 %v1223, %v1222
  %v1234 = vpack.c.b16 %v1225, %v1224
  %v1235 = vpack.c.b16 %v1227, %v1226
  %v1244 = vld [vmem:[%s1] sm:$0xf]
  %v1245 = vld [vmem:[%s1 + $0x4] sm:$0xf]
  %v1246 = vld [vmem:[%s1 + $0x8] sm:$0xf]
  %v1247 = vld [vmem:[%s1 + $0xc] sm:$0xf]
  %v1248 = vld [vmem:[%s1 + $0x10] sm:$0xf]
  %v1249 = vld [vmem:[%s1 + $0x14] sm:$0xf]
  %v1250 = vld [vmem:[%s1 + $0x18] sm:$0xf]
  %v1251 = vld [vmem:[%s1 + $0x1c] sm:$0xf]
  %v1252 = vld [vmem:[%s1 + $0x20] sm:$0xf]
  %v1253 = vld [vmem:[%s1 + $0x24] sm:$0xf]
  %v1254 = vld [vmem:[%s1 + $0x28] sm:$0xf]
  %v1255 = vld [vmem:[%s1 + $0x2c] sm:$0xf]
  %v1256 = vld [vmem:[%s1 + $0x30] sm:$0xf]
  %v1257 = vld [vmem:[%s1 + $0x34] sm:$0xf]
  %v1258 = vld [vmem:[%s1 + $0x38] sm:$0xf]
  %v1259 = vld [vmem:[%s1 + $0x3c] sm:$0xf]
  %v1260 = vld [vmem:[%s1 + $0x40] sm:$0xf]
  %v1261 = vld [vmem:[%s1 + $0x44] sm:$0xf]
  %v1262 = vld [vmem:[%s1 + $0x48] sm:$0xf]
  %v1263 = vld [vmem:[%s1 + $0x4c] sm:$0xf]
  %v1264 = vld [vmem:[%s1 + $0x50] sm:$0xf]
  %v1265 = vld [vmem:[%s1 + $0x54] sm:$0xf]
  %v1266 = vld [vmem:[%s1 + $0x58] sm:$0xf]
  %v1267 = vld [vmem:[%s1 + $0x5c] sm:$0xf]
  %v1268 = vld [vmem:[%s1 + $0x60] sm:$0xf]
  %v1269 = vld [vmem:[%s1 + $0x64] sm:$0xf]
  %v1270 = vld [vmem:[%s1 + $0x68] sm:$0xf]
  %v1271 = vld [vmem:[%s1 + $0x6c] sm:$0xf]
  %v1272 = vld [vmem:[%s1 + $0x70] sm:$0xf]
  %v1273 = vld [vmem:[%s1 + $0x74] sm:$0xf]
  %v1274 = vld [vmem:[%s1 + $0x78] sm:$0xf]
  %v1275 = vld [vmem:[%s1 + $0x7c] sm:$0xf]
  %v1276 = vld [vmem:[%s1 + $0x80] sm:$0xf]
  %v1277 = vld [vmem:[%s1 + $0x84] sm:$0xf]
  %v1278 = vld [vmem:[%s1 + $0x88] sm:$0xf]
  %v1279 = vld [vmem:[%s1 + $0x8c] sm:$0xf]
  %v1280 = vld [vmem:[%s1 + $0x90] sm:$0xf]
  %v1281 = vld [vmem:[%s1 + $0x94] sm:$0xf]
  %v1282 = vld [vmem:[%s1 + $0x98] sm:$0xf]
  %v1283 = vld [vmem:[%s1 + $0x9c] sm:$0xf]
  %v1284 = vld [vmem:[%s1 + $0xa0] sm:$0xf]
  %v1285 = vld [vmem:[%s1 + $0xa4] sm:$0xf]
  %v1286 = vld [vmem:[%s1 + $0xa8] sm:$0xf]
  %v1287 = vld [vmem:[%s1 + $0xac] sm:$0xf]
  %v1288 = vld [vmem:[%s1 + $0xb0] sm:$0xf]
  %v1289 = vld [vmem:[%s1 + $0xb4] sm:$0xf]
  %v1290 = vld [vmem:[%s1 + $0xb8] sm:$0xf]
  %v1291 = vld [vmem:[%s1 + $0xbc] sm:$0xf]
  %v1292 = vld [vmem:[%s1 + $0xc0] sm:$0xf]
  %v1293 = vld [vmem:[%s1 + $0xc4] sm:$0xf]
  %v1294 = vld [vmem:[%s1 + $0xc8] sm:$0xf]
  %v1295 = vld [vmem:[%s1 + $0xcc] sm:$0xf]
  %v1296 = vld [vmem:[%s1 + $0xd0] sm:$0xf]
  %v1297 = vld [vmem:[%s1 + $0xd4] sm:$0xf]
  %v1298 = vld [vmem:[%s1 + $0xd8] sm:$0xf]
  %v1299 = vld [vmem:[%s1 + $0xdc] sm:$0xf]
  %v1300 = vld [vmem:[%s1 + $0xe0] sm:$0xf]
  %v1301 = vld [vmem:[%s1 + $0xe4] sm:$0xf]
  %v1302 = vld [vmem:[%s1 + $0xe8] sm:$0xf]
  %v1303 = vld [vmem:[%s1 + $0xec] sm:$0xf]
  %v1304 = vld [vmem:[%s1 + $0xf0] sm:$0xf]
  %v1305 = vld [vmem:[%s1 + $0xf4] sm:$0xf]
  %v1306 = vld [vmem:[%s1 + $0xf8] sm:$0xf]
  %v1307 = vld [vmem:[%s1 + $0xfc] sm:$0xf]
  %v1308 = vld [vmem:[%s1 + $0x100] sm:$0xf]
  %v1309 = vld [vmem:[%s1 + $0x104] sm:$0xf]
  %v1310 = vld [vmem:[%s1 + $0x108] sm:$0xf]
  %v1311 = vld [vmem:[%s1 + $0x10c] sm:$0xf]
  %v1312 = vld [vmem:[%s1 + $0x110] sm:$0xf]
  %v1313 = vld [vmem:[%s1 + $0x114] sm:$0xf]
  %v1314 = vld [vmem:[%s1 + $0x118] sm:$0xf]
  %v1315 = vld [vmem:[%s1 + $0x11c] sm:$0xf]
  %v1316 = vld [vmem:[%s1 + $0x120] sm:$0xf]
  %v1317 = vld [vmem:[%s1 + $0x124] sm:$0xf]
  %v1318 = vld [vmem:[%s1 + $0x128] sm:$0xf]
  %v1319 = vld [vmem:[%s1 + $0x12c] sm:$0xf]
  %v1320 = vld [vmem:[%s1 + $0x130] sm:$0xf]
  %v1321 = vld [vmem:[%s1 + $0x134] sm:$0xf]
  %v1322 = vld [vmem:[%s1 + $0x138] sm:$0xf]
  %v1323 = vld [vmem:[%s1 + $0x13c] sm:$0xf]
  %v1324 = vld [vmem:[%s1 + $0x140] sm:$0xf]
  %v1325 = vld [vmem:[%s1 + $0x144] sm:$0xf]
  %v1326 = vld [vmem:[%s1 + $0x148] sm:$0xf]
  %v1327 = vld [vmem:[%s1 + $0x14c] sm:$0xf]
  %v1328 = vld [vmem:[%s1 + $0x150] sm:$0xf]
  %v1329 = vld [vmem:[%s1 + $0x154] sm:$0xf]
  %v1330 = vld [vmem:[%s1 + $0x158] sm:$0xf]
  %v1331 = vld [vmem:[%s1 + $0x15c] sm:$0xf]
  %v1332 = vld [vmem:[%s1 + $0x160] sm:$0xf]
  %v1333 = vld [vmem:[%s1 + $0x164] sm:$0xf]
  %v1334 = vld [vmem:[%s1 + $0x168] sm:$0xf]
  %v1335 = vld [vmem:[%s1 + $0x16c] sm:$0xf]
  %v1336 = vld [vmem:[%s1 + $0x170] sm:$0xf]
  %v1337 = vld [vmem:[%s1 + $0x174] sm:$0xf]
  %v1338 = vld [vmem:[%s1 + $0x178] sm:$0xf]
  %v1339 = vld [vmem:[%s1 + $0x17c] sm:$0xf]
  %v1340 = vld [vmem:[%s1 + $0x180] sm:$0xf]
  %v1341 = vld [vmem:[%s1 + $0x184] sm:$0xf]
  %v1342 = vld [vmem:[%s1 + $0x188] sm:$0xf]
  %v1343 = vld [vmem:[%s1 + $0x18c] sm:$0xf]
  %v1344 = vld [vmem:[%s1 + $0x190] sm:$0xf]
  %v1345 = vld [vmem:[%s1 + $0x194] sm:$0xf]
  %v1346 = vld [vmem:[%s1 + $0x198] sm:$0xf]
  %v1347 = vld [vmem:[%s1 + $0x19c] sm:$0xf]
  %v1348 = vld [vmem:[%s1 + $0x1a0] sm:$0xf]
  %v1349 = vld [vmem:[%s1 + $0x1a4] sm:$0xf]
  %v1350 = vld [vmem:[%s1 + $0x1a8] sm:$0xf]
  %v1351 = vld [vmem:[%s1 + $0x1ac] sm:$0xf]
  %v1352 = vld [vmem:[%s1 + $0x1b0] sm:$0xf]
  %v1353 = vld [vmem:[%s1 + $0x1b4] sm:$0xf]
  %v1354 = vld [vmem:[%s1 + $0x1b8] sm:$0xf]
  %v1355 = vld [vmem:[%s1 + $0x1bc] sm:$0xf]
  %v1356 = vld [vmem:[%s1 + $0x1c0] sm:$0xf]
  %v1357 = vld [vmem:[%s1 + $0x1c4] sm:$0xf]
  %v1358 = vld [vmem:[%s1 + $0x1c8] sm:$0xf]
  %v1359 = vld [vmem:[%s1 + $0x1cc] sm:$0xf]
  %v1360 = vld [vmem:[%s1 + $0x1d0] sm:$0xf]
  %v1361 = vld [vmem:[%s1 + $0x1d4] sm:$0xf]
  %v1362 = vld [vmem:[%s1 + $0x1d8] sm:$0xf]
  %v1363 = vld [vmem:[%s1 + $0x1dc] sm:$0xf]
  %v1364 = vld [vmem:[%s1 + $0x1e0] sm:$0xf]
  %v1365 = vld [vmem:[%s1 + $0x1e4] sm:$0xf]
  %v1366 = vld [vmem:[%s1 + $0x1e8] sm:$0xf]
  %v1367 = vld [vmem:[%s1 + $0x1ec] sm:$0xf]
  %v1368 = vld [vmem:[%s1 + $0x1f0] sm:$0xf]
  %v1369 = vld [vmem:[%s1 + $0x1f4] sm:$0xf]
  %v1370 = vld [vmem:[%s1 + $0x1f8] sm:$0xf]
  %v1371 = vld [vmem:[%s1 + $0x1fc] sm:$0xf]
  %v1372 = vld [vmem:[%s1 + $0x200] sm:$0xf]
  %v1373 = vld [vmem:[%s1 + $0x204] sm:$0xf]
  %v1374 = vld [vmem:[%s1 + $0x208] sm:$0xf]
  %v1375 = vld [vmem:[%s1 + $0x20c] sm:$0xf]
  %v1376 = vld [vmem:[%s1 + $0x210] sm:$0xf]
  %v1377 = vld [vmem:[%s1 + $0x214] sm:$0xf]
  %v1378 = vld [vmem:[%s1 + $0x218] sm:$0xf]
  %v1379 = vld [vmem:[%s1 + $0x21c] sm:$0xf]
  %v1380 = vld [vmem:[%s1 + $0x220] sm:$0xf]
  %v1381 = vld [vmem:[%s1 + $0x224] sm:$0xf]
  %v1382 = vld [vmem:[%s1 + $0x228] sm:$0xf]
  %v1383 = vld [vmem:[%s1 + $0x22c] sm:$0xf]
  %v1384 = vld [vmem:[%s1 + $0x230] sm:$0xf]
  %v1385 = vld [vmem:[%s1 + $0x234] sm:$0xf]
  %v1386 = vld [vmem:[%s1 + $0x238] sm:$0xf]
  %v1387 = vld [vmem:[%s1 + $0x23c] sm:$0xf]
  %v1532 = vunpack.c.l.b16 %v1244
  %v1533 = vunpack.c.l.b16 %v1245
  %v1534 = vunpack.c.l.b16 %v1246
  %v1535 = vunpack.c.l.b16 %v1247
  %v1536 = vunpack.c.l.b16 %v1248
  %v1537 = vunpack.c.l.b16 %v1249
  %v1538 = vunpack.c.l.b16 %v1250
  %v1539 = vunpack.c.l.b16 %v1251
  %v1540 = vunpack.c.l.b16 %v1252
  %v1541 = vunpack.c.l.b16 %v1253
  %v1542 = vunpack.c.l.b16 %v1254
  %v1543 = vunpack.c.l.b16 %v1255
  %v1544 = vunpack.c.l.b16 %v1256
  %v1545 = vunpack.c.l.b16 %v1257
  %v1546 = vunpack.c.l.b16 %v1258
  %v1547 = vunpack.c.l.b16 %v1259
  %v1548 = vunpack.c.l.b16 %v1260
  %v1549 = vunpack.c.l.b16 %v1261
  %v1550 = vunpack.c.l.b16 %v1262
  %v1551 = vunpack.c.l.b16 %v1263
  %v1552 = vunpack.c.l.b16 %v1264
  %v1553 = vunpack.c.l.b16 %v1265
  %v1554 = vunpack.c.l.b16 %v1266
  %v1555 = vunpack.c.l.b16 %v1267
  %v1556 = vunpack.c.l.b16 %v1268
  %v1557 = vunpack.c.l.b16 %v1269
  %v1558 = vunpack.c.l.b16 %v1270
  %v1559 = vunpack.c.l.b16 %v1271
  %v1560 = vunpack.c.l.b16 %v1272
  %v1561 = vunpack.c.l.b16 %v1273
  %v1562 = vunpack.c.l.b16 %v1274
  %v1563 = vunpack.c.l.b16 %v1275
  %v1564 = vunpack.c.l.b16 %v1276
  %v1565 = vunpack.c.l.b16 %v1277
  %v1566 = vunpack.c.l.b16 %v1278
  %v1567 = vunpack.c.l.b16 %v1279
  %v1568 = vunpack.c.l.b16 %v1280
  %v1569 = vunpack.c.l.b16 %v1281
  %v1570 = vunpack.c.l.b16 %v1282
  %v1571 = vunpack.c.l.b16 %v1283
  %v1572 = vunpack.c.l.b16 %v1284
  %v1573 = vunpack.c.l.b16 %v1285
  %v1574 = vunpack.c.l.b16 %v1286
  %v1575 = vunpack.c.l.b16 %v1287
  %v1576 = vunpack.c.l.b16 %v1288
  %v1577 = vunpack.c.l.b16 %v1289
  %v1578 = vunpack.c.l.b16 %v1290
  %v1579 = vunpack.c.l.b16 %v1291
  %v1580 = vunpack.c.l.b16 %v1292
  %v1581 = vunpack.c.l.b16 %v1293
  %v1582 = vunpack.c.l.b16 %v1294
  %v1583 = vunpack.c.l.b16 %v1295
  %v1584 = vunpack.c.l.b16 %v1296
  %v1585 = vunpack.c.l.b16 %v1297
  %v1586 = vunpack.c.l.b16 %v1298
  %v1587 = vunpack.c.l.b16 %v1299
  %v1588 = vunpack.c.l.b16 %v1300
  %v1589 = vunpack.c.l.b16 %v1301
  %v1590 = vunpack.c.l.b16 %v1302
  %v1591 = vunpack.c.l.b16 %v1303
  %v1592 = vunpack.c.l.b16 %v1304
  %v1593 = vunpack.c.l.b16 %v1305
  %v1594 = vunpack.c.l.b16 %v1306
  %v1595 = vunpack.c.l.b16 %v1307
  %v1596 = vunpack.c.l.b16 %v1308
  %v1597 = vunpack.c.l.b16 %v1309
  %v1598 = vunpack.c.l.b16 %v1310
  %v1599 = vunpack.c.l.b16 %v1311
  %v1600 = vunpack.c.l.b16 %v1312
  %v1601 = vunpack.c.l.b16 %v1313
  %v1602 = vunpack.c.l.b16 %v1314
  %v1603 = vunpack.c.l.b16 %v1315
  %v1604 = vunpack.c.l.b16 %v1316
  %v1605 = vunpack.c.l.b16 %v1317
  %v1606 = vunpack.c.l.b16 %v1318
  %v1607 = vunpack.c.l.b16 %v1319
  %v1608 = vunpack.c.l.b16 %v1320
  %v1609 = vunpack.c.l.b16 %v1321
  %v1610 = vunpack.c.l.b16 %v1322
  %v1611 = vunpack.c.l.b16 %v1323
  %v1612 = vunpack.c.l.b16 %v1324
  %v1613 = vunpack.c.l.b16 %v1325
  %v1614 = vunpack.c.l.b16 %v1326
  %v1615 = vunpack.c.l.b16 %v1327
  %v1616 = vunpack.c.l.b16 %v1328
  %v1617 = vunpack.c.l.b16 %v1329
  %v1618 = vunpack.c.l.b16 %v1330
  %v1619 = vunpack.c.l.b16 %v1331
  %v1620 = vunpack.c.l.b16 %v1332
  %v1621 = vunpack.c.l.b16 %v1333
  %v1622 = vunpack.c.l.b16 %v1334
  %v1623 = vunpack.c.l.b16 %v1335
  %v1624 = vunpack.c.l.b16 %v1336
  %v1625 = vunpack.c.l.b16 %v1337
  %v1626 = vunpack.c.l.b16 %v1338
  %v1627 = vunpack.c.l.b16 %v1339
  %v1628 = vunpack.c.l.b16 %v1340
  %v1629 = vunpack.c.l.b16 %v1341
  %v1630 = vunpack.c.l.b16 %v1342
  %v1631 = vunpack.c.l.b16 %v1343
  %v1632 = vunpack.c.l.b16 %v1344
  %v1633 = vunpack.c.l.b16 %v1345
  %v1634 = vunpack.c.l.b16 %v1346
  %v1635 = vunpack.c.l.b16 %v1347
  %v1636 = vunpack.c.l.b16 %v1348
  %v1637 = vunpack.c.l.b16 %v1349
  %v1638 = vunpack.c.l.b16 %v1350
  %v1639 = vunpack.c.l.b16 %v1351
  %v1640 = vunpack.c.l.b16 %v1352
  %v1641 = vunpack.c.l.b16 %v1353
  %v1642 = vunpack.c.l.b16 %v1354
  %v1643 = vunpack.c.l.b16 %v1355
  %v1644 = vunpack.c.l.b16 %v1356
  %v1645 = vunpack.c.l.b16 %v1357
  %v1646 = vunpack.c.l.b16 %v1358
  %v1647 = vunpack.c.l.b16 %v1359
  %v1648 = vunpack.c.l.b16 %v1360
  %v1649 = vunpack.c.l.b16 %v1361
  %v1650 = vunpack.c.l.b16 %v1362
  %v1651 = vunpack.c.l.b16 %v1363
  %v1652 = vunpack.c.l.b16 %v1364
  %v1653 = vunpack.c.l.b16 %v1365
  %v1654 = vunpack.c.l.b16 %v1366
  %v1655 = vunpack.c.l.b16 %v1367
  %v1656 = vunpack.c.l.b16 %v1368
  %v1657 = vunpack.c.l.b16 %v1369
  %v1658 = vunpack.c.l.b16 %v1370
  %v1659 = vunpack.c.l.b16 %v1371
  %v1660 = vunpack.c.l.b16 %v1372
  %v1661 = vunpack.c.l.b16 %v1373
  %v1662 = vunpack.c.l.b16 %v1374
  %v1663 = vunpack.c.l.b16 %v1375
  %v1664 = vunpack.c.l.b16 %v1376
  %v1665 = vunpack.c.l.b16 %v1377
  %v1666 = vunpack.c.l.b16 %v1378
  %v1667 = vunpack.c.l.b16 %v1379
  %v1668 = vunpack.c.l.b16 %v1380
  %v1669 = vunpack.c.l.b16 %v1381
  %v1670 = vunpack.c.l.b16 %v1382
  %v1671 = vunpack.c.l.b16 %v1383
  %v1672 = vunpack.c.l.b16 %v1384
  %v1673 = vunpack.c.l.b16 %v1385
  %v1674 = vunpack.c.l.b16 %v1386
  %v1675 = vunpack.c.l.b16 %v1387
  %v1676 = vpack.c.b16 %v1533, %v1532
  %v1677 = vpack.c.b16 %v1535, %v1534
  %v1678 = vpack.c.b16 %v1537, %v1536
  %v1679 = vpack.c.b16 %v1539, %v1538
  %v1680 = vpack.c.b16 %v1541, %v1540
  %v1681 = vpack.c.b16 %v1543, %v1542
  %v1682 = vpack.c.b16 %v1545, %v1544
  %v1683 = vpack.c.b16 %v1547, %v1546
  %v1684 = vpack.c.b16 %v1549, %v1548
  %v1685 = vpack.c.b16 %v1551, %v1550
  %v1686 = vpack.c.b16 %v1553, %v1552
  %v1687 = vpack.c.b16 %v1555, %v1554
  %v1688 = vpack.c.b16 %v1557, %v1556
  %v1689 = vpack.c.b16 %v1559, %v1558
  %v1690 = vpack.c.b16 %v1561, %v1560
  %v1691 = vpack.c.b16 %v1563, %v1562
  %v1692 = vpack.c.b16 %v1565, %v1564
  %v1693 = vpack.c.b16 %v1567, %v1566
  %v1694 = vpack.c.b16 %v1569, %v1568
  %v1695 = vpack.c.b16 %v1571, %v1570
  %v1696 = vpack.c.b16 %v1573, %v1572
  %v1697 = vpack.c.b16 %v1575, %v1574
  %v1698 = vpack.c.b16 %v1577, %v1576
  %v1699 = vpack.c.b16 %v1579, %v1578
  %v1700 = vpack.c.b16 %v1581, %v1580
  %v1701 = vpack.c.b16 %v1583, %v1582
  %v1702 = vpack.c.b16 %v1585, %v1584
  %v1703 = vpack.c.b16 %v1587, %v1586
  %v1704 = vpack.c.b16 %v1589, %v1588
  %v1705 = vpack.c.b16 %v1591, %v1590
  %v1706 = vpack.c.b16 %v1593, %v1592
  %v1707 = vpack.c.b16 %v1595, %v1594
  %v1708 = vpack.c.b16 %v1597, %v1596
  %v1709 = vpack.c.b16 %v1599, %v1598
  %v1710 = vpack.c.b16 %v1601, %v1600
  %v1711 = vpack.c.b16 %v1603, %v1602
  %v1712 = vpack.c.b16 %v1605, %v1604
  %v1713 = vpack.c.b16 %v1607, %v1606
  %v1714 = vpack.c.b16 %v1609, %v1608
  %v1715 = vpack.c.b16 %v1611, %v1610
  %v1716 = vpack.c.b16 %v1613, %v1612
  %v1717 = vpack.c.b16 %v1615, %v1614
  %v1718 = vpack.c.b16 %v1617, %v1616
  %v1719 = vpack.c.b16 %v1619, %v1618
  %v1720 = vpack.c.b16 %v1621, %v1620
  %v1721 = vpack.c.b16 %v1623, %v1622
  %v1722 = vpack.c.b16 %v1625, %v1624
  %v1723 = vpack.c.b16 %v1627, %v1626
  %v1724 = vpack.c.b16 %v1629, %v1628
  %v1725 = vpack.c.b16 %v1631, %v1630
  %v1726 = vpack.c.b16 %v1633, %v1632
  %v1727 = vpack.c.b16 %v1635, %v1634
  %v1728 = vpack.c.b16 %v1637, %v1636
  %v1729 = vpack.c.b16 %v1639, %v1638
  %v1730 = vpack.c.b16 %v1641, %v1640
  %v1731 = vpack.c.b16 %v1643, %v1642
  %v1732 = vpack.c.b16 %v1645, %v1644
  %v1733 = vpack.c.b16 %v1647, %v1646
  %v1734 = vpack.c.b16 %v1649, %v1648
  %v1735 = vpack.c.b16 %v1651, %v1650
  %v1736 = vpack.c.b16 %v1653, %v1652
  %v1737 = vpack.c.b16 %v1655, %v1654
  %v1738 = vpack.c.b16 %v1657, %v1656
  %v1739 = vpack.c.b16 %v1659, %v1658
  %v1740 = vpack.c.b16 %v1661, %v1660
  %v1741 = vpack.c.b16 %v1663, %v1662
  %v1742 = vpack.c.b16 %v1665, %v1664
  %v1743 = vpack.c.b16 %v1667, %v1666
  %v1744 = vpack.c.b16 %v1669, %v1668
  %v1745 = vpack.c.b16 %v1671, %v1670
  %v1746 = vpack.c.b16 %v1673, %v1672
  %v1747 = vpack.c.b16 %v1675, %v1674
  %1820 = vmatprep.subr.bf16.mxu0 0
  %1821 = vmatpush1.bf16.msra.mxu0 %v1683
  %1822 = vmatprep.subr.bf16.mxu0 0
  %1823 = vmatpush1.bf16.msra.mxu0 %v1682
  %1824 = vmatprep.subr.bf16.mxu0 0
  %1825 = vmatpush1.bf16.msra.mxu0 %v1681
  %1826 = vmatprep.subr.bf16.mxu0 0
  %1827 = vmatpush1.bf16.msra.mxu0 %v1680
  %1828 = vmatprep.subr.bf16.mxu0 0
  %1829 = vmatpush1.bf16.msra.mxu0 %v1679
  %1830 = vmatprep.subr.bf16.mxu0 0
  %1831 = vmatpush1.bf16.msra.mxu0 %v1678
  %1832 = vmatprep.subr.bf16.mxu0 0
  %1833 = vmatpush1.bf16.msra.mxu0 %v1677
  %1834 = vmatprep.subr.bf16.mxu0 0
  %1835 = vmatpush1.bf16.msra.mxu0 %v1676
  %1836 = vmatprep.subr.bf16.mxu0 0
  %1837 = vmatpush2.bf16.msra.mxu0 %v1691
  %1838 = vmatprep.subr.bf16.mxu0 0
  %1839 = vmatpush2.bf16.msra.mxu0 %v1690
  %1840 = vmatprep.subr.bf16.mxu0 0
  %1841 = vmatpush2.bf16.msra.mxu0 %v1689
  %1842 = vmatprep.subr.bf16.mxu0 0
  %1843 = vmatpush2.bf16.msra.mxu0 %v1688
  %1844 = vmatprep.subr.bf16.mxu0 0
  %1845 = vmatpush2.bf16.msra.mxu0 %v1687
  %1846 = vmatprep.subr.bf16.mxu0 0
  %1847 = vmatpush2.bf16.msra.mxu0 %v1686
  %1848 = vmatprep.subr.bf16.mxu0 0
  %1849 = vmatpush2.bf16.msra.mxu0 %v1685
  %1850 = vmatprep.subr.bf16.mxu0 0
  %1851 = vmatpush2.bf16.msra.mxu0 %v1684
  %1852 = vmatprep.mubr.bf16.mxu0 %v940
  %1853 = vmatmul.mubr.bf16.gmra.mxu0 %v892
  %v1854 = vpop.f32.mrf.mxu0
  %v1855 = vadd.f32 0.0, %v1854
  %v1856 = vpop.f32.mrf.mxu0
  %v1857 = vpop.f32.mrf.mxu0
  %v1858 = vadd.f32 0.0, %v1857
  %v1859 = vpop.f32.mrf.mxu0
  %1860 = vmatprep.mubr.bf16.mxu0 %v941
  %1861 = vmatmul.mubr.bf16.gmra.mxu0 %v893
  %v1862 = vpop.f32.mrf.mxu0
  %v1863 = vadd.f32 0.0, %v1862
  %v1864 = vpop.f32.mrf.mxu0
  %v1865 = vpop.f32.mrf.mxu0
  %v1866 = vadd.f32 0.0, %v1865
  %v1867 = vpop.f32.mrf.mxu0
  %1868 = vmatprep.mubr.bf16.mxu0 %v942
  %1869 = vmatmul.mubr.bf16.gmra.mxu0 %v894
  %v1870 = vpop.f32.mrf.mxu0
  %v1871 = vadd.f32 0.0, %v1870
  %v1872 = vpop.f32.mrf.mxu0
  %v1873 = vpop.f32.mrf.mxu0
  %v1874 = vadd.f32 0.0, %v1873
  %v1875 = vpop.f32.mrf.mxu0
  %1876 = vmatprep.mubr.bf16.mxu0 %v943
  %1877 = vmatmul.mubr.bf16.gmra.mxu0 %v895
  %v1878 = vpop.f32.mrf.mxu0
  %v1879 = vadd.f32 0.0, %v1878
  %v1880 = vpop.f32.mrf.mxu0
  %v1881 = vpop.f32.mrf.mxu0
  %v1882 = vadd.f32 0.0, %v1881
  %v1883 = vpop.f32.mrf.mxu0
  %1884 = vmatprep.mubr.bf16.mxu0 %v944
  %1885 = vmatmul.mubr.bf16.gmra.mxu0 %v896
  %v1886 = vpop.f32.mrf.mxu0
  %v1887 = vadd.f32 0.0, %v1886
  %v1888 = vpop.f32.mrf.mxu0
  %v1889 = vpop.f32.mrf.mxu0
  %v1890 = vadd.f32 0.0, %v1889
  %v1891 = vpop.f32.mrf.mxu0
  %1892 = vmatprep.mubr.bf16.mxu0 %v945
  %1893 = vmatmul.mubr.bf16.gmra.mxu0 %v897
  %v1894 = vpop.f32.mrf.mxu0
  %v1895 = vadd.f32 0.0, %v1894
  %v1896 = vpop.f32.mrf.mxu0
  %v1897 = vpop.f32.mrf.mxu0
  %v1898 = vadd.f32 0.0, %v1897
  %v1899 = vpop.f32.mrf.mxu0
  %1900 = vmatprep.mubr.bf16.mxu0 %v946
  %1901 = vmatmul.mubr.bf16.gmra.mxu0 %v898
  %v1902 = vpop.f32.mrf.mxu0
  %v1903 = vadd.f32 0.0, %v1902
  %v1904 = vpop.f32.mrf.mxu0
  %v1905 = vpop.f32.mrf.mxu0
  %v1906 = vadd.f32 0.0, %v1905
  %v1907 = vpop.f32.mrf.mxu0
  %1908 = vmatprep.mubr.bf16.mxu0 %v947
  %1909 = vmatmul.mubr.bf16.gmra.mxu0 %v899
  %v1910 = vpop.f32.mrf.mxu0
  %v1911 = vadd.f32 0.0, %v1910
  %v1912 = vpop.f32.mrf.mxu0
  %v1913 = vpop.f32.mrf.mxu0
  %v1914 = vadd.f32 0.0, %v1913
  %v1915 = vpop.f32.mrf.mxu0
  %1916 = vdwg.mxu0
  %1917 = vmatprep.subr.bf16.mxu0 0
  %1918 = vmatpush1.bf16.msra.mxu0 %v1699
  %1919 = vmatprep.subr.bf16.mxu0 0
  %1920 = vmatpush1.bf16.msra.mxu0 %v1698
  %1921 = vmatprep.subr.bf16.mxu0 0
  %1922 = vmatpush1.bf16.msra.mxu0 %v1697
  %1923 = vmatprep.subr.bf16.mxu0 0
  %1924 = vmatpush1.bf16.msra.mxu0 %v1696
  %1925 = vmatprep.subr.bf16.mxu0 0
  %1926 = vmatpush1.bf16.msra.mxu0 %v1695
  %1927 = vmatprep.subr.bf16.mxu0 0
  %1928 = vmatpush1.bf16.msra.mxu0 %v1694
  %1929 = vmatprep.subr.bf16.mxu0 0
  %1930 = vmatpush1.bf16.msra.mxu0 %v1693
  %1931 = vmatprep.subr.bf16.mxu0 0
  %1932 = vmatpush1.bf16.msra.mxu0 %v1692
  %1933 = vmatprep.subr.bf16.mxu0 0
  %1934 = vmatpush2.bf16.msra.mxu0 %v1707
  %1935 = vmatprep.subr.bf16.mxu0 0
  %1936 = vmatpush2.bf16.msra.mxu0 %v1706
  %1937 = vmatprep.subr.bf16.mxu0 0
  %1938 = vmatpush2.bf16.msra.mxu0 %v1705
  %1939 = vmatprep.subr.bf16.mxu0 0
  %1940 = vmatpush2.bf16.msra.mxu0 %v1704
  %1941 = vmatprep.subr.bf16.mxu0 0
  %1942 = vmatpush2.bf16.msra.mxu0 %v1703
  %1943 = vmatprep.subr.bf16.mxu0 0
  %1944 = vmatpush2.bf16.msra.mxu0 %v1702
  %1945 = vmatprep.subr.bf16.mxu0 0
  %1946 = vmatpush2.bf16.msra.mxu0 %v1701
  %1947 = vmatprep.subr.bf16.mxu0 0
  %1948 = vmatpush2.bf16.msra.mxu0 %v1700
  %1949 = vmatprep.mubr.bf16.mxu0 %v1020
  %1950 = vmatmul.mubr.bf16.gmra.mxu0 %v972
  %v1951 = vpop.f32.mrf.mxu0
  %v1952 = vadd.f32 %v1855, %v1951
  %v1953 = vpop.f32.mrf.mxu0
  %v1954 = vpop.f32.mrf.mxu0
  %v1955 = vadd.f32 %v1858, %v1954
  %v1956 = vpop.f32.mrf.mxu0
  %1957 = vmatprep.mubr.bf16.mxu0 %v1021
  %1958 = vmatmul.mubr.bf16.gmra.mxu0 %v973
  %v1959 = vpop.f32.mrf.mxu0
  %v1960 = vadd.f32 %v1863, %v1959
  %v1961 = vpop.f32.mrf.mxu0
  %v1962 = vpop.f32.mrf.mxu0
  %v1963 = vadd.f32 %v1866, %v1962
  %v1964 = vpop.f32.mrf.mxu0
  %1965 = vmatprep.mubr.bf16.mxu0 %v1022
  %1966 = vmatmul.mubr.bf16.gmra.mxu0 %v974
  %v1967 = vpop.f32.mrf.mxu0
  %v1968 = vadd.f32 %v1871, %v1967
  %v1969 = vpop.f32.mrf.mxu0
  %v1970 = vpop.f32.mrf.mxu0
  %v1971 = vadd.f32 %v1874, %v1970
  %v1972 = vpop.f32.mrf.mxu0
  %1973 = vmatprep.mubr.bf16.mxu0 %v1023
  %1974 = vmatmul.mubr.bf16.gmra.mxu0 %v975
  %v1975 = vpop.f32.mrf.mxu0
  %v1976 = vadd.f32 %v1879, %v1975
  %v1977 = vpop.f32.mrf.mxu0
  %v1978 = vpop.f32.mrf.mxu0
  %v1979 = vadd.f32 %v1882, %v1978
  %v1980 = vpop.f32.mrf.mxu0
  %1981 = vmatprep.mubr.bf16.mxu0 %v1024
  %1982 = vmatmul.mubr.bf16.gmra.mxu0 %v976
  %v1983 = vpop.f32.mrf.mxu0
  %v1984 = vadd.f32 %v1887, %v1983
  %v1985 = vpop.f32.mrf.mxu0
  %v1986 = vpop.f32.mrf.mxu0
  %v1987 = vadd.f32 %v1890, %v1986
  %v1988 = vpop.f32.mrf.mxu0
  %1989 = vmatprep.mubr.bf16.mxu0 %v1025
  %1990 = vmatmul.mubr.bf16.gmra.mxu0 %v977
  %v1991 = vpop.f32.mrf.mxu0
  %v1992 = vadd.f32 %v1895, %v1991
  %v1993 = vpop.f32.mrf.mxu0
  %v1994 = vpop.f32.mrf.mxu0
  %v1995 = vadd.f32 %v1898, %v1994
  %v1996 = vpop.f32.mrf.mxu0
  %1997 = vmatprep.mubr.bf16.mxu0 %v1026
  %1998 = vmatmul.mubr.bf16.gmra.mxu0 %v978
  %v1999 = vpop.f32.mrf.mxu0
  %v2000 = vadd.f32 %v1903, %v1999
  %v2001 = vpop.f32.mrf.mxu0
  %v2002 = vpop.f32.mrf.mxu0
  %v2003 = vadd.f32 %v1906, %v2002
  %v2004 = vpop.f32.mrf.mxu0
  %2005 = vmatprep.mubr.bf16.mxu0 %v1027
  %2006 = vmatmul.mubr.bf16.gmra.mxu0 %v979
  %v2007 = vpop.f32.mrf.mxu0
  %v2008 = vadd.f32 %v1911, %v2007
  %v2009 = vpop.f32.mrf.mxu0
  %v2010 = vpop.f32.mrf.mxu0
  %v2011 = vadd.f32 %v1914, %v2010
  %v2012 = vpop.f32.mrf.mxu0
  %2013 = vdwg.mxu0
  %2014 = vmatprep.subr.bf16.mxu0 0
  %2015 = vmatpush1.bf16.msra.mxu0 %v1715
  %2016 = vmatprep.subr.bf16.mxu0 0
  %2017 = vmatpush1.bf16.msra.mxu0 %v1714
  %2018 = vmatprep.subr.bf16.mxu0 0
  %2019 = vmatpush1.bf16.msra.mxu0 %v1713
  %2020 = vmatprep.subr.bf16.mxu0 0
  %2021 = vmatpush1.bf16.msra.mxu0 %v1712
  %2022 = vmatprep.subr.bf16.mxu0 0
  %2023 = vmatpush1.bf16.msra.mxu0 %v1711
  %2024 = vmatprep.subr.bf16.mxu0 0
  %2025 = vmatpush1.bf16.msra.mxu0 %v1710
  %2026 = vmatprep.subr.bf16.mxu0 0
  %2027 = vmatpush1.bf16.msra.mxu0 %v1709
  %2028 = vmatprep.subr.bf16.mxu0 0
  %2029 = vmatpush1.bf16.msra.mxu0 %v1708
  %2030 = vmatprep.subr.bf16.mxu0 0
  %2031 = vmatpush2.bf16.msra.mxu0 %v1723
  %2032 = vmatprep.subr.bf16.mxu0 0
  %2033 = vmatpush2.bf16.msra.mxu0 %v1722
  %2034 = vmatprep.subr.bf16.mxu0 0
  %2035 = vmatpush2.bf16.msra.mxu0 %v1721
  %2036 = vmatprep.subr.bf16.mxu0 0
  %2037 = vmatpush2.bf16.msra.mxu0 %v1720
  %2038 = vmatprep.subr.bf16.mxu0 0
  %2039 = vmatpush2.bf16.msra.mxu0 %v1719
  %2040 = vmatprep.subr.bf16.mxu0 0
  %2041 = vmatpush2.bf16.msra.mxu0 %v1718
  %2042 = vmatprep.subr.bf16.mxu0 0
  %2043 = vmatpush2.bf16.msra.mxu0 %v1717
  %2044 = vmatprep.subr.bf16.mxu0 0
  %2045 = vmatpush2.bf16.msra.mxu0 %v1716
  %2046 = vmatprep.mubr.bf16.mxu0 %v1100
  %2047 = vmatmul.mubr.bf16.gmra.mxu0 %v1068
  %v2048 = vpop.f32.mrf.mxu0
  %v2049 = vadd.f32 %v1952, %v2048
  %v2050 = vpop.f32.mrf.mxu0
  %v2051 = vpop.f32.mrf.mxu0
  %v2052 = vadd.f32 %v1955, %v2051
  %v2053 = vpop.f32.mrf.mxu0
  %2054 = vmatprep.mubr.bf16.mxu0 %v1101
  %2055 = vmatmul.mubr.bf16.gmra.mxu0 %v1069
  %v2056 = vpop.f32.mrf.mxu0
  %v2057 = vadd.f32 %v1960, %v2056
  %v2058 = vpop.f32.mrf.mxu0
  %v2059 = vpop.f32.mrf.mxu0
  %v2060 = vadd.f32 %v1963, %v2059
  %v2061 = vpop.f32.mrf.mxu0
  %2062 = vmatprep.mubr.bf16.mxu0 %v1102
  %2063 = vmatmul.mubr.bf16.gmra.mxu0 %v1070
  %v2064 = vpop.f32.mrf.mxu0
  %v2065 = vadd.f32 %v1968, %v2064
  %v2066 = vpop.f32.mrf.mxu0
  %v2067 = vpop.f32.mrf.mxu0
  %v2068 = vadd.f32 %v1971, %v2067
  %v2069 = vpop.f32.mrf.mxu0
  %2070 = vmatprep.mubr.bf16.mxu0 %v1103
  %2071 = vmatmul.mubr.bf16.gmra.mxu0 %v1071
  %v2072 = vpop.f32.mrf.mxu0
  %v2073 = vadd.f32 %v1976, %v2072
  %v2074 = vpop.f32.mrf.mxu0
  %v2075 = vpop.f32.mrf.mxu0
  %v2076 = vadd.f32 %v1979, %v2075
  %v2077 = vpop.f32.mrf.mxu0
  %2078 = vmatprep.mubr.bf16.mxu0 %v1104
  %2079 = vmatmul.mubr.bf16.gmra.mxu0 %v1072
  %v2080 = vpop.f32.mrf.mxu0
  %v2081 = vadd.f32 %v1984, %v2080
  %v2082 = vpop.f32.mrf.mxu0
  %v2083 = vpop.f32.mrf.mxu0
  %v2084 = vadd.f32 %v1987, %v2083
  %v2085 = vpop.f32.mrf.mxu0
  %2086 = vmatprep.mubr.bf16.mxu0 %v1105
  %2087 = vmatmul.mubr.bf16.gmra.mxu0 %v1073
  %v2088 = vpop.f32.mrf.mxu0
  %v2089 = vadd.f32 %v1992, %v2088
  %v2090 = vpop.f32.mrf.mxu0
  %v2091 = vpop.f32.mrf.mxu0
  %v2092 = vadd.f32 %v1995, %v2091
  %v2093 = vpop.f32.mrf.mxu0
  %2094 = vmatprep.mubr.bf16.mxu0 %v1106
  %2095 = vmatmul.mubr.bf16.gmra.mxu0 %v1074
  %v2096 = vpop.f32.mrf.mxu0
  %v2097 = vadd.f32 %v2000, %v2096
  %v2098 = vpop.f32.mrf.mxu0
  %v2099 = vpop.f32.mrf.mxu0
  %v2100 = vadd.f32 %v2003, %v2099
  %v2101 = vpop.f32.mrf.mxu0
  %2102 = vmatprep.mubr.bf16.mxu0 %v1107
  %2103 = vmatmul.mubr.bf16.gmra.mxu0 %v1075
  %v2104 = vpop.f32.mrf.mxu0
  %v2105 = vadd.f32 %v2008, %v2104
  %v2106 = vpop.f32.mrf.mxu0
  %v2107 = vpop.f32.mrf.mxu0
  %v2108 = vadd.f32 %v2011, %v2107
  %v2109 = vpop.f32.mrf.mxu0
  %2110 = vdwg.mxu0
  %2111 = vmatprep.subr.bf16.mxu0 0
  %2112 = vmatpush1.bf16.msra.mxu0 %v1731
  %2113 = vmatprep.subr.bf16.mxu0 0
  %2114 = vmatpush1.bf16.msra.mxu0 %v1730
  %2115 = vmatprep.subr.bf16.mxu0 0
  %2116 = vmatpush1.bf16.msra.mxu0 %v1729
  %2117 = vmatprep.subr.bf16.mxu0 0
  %2118 = vmatpush1.bf16.msra.mxu0 %v1728
  %2119 = vmatprep.subr.bf16.mxu0 0
  %2120 = vmatpush1.bf16.msra.mxu0 %v1727
  %2121 = vmatprep.subr.bf16.mxu0 0
  %2122 = vmatpush1.bf16.msra.mxu0 %v1726
  %2123 = vmatprep.subr.bf16.mxu0 0
  %2124 = vmatpush1.bf16.msra.mxu0 %v1725
  %2125 = vmatprep.subr.bf16.mxu0 0
  %2126 = vmatpush1.bf16.msra.mxu0 %v1724
  %2127 = vmatprep.subr.bf16.mxu0 0
  %2128 = vmatpush2.bf16.msra.mxu0 %v1739
  %2129 = vmatprep.subr.bf16.mxu0 0
  %2130 = vmatpush2.bf16.msra.mxu0 %v1738
  %2131 = vmatprep.subr.bf16.mxu0 0
  %2132 = vmatpush2.bf16.msra.mxu0 %v1737
  %2133 = vmatprep.subr.bf16.mxu0 0
  %2134 = vmatpush2.bf16.msra.mxu0 %v1736
  %2135 = vmatprep.subr.bf16.mxu0 0
  %2136 = vmatpush2.bf16.msra.mxu0 %v1735
  %2137 = vmatprep.subr.bf16.mxu0 0
  %2138 = vmatpush2.bf16.msra.mxu0 %v1734
  %2139 = vmatprep.subr.bf16.mxu0 0
  %2140 = vmatpush2.bf16.msra.mxu0 %v1733
  %2141 = vmatprep.subr.bf16.mxu0 0
  %2142 = vmatpush2.bf16.msra.mxu0 %v1732
  %2143 = vmatprep.mubr.bf16.mxu0 %v1196
  %2144 = vmatmul.mubr.bf16.gmra.mxu0 %v1148
  %v2145 = vpop.f32.mrf.mxu0
  %v2146 = vadd.f32 %v2049, %v2145
  %v2147 = vpop.f32.mrf.mxu0
  %v2148 = vpop.f32.mrf.mxu0
  %v2149 = vadd.f32 %v2052, %v2148
  %v2150 = vpop.f32.mrf.mxu0
  %2151 = vmatprep.mubr.bf16.mxu0 %v1197
  %2152 = vmatmul.mubr.bf16.gmra.mxu0 %v1149
  %v2153 = vpop.f32.mrf.mxu0
  %v2154 = vadd.f32 %v2057, %v2153
  %v2155 = vpop.f32.mrf.mxu0
  %v2156 = vpop.f32.mrf.mxu0
  %v2157 = vadd.f32 %v2060, %v2156
  %v2158 = vpop.f32.mrf.mxu0
  %2159 = vmatprep.mubr.bf16.mxu0 %v1198
  %2160 = vmatmul.mubr.bf16.gmra.mxu0 %v1150
  %v2161 = vpop.f32.mrf.mxu0
  %v2162 = vadd.f32 %v2065, %v2161
  %v2163 = vpop.f32.mrf.mxu0
  %v2164 = vpop.f32.mrf.mxu0
  %v2165 = vadd.f32 %v2068, %v2164
  %v2166 = vpop.f32.mrf.mxu0
  %2167 = vmatprep.mubr.bf16.mxu0 %v1199
  %2168 = vmatmul.mubr.bf16.gmra.mxu0 %v1151
  %v2169 = vpop.f32.mrf.mxu0
  %v2170 = vadd.f32 %v2073, %v2169
  %v2171 = vpop.f32.mrf.mxu0
  %v2172 = vpop.f32.mrf.mxu0
  %v2173 = vadd.f32 %v2076, %v2172
  %v2174 = vpop.f32.mrf.mxu0
  %2175 = vmatprep.mubr.bf16.mxu0 %v1200
  %2176 = vmatmul.mubr.bf16.gmra.mxu0 %v1152
  %v2177 = vpop.f32.mrf.mxu0
  %v2178 = vadd.f32 %v2081, %v2177
  %v2179 = vpop.f32.mrf.mxu0
  %v2180 = vpop.f32.mrf.mxu0
  %v2181 = vadd.f32 %v2084, %v2180
  %v2182 = vpop.f32.mrf.mxu0
  %2183 = vmatprep.mubr.bf16.mxu0 %v1201
  %2184 = vmatmul.mubr.bf16.gmra.mxu0 %v1153
  %v2185 = vpop.f32.mrf.mxu0
  %v2186 = vadd.f32 %v2089, %v2185
  %v2187 = vpop.f32.mrf.mxu0
  %v2188 = vpop.f32.mrf.mxu0
  %v2189 = vadd.f32 %v2092, %v2188
  %v2190 = vpop.f32.mrf.mxu0
  %2191 = vmatprep.mubr.bf16.mxu0 %v1202
  %2192 = vmatmul.mubr.bf16.gmra.mxu0 %v1154
  %v2193 = vpop.f32.mrf.mxu0
  %v2194 = vadd.f32 %v2097, %v2193
  %v2195 = vpop.f32.mrf.mxu0
  %v2196 = vpop.f32.mrf.mxu0
  %v2197 = vadd.f32 %v2100, %v2196
  %v2198 = vpop.f32.mrf.mxu0
  %2199 = vmatprep.mubr.bf16.mxu0 %v1203
  %2200 = vmatmul.mubr.bf16.gmra.mxu0 %v1155
  %v2201 = vpop.f32.mrf.mxu0
  %v2202 = vadd.f32 %v2105, %v2201
  %v2203 = vpop.f32.mrf.mxu0
  %v2204 = vpop.f32.mrf.mxu0
  %v2205 = vadd.f32 %v2108, %v2204
  %v2206 = vpop.f32.mrf.mxu0
  %2207 = vdwg.mxu0
  %2208 = vmatprep.subr.bf16.mxu0 0
  %2209 = vmatpush1.bf16.msra.mxu0 %v1747
  %2210 = vmatprep.subr.bf16.mxu0 0
  %2211 = vmatpush1.bf16.msra.mxu0 %v1746
  %2212 = vmatprep.subr.bf16.mxu0 0
  %2213 = vmatpush1.bf16.msra.mxu0 %v1745
  %2214 = vmatprep.subr.bf16.mxu0 0
  %2215 = vmatpush1.bf16.msra.mxu0 %v1744
  %2216 = vmatprep.subr.bf16.mxu0 0
  %2217 = vmatpush1.bf16.msra.mxu0 %v1743
  %2218 = vmatprep.subr.bf16.mxu0 0
  %2219 = vmatpush1.bf16.msra.mxu0 %v1742
  %2220 = vmatprep.subr.bf16.mxu0 0
  %2221 = vmatpush1.bf16.msra.mxu0 %v1741
  %2222 = vmatprep.subr.bf16.mxu0 0
  %2223 = vmatpush1.bf16.msra.mxu0 %v1740
  %2224 = vmatprep.subr.bf16.mxu0 0
  %2225 = vmatpush2.bf16.msra.mxu0 0
  %2226 = vmatprep.subr.bf16.mxu0 0
  %2227 = vmatpush2.bf16.msra.mxu0 0
  %2228 = vmatprep.subr.bf16.mxu0 0
  %2229 = vmatpush2.bf16.msra.mxu0 0
  %2230 = vmatprep.subr.bf16.mxu0 0
  %2231 = vmatpush2.bf16.msra.mxu0 0
  %2232 = vmatprep.subr.bf16.mxu0 0
  %2233 = vmatpush2.bf16.msra.mxu0 0
  %2234 = vmatprep.subr.bf16.mxu0 0
  %2235 = vmatpush2.bf16.msra.mxu0 0
  %2236 = vmatprep.subr.bf16.mxu0 0
  %2237 = vmatpush2.bf16.msra.mxu0 0
  %2238 = vmatprep.subr.bf16.mxu0 0
  %2239 = vmatpush2.bf16.msra.mxu0 0
  %2240 = vmatprep.mubr.bf16.mxu0 0
  %2241 = vmatmul.mubr.bf16.gmra.mxu0 %v1228
  %v2242 = vpop.f32.mrf.mxu0
  %v2243 = vadd.f32 %v2146, %v2242
  %v2244 = vpop.f32.mrf.mxu0
  %v2245 = vpop.f32.mrf.mxu0
  %v2246 = vadd.f32 %v2149, %v2245
  %v2247 = vpop.f32.mrf.mxu0
  %2248 = vmatprep.mubr.bf16.mxu0 0
  %2249 = vmatmul.mubr.bf16.gmra.mxu0 %v1229
  %v2250 = vpop.f32.mrf.mxu0
  %v2251 = vadd.f32 %v2154, %v2250
  %v2252 = vpop.f32.mrf.mxu0
  %v2253 = vpop.f32.mrf.mxu0
  %v2254 = vadd.f32 %v2157, %v2253
  %v2255 = vpop.f32.mrf.mxu0
  %2256 = vmatprep.mubr.bf16.mxu0 0
  %2257 = vmatmul.mubr.bf16.gmra.mxu0 %v1230
  %v2258 = vpop.f32.mrf.mxu0
  %v2259 = vadd.f32 %v2162, %v2258
  %v2260 = vpop.f32.mrf.mxu0
  %v2261 = vpop.f32.mrf.mxu0
  %v2262 = vadd.f32 %v2165, %v2261
  %v2263 = vpop.f32.mrf.mxu0
  %2264 = vmatprep.mubr.bf16.mxu0 0
  %2265 = vmatmul.mubr.bf16.gmra.mxu0 %v1231
  %v2266 = vpop.f32.mrf.mxu0
  %v2267 = vadd.f32 %v2170, %v2266
  %v2268 = vpop.f32.mrf.mxu0
  %v2269 = vpop.f32.mrf.mxu0
  %v2270 = vadd.f32 %v2173, %v2269
  %v2271 = vpop.f32.mrf.mxu0
  %2272 = vmatprep.mubr.bf16.mxu0 0
  %2273 = vmatmul.mubr.bf16.gmra.mxu0 %v1232
  %v2274 = vpop.f32.mrf.mxu0
  %v2275 = vadd.f32 %v2178, %v2274
  %v2276 = vpop.f32.mrf.mxu0
  %v2277 = vpop.f32.mrf.mxu0
  %v2278 = vadd.f32 %v2181, %v2277
  %v2279 = vpop.f32.mrf.mxu0
  %2280 = vmatprep.mubr.bf16.mxu0 0
  %2281 = vmatmul.mubr.bf16.gmra.mxu0 %v1233
  %v2282 = vpop.f32.mrf.mxu0
  %v2283 = vadd.f32 %v2186, %v2282
  %v2284 = vpop.f32.mrf.mxu0
  %v2285 = vpop.f32.mrf.mxu0
  %v2286 = vadd.f32 %v2189, %v2285
  %v2287 = vpop.f32.mrf.mxu0
  %2288 = vmatprep.mubr.bf16.mxu0 0
  %2289 = vmatmul.mubr.bf16.gmra.mxu0 %v1234
  %v2290 = vpop.f32.mrf.mxu0
  %v2291 = vadd.f32 %v2194, %v2290
  %v2292 = vpop.f32.mrf.mxu0
  %v2293 = vpop.f32.mrf.mxu0
  %v2294 = vadd.f32 %v2197, %v2293
  %v2295 = vpop.f32.mrf.mxu0
  %2296 = vmatprep.mubr.bf16.mxu0 0
  %2297 = vmatmul.mubr.bf16.gmra.mxu0 %v1235
  %v2298 = vpop.f32.mrf.mxu0
  %v2299 = vadd.f32 %v2202, %v2298
  %v2300 = vpop.f32.mrf.mxu0
  %v2301 = vpop.f32.mrf.mxu0
  %v2302 = vadd.f32 %v2205, %v2301
  %v2303 = vpop.f32.mrf.mxu0
  %2304 = vdwg.mxu0
  %v2305 = vadd.f32 %v2243, %v2246
  %v2306 = vadd.f32 %v2305, %v2251
  %v2307 = vadd.f32 %v2306, %v2254
  %v2308 = vadd.f32 %v2307, %v2259
  %v2309 = vadd.f32 %v2308, %v2262
  %v2310 = vadd.f32 %v2309, %v2267
  %v2311 = vadd.f32 %v2310, %v2270
  %v2312 = vadd.f32 %v2311, %v2275
  %v2313 = vadd.f32 %v2312, %v2278
  %v2314 = vadd.f32 %v2313, %v2283
  %v2315 = vadd.f32 %v2314, %v2286
  %v2316 = vadd.f32 %v2315, %v2291
  %v2317 = vadd.f32 %v2316, %v2294
  %v2318 = vadd.f32 %v2317, %v2299
  %v2319 = vadd.f32 %v2318, %v2302
  %v2320 = vrot.slane %v2319, 4
  %v2321 = vadd.f32 %v2319, %v2320
  %v2322 = vrot.slane %v2321, 2
  %v2323 = vadd.f32 %v2321, %v2322
  %v2324 = vrot.slane %v2323, 1
  %v2325 = vadd.f32 %v2323, %v2324
  %v2326 = vrcp.pop 128.0
  %v2327 = vmul.f32 %v2325, %v2326
  %v2328 = vmul.f32 %v2243, %v2243
  %v2329 = vmul.f32 %v2246, %v2246
  %v2330 = vmul.f32 %v2251, %v2251
  %v2331 = vmul.f32 %v2254, %v2254
  %v2332 = vmul.f32 %v2259, %v2259
  %v2333 = vmul.f32 %v2262, %v2262
  %v2334 = vmul.f32 %v2267, %v2267
  %v2335 = vmul.f32 %v2270, %v2270
  %v2336 = vmul.f32 %v2275, %v2275
  %v2337 = vmul.f32 %v2278, %v2278
  %v2338 = vmul.f32 %v2283, %v2283
  %v2339 = vmul.f32 %v2286, %v2286
  %v2340 = vmul.f32 %v2291, %v2291
  %v2341 = vmul.f32 %v2294, %v2294
  %v2342 = vmul.f32 %v2299, %v2299
  %v2343 = vmul.f32 %v2302, %v2302
  %v2344 = vadd.f32 %v2328, %v2329
  %v2345 = vadd.f32 %v2344, %v2330
  %v2346 = vadd.f32 %v2345, %v2331
  %v2347 = vadd.f32 %v2346, %v2332
  %v2348 = vadd.f32 %v2347, %v2333
  %v2349 = vadd.f32 %v2348, %v2334
  %v2350 = vadd.f32 %v2349, %v2335
  %v2351 = vadd.f32 %v2350, %v2336
  %v2352 = vadd.f32 %v2351, %v2337
  %v2353 = vadd.f32 %v2352, %v2338
  %v2354 = vadd.f32 %v2353, %v2339
  %v2355 = vadd.f32 %v2354, %v2340
  %v2356 = vadd.f32 %v2355, %v2341
  %v2357 = vadd.f32 %v2356, %v2342
  %v2358 = vadd.f32 %v2357, %v2343
  %v2359 = vrot.slane %v2358, 4
  %v2360 = vadd.f32 %v2358, %v2359
  %v2361 = vrot.slane %v2360, 2
  %v2362 = vadd.f32 %v2360, %v2361
  %v2363 = vrot.slane %v2362, 1
  %v2364 = vadd.f32 %v2362, %v2363
  %v2365 = vmul.f32 %v2364, %v2326
  %v2366 = vmul.f32 %v2327, %v2327
  %v2367 = vsub.f32 %v2365, %v2366
  %v2368 = vsub.f32 %v2243, %v2327
  %v2369 = vsub.f32 %v2246, %v2327
  %v2370 = vsub.f32 %v2251, %v2327
  %v2371 = vsub.f32 %v2254, %v2327
  %v2372 = vsub.f32 %v2259, %v2327
  %v2373 = vsub.f32 %v2262, %v2327
  %v2374 = vsub.f32 %v2267, %v2327
  %v2375 = vsub.f32 %v2270, %v2327
  %v2376 = vsub.f32 %v2275, %v2327
  %v2377 = vsub.f32 %v2278, %v2327
  %v2378 = vsub.f32 %v2283, %v2327
  %v2379 = vsub.f32 %v2286, %v2327
  %v2380 = vsub.f32 %v2291, %v2327
  %v2381 = vsub.f32 %v2294, %v2327
  %v2382 = vsub.f32 %v2299, %v2327
  %v2383 = vsub.f32 %v2302, %v2327
  %v2384 = vld [vmem:[%s3] sm:$0x1]
  %v2385 = vadd.f32 %v2367, 1e-05
  %v2386 = vrsqrt.pop %v2385
  %v2387 = vmul.f32 %v2384, %v2386
  %v2389 = vlaneseq
  %v2390 = vshrl.u32 %v2389, 7
  %v2391 = vsub.s32 0, %v2390
  %v2392 = vrot.slane %v2387, %v2391
  %v2394 = vmul.f32 %v2368, %v2392
  %v2395 = vmul.f32 %v2369, %v2392
  %v2396 = vmul.f32 %v2370, %v2392
  %v2397 = vmul.f32 %v2371, %v2392
  %v2398 = vmul.f32 %v2372, %v2392
  %v2399 = vmul.f32 %v2373, %v2392
  %v2400 = vmul.f32 %v2374, %v2392
  %v2401 = vmul.f32 %v2375, %v2392
  %v2402 = vmul.f32 %v2376, %v2392
  %v2403 = vmul.f32 %v2377, %v2392
  %v2404 = vmul.f32 %v2378, %v2392
  %v2405 = vmul.f32 %v2379, %v2392
  %v2406 = vmul.f32 %v2380, %v2392
  %v2407 = vmul.f32 %v2381, %v2392
  %v2408 = vmul.f32 %v2382, %v2392
  %v2409 = vmul.f32 %v2383, %v2392
  %v2410 = vld [vmem:[%s4] sm:$0x1]
  %v2412 = vlaneseq
  %v2413 = vshrl.u32 %v2412, 7
  %v2414 = vsub.s32 0, %v2413
  %v2415 = vrot.slane %v2410, %v2414
  %v2417 = vadd.f32 %v2394, %v2415
  %v2418 = vadd.f32 %v2395, %v2415
  %v2419 = vadd.f32 %v2396, %v2415
  %v2420 = vadd.f32 %v2397, %v2415
  %v2421 = vadd.f32 %v2398, %v2415
  %v2422 = vadd.f32 %v2399, %v2415
  %v2423 = vadd.f32 %v2400, %v2415
  %v2424 = vadd.f32 %v2401, %v2415
  %v2425 = vadd.f32 %v2402, %v2415
  %v2426 = vadd.f32 %v2403, %v2415
  %v2427 = vadd.f32 %v2404, %v2415
  %v2428 = vadd.f32 %v2405, %v2415
  %v2429 = vadd.f32 %v2406, %v2415
  %v2430 = vadd.f32 %v2407, %v2415
  %v2431 = vadd.f32 %v2408, %v2415
  %v2432 = vadd.f32 %v2409, %v2415
  %v2433 = vmax.f32 %v2417, 0.0
  %v2434 = vmax.f32 %v2418, 0.0
  %v2435 = vmax.f32 %v2419, 0.0
  %v2436 = vmax.f32 %v2420, 0.0
  %v2437 = vmax.f32 %v2421, 0.0
  %v2438 = vmax.f32 %v2422, 0.0
  %v2439 = vmax.f32 %v2423, 0.0
  %v2440 = vmax.f32 %v2424, 0.0
  %v2441 = vmax.f32 %v2425, 0.0
  %v2442 = vmax.f32 %v2426, 0.0
  %v2443 = vmax.f32 %v2427, 0.0
  %v2444 = vmax.f32 %v2428, 0.0
  %v2445 = vmax.f32 %v2429, 0.0
  %v2446 = vmax.f32 %v2430, 0.0
  %v2447 = vmax.f32 %v2431, 0.0
  %v2448 = vmax.f32 %v2432, 0.0
  %2449 = vst [vmem:[#allocation2] sm:$0xff] 0.0
  %2450 = vst [vmem:[#allocation2 + $0x8] sm:$0x3] 0.0
  %2451 = vst [vmem:[#allocation2 + $0xa0] sm:$0xff] 0.0
  %2452 = vst [vmem:[#allocation2 + $0xa8] sm:$0x3] 0.0
  %s2453 = scalar_lea.vmem [#allocation2], 144
  %2454 = vst [vmem:[%s2453] sm:$0xff] 0.0
  %2455 = vst [vmem:[%s2453 + $0x8] sm:$0x3] 0.0
  %2456 = vst [vmem:[%s2453 + $0xa0] sm:$0xff] 0.0
  %2457 = vst [vmem:[%s2453 + $0xa8] sm:$0x3] 0.0
  %s2458 = scalar_lea.vmem [#allocation2], 16
  %2459 = vst [vmem:[%s2458] sm:$0x1] 0.0
  %2460 = vst [vmem:[%s2458 + $0x10] sm:$0x1] 0.0
  %2461 = vst [vmem:[%s2458 + $0x20] sm:$0x1] 0.0
  %2462 = vst [vmem:[%s2458 + $0x30] sm:$0x1] 0.0
  %2463 = vst [vmem:[%s2458 + $0x40] sm:$0x1] 0.0
  %2464 = vst [vmem:[%s2458 + $0x50] sm:$0x1] 0.0
  %2465 = vst [vmem:[%s2458 + $0x60] sm:$0x1] 0.0
  %2466 = vst [vmem:[%s2458 + $0x70] sm:$0x1] 0.0
  %2467 = vst [vmem:[%s2458 + $0xa0] sm:$0x1] 0.0
  %2468 = vst [vmem:[%s2458 + $0xb0] sm:$0x1] 0.0
  %2469 = vst [vmem:[%s2458 + $0xc0] sm:$0x1] 0.0
  %2470 = vst [vmem:[%s2458 + $0xd0] sm:$0x1] 0.0
  %2471 = vst [vmem:[%s2458 + $0xe0] sm:$0x1] 0.0
  %2472 = vst [vmem:[%s2458 + $0xf0] sm:$0x1] 0.0
  %2473 = vst [vmem:[%s2458 + $0x100] sm:$0x1] 0.0
  %2474 = vst [vmem:[%s2458 + $0x110] sm:$0x1] 0.0
  %2475 = vst [vmem:[%s2458 + $0x9] sm:$0x1] 0.0
  %2476 = vst [vmem:[%s2458 + $0x19] sm:$0x1] 0.0
  %2477 = vst [vmem:[%s2458 + $0x29] sm:$0x1] 0.0
  %2478 = vst [vmem:[%s2458 + $0x39] sm:$0x1] 0.0
  %2479 = vst [vmem:[%s2458 + $0x49] sm:$0x1] 0.0
  %2480 = vst [vmem:[%s2458 + $0x59] sm:$0x1] 0.0
  %2481 = vst [vmem:[%s2458 + $0x69] sm:$0x1] 0.0
  %2482 = vst [vmem:[%s2458 + $0x79] sm:$0x1] 0.0
  %2483 = vst [vmem:[%s2458 + $0xa9] sm:$0x1] 0.0
  %2484 = vst [vmem:[%s2458 + $0xb9] sm:$0x1] 0.0
  %2485 = vst [vmem:[%s2458 + $0xc9] sm:$0x1] 0.0
  %2486 = vst [vmem:[%s2458 + $0xd9] sm:$0x1] 0.0
  %2487 = vst [vmem:[%s2458 + $0xe9] sm:$0x1] 0.0
  %2488 = vst [vmem:[%s2458 + $0xf9] sm:$0x1] 0.0
  %2489 = vst [vmem:[%s2458 + $0x109] sm:$0x1] 0.0
  %2490 = vst [vmem:[%s2458 + $0x119] sm:$0x1] 0.0
  %2491 = vst [vmem:[%s2458 + $0x1] sm:$0xff] %v2433
  %2492 = vst [vmem:[%s2458 + $0x11] sm:$0xff] %v2434
  %2493 = vst [vmem:[%s2458 + $0x21] sm:$0xff] %v2435
  %2494 = vst [vmem:[%s2458 + $0x31] sm:$0xff] %v2436
  %2495 = vst [vmem:[%s2458 + $0x41] sm:$0xff] %v2437
  %2496 = vst [vmem:[%s2458 + $0x51] sm:$0xff] %v2438
  %2497 = vst [vmem:[%s2458 + $0x61] sm:$0xff] %v2439
  %2498 = vst [vmem:[%s2458 + $0x71] sm:$0xff] %v2440
  %2499 = vst [vmem:[%s2458 + $0xa1] sm:$0xff] %v2441
  %2500 = vst [vmem:[%s2458 + $0xb1] sm:$0xff] %v2442
  %2501 = vst [vmem:[%s2458 + $0xc1] sm:$0xff] %v2443
  %2502 = vst [vmem:[%s2458 + $0xd1] sm:$0xff] %v2444
  %2503 = vst [vmem:[%s2458 + $0xe1] sm:$0xff] %v2445
  %2504 = vst [vmem:[%s2458 + $0xf1] sm:$0xff] %v2446
  %2505 = vst [vmem:[%s2458 + $0x101] sm:$0xff] %v2447
  %2506 = vst [vmem:[%s2458 + $0x111] sm:$0xff] %v2448
  %v2507 = vld [vmem:[#allocation2] sm:$0xff]
  %v2508 = vld [vmem:[#allocation2 + $0x10] sm:$0xff]
  %v2509 = vld [vmem:[#allocation2 + $0x20] sm:$0xff]
  %v2510 = vld [vmem:[#allocation2 + $0x30] sm:$0xff]
  %v2511 = vld [vmem:[#allocation2 + $0x40] sm:$0xff]
  %v2512 = vld [vmem:[#allocation2 + $0x50] sm:$0xff]
  %v2513 = vld [vmem:[#allocation2 + $0x60] sm:$0xff]
  %v2514 = vld [vmem:[#allocation2 + $0x70] sm:$0xff]
  %v2515 = vld [vmem:[#allocation2 + $0xa0] sm:$0xff]
  %v2516 = vld [vmem:[#allocation2 + $0xb0] sm:$0xff]
  %v2517 = vld [vmem:[#allocation2 + $0xc0] sm:$0xff]
  %v2518 = vld [vmem:[#allocation2 + $0xd0] sm:$0xff]
  %v2519 = vld [vmem:[#allocation2 + $0xe0] sm:$0xff]
  %v2520 = vld [vmem:[#allocation2 + $0xf0] sm:$0xff]
  %v2521 = vld [vmem:[#allocation2 + $0x100] sm:$0xff]
  %v2522 = vld [vmem:[#allocation2 + $0x110] sm:$0xff]
  %v2523 = vld [vmem:[#allocation2 + $0x1] sm:$0xff]
  %v2524 = vld [vmem:[#allocation2 + $0x11] sm:$0xff]
  %v2525 = vld [vmem:[#allocation2 + $0x21] sm:$0xff]
  %v2526 = vld [vmem:[#allocation2 + $0x31] sm:$0xff]
  %v2527 = vld [vmem:[#allocation2 + $0x41] sm:$0xff]
  %v2528 = vld [vmem:[#allocation2 + $0x51] sm:$0xff]
  %v2529 = vld [vmem:[#allocation2 + $0x61] sm:$0xff]
  %v2530 = vld [vmem:[#allocation2 + $0x71] sm:$0xff]
  %v2531 = vld [vmem:[#allocation2 + $0xa1] sm:$0xff]
  %v2532 = vld [vmem:[#allocation2 + $0xb1] sm:$0xff]
  %v2533 = vld [vmem:[#allocation2 + $0xc1] sm:$0xff]
  %v2534 = vld [vmem:[#allocation2 + $0xd1] sm:$0xff]
  %v2535 = vld [vmem:[#allocation2 + $0xe1] sm:$0xff]
  %v2536 = vld [vmem:[#allocation2 + $0xf1] sm:$0xff]
  %v2537 = vld [vmem:[#allocation2 + $0x101] sm:$0xff]
  %v2538 = vld [vmem:[#allocation2 + $0x111] sm:$0xff]
  %v2539 = vld [vmem:[#allocation2 + $0x2] sm:$0xff]
  %v2540 = vld [vmem:[#allocation2 + $0x12] sm:$0xff]
  %v2541 = vld [vmem:[#allocation2 + $0x22] sm:$0xff]
  %v2542 = vld [vmem:[#allocation2 + $0x32] sm:$0xff]
  %v2543 = vld [vmem:[#allocation2 + $0x42] sm:$0xff]
  %v2544 = vld [vmem:[#allocation2 + $0x52] sm:$0xff]
  %v2545 = vld [vmem:[#allocation2 + $0x62] sm:$0xff]
  %v2546 = vld [vmem:[#allocation2 + $0x72] sm:$0xff]
  %v2547 = vld [vmem:[#allocation2 + $0xa2] sm:$0xff]
  %v2548 = vld [vmem:[#allocation2 + $0xb2] sm:$0xff]
  %v2549 = vld [vmem:[#allocation2 + $0xc2] sm:$0xff]
  %v2550 = vld [vmem:[#allocation2 + $0xd2] sm:$0xff]
  %v2551 = vld [vmem:[#allocation2 + $0xe2] sm:$0xff]
  %v2552 = vld [vmem:[#allocation2 + $0xf2] sm:$0xff]
  %v2553 = vld [vmem:[#allocation2 + $0x102] sm:$0xff]
  %v2554 = vld [vmem:[#allocation2 + $0x112] sm:$0xff]
  %v2555 = vld [vmem:[%s2458] sm:$0xff]
  %v2556 = vld [vmem:[%s2458 + $0x10] sm:$0xff]
  %v2557 = vld [vmem:[%s2458 + $0x20] sm:$0xff]
  %v2558 = vld [vmem:[%s2458 + $0x30] sm:$0xff]
  %v2559 = vld [vmem:[%s2458 + $0x40] sm:$0xff]
  %v2560 = vld [vmem:[%s2458 + $0x50] sm:$0xff]
  %v2561 = vld [vmem:[%s2458 + $0x60] sm:$0xff]
  %v2562 = vld [vmem:[%s2458 + $0x70] sm:$0xff]
  %v2563 = vld [vmem:[%s2458 + $0xa0] sm:$0xff]
  %v2564 = vld [vmem:[%s2458 + $0xb0] sm:$0xff]
  %v2565 = vld [vmem:[%s2458 + $0xc0] sm:$0xff]
  %v2566 = vld [vmem:[%s2458 + $0xd0] sm:$0xff]
  %v2567 = vld [vmem:[%s2458 + $0xe0] sm:$0xff]
  %v2568 = vld [vmem:[%s2458 + $0xf0] sm:$0xff]
  %v2569 = vld [vmem:[%s2458 + $0x100] sm:$0xff]
  %v2570 = vld [vmem:[%s2458 + $0x110] sm:$0xff]
  %v2571 = vld [vmem:[%s2458 + $0x1] sm:$0xff]
  %v2572 = vld [vmem:[%s2458 + $0x11] sm:$0xff]
  %v2573 = vld [vmem:[%s2458 + $0x21] sm:$0xff]
  %v2574 = vld [vmem:[%s2458 + $0x31] sm:$0xff]
  %v2575 = vld [vmem:[%s2458 + $0x41] sm:$0xff]
  %v2576 = vld [vmem:[%s2458 + $0x51] sm:$0xff]
  %v2577 = vld [vmem:[%s2458 + $0x61] sm:$0xff]
  %v2578 = vld [vmem:[%s2458 + $0x71] sm:$0xff]
  %v2579 = vld [vmem:[%s2458 + $0xa1] sm:$0xff]
  %v2580 = vld [vmem:[%s2458 + $0xb1] sm:$0xff]
  %v2581 = vld [vmem:[%s2458 + $0xc1] sm:$0xff]
  %v2582 = vld [vmem:[%s2458 + $0xd1] sm:$0xff]
  %v2583 = vld [vmem:[%s2458 + $0xe1] sm:$0xff]
  %v2584 = vld [vmem:[%s2458 + $0xf1] sm:$0xff]
  %v2585 = vld [vmem:[%s2458 + $0x101] sm:$0xff]
  %v2586 = vld [vmem:[%s2458 + $0x111] sm:$0xff]
  %v2587 = vld [vmem:[%s2458 + $0x2] sm:$0xff]
  %v2588 = vld [vmem:[%s2458 + $0x12] sm:$0xff]
  %v2589 = vld [vmem:[%s2458 + $0x22] sm:$0xff]
  %v2590 = vld [vmem:[%s2458 + $0x32] sm:$0xff]
  %v2591 = vld [vmem:[%s2458 + $0x42] sm:$0xff]
  %v2592 = vld [vmem:[%s2458 + $0x52] sm:$0xff]
  %v2593 = vld [vmem:[%s2458 + $0x62] sm:$0xff]
  %v2594 = vld [vmem:[%s2458 + $0x72] sm:$0xff]
  %v2595 = vld [vmem:[%s2458 + $0xa2] sm:$0xff]
  %v2596 = vld [vmem:[%s2458 + $0xb2] sm:$0xff]
  %v2597 = vld [vmem:[%s2458 + $0xc2] sm:$0xff]
  %v2598 = vld [vmem:[%s2458 + $0xd2] sm:$0xff]
  %v2599 = vld [vmem:[%s2458 + $0xe2] sm:$0xff]
  %v2600 = vld [vmem:[%s2458 + $0xf2] sm:$0xff]
  %v2601 = vld [vmem:[%s2458 + $0x102] sm:$0xff]
  %v2602 = vld [vmem:[%s2458 + $0x112] sm:$0xff]
  %s2603 = scalar_lea.vmem [#allocation2], 32
  %v2604 = vld [vmem:[%s2603] sm:$0xff]
  %v2605 = vld [vmem:[%s2603 + $0x10] sm:$0xff]
  %v2606 = vld [vmem:[%s2603 + $0x20] sm:$0xff]
  %v2607 = vld [vmem:[%s2603 + $0x30] sm:$0xff]
  %v2608 = vld [vmem:[%s2603 + $0x40] sm:$0xff]
  %v2609 = vld [vmem:[%s2603 + $0x50] sm:$0xff]
  %v2610 = vld [vmem:[%s2603 + $0x60] sm:$0xff]
  %v2611 = vld [vmem:[%s2603 + $0x70] sm:$0xff]
  %v2612 = vld [vmem:[%s2603 + $0xa0] sm:$0xff]
  %v2613 = vld [vmem:[%s2603 + $0xb0] sm:$0xff]
  %v2614 = vld [vmem:[%s2603 + $0xc0] sm:$0xff]
  %v2615 = vld [vmem:[%s2603 + $0xd0] sm:$0xff]
  %v2616 = vld [vmem:[%s2603 + $0xe0] sm:$0xff]
  %v2617 = vld [vmem:[%s2603 + $0xf0] sm:$0xff]
  %v2618 = vld [vmem:[%s2603 + $0x100] sm:$0xff]
  %v2619 = vld [vmem:[%s2603 + $0x110] sm:$0xff]
  %v2620 = vld [vmem:[%s2603 + $0x1] sm:$0xff]
  %v2621 = vld [vmem:[%s2603 + $0x11] sm:$0xff]
  %v2622 = vld [vmem:[%s2603 + $0x21] sm:$0xff]
  %v2623 = vld [vmem:[%s2603 + $0x31] sm:$0xff]
  %v2624 = vld [vmem:[%s2603 + $0x41] sm:$0xff]
  %v2625 = vld [vmem:[%s2603 + $0x51] sm:$0xff]
  %v2626 = vld [vmem:[%s2603 + $0x61] sm:$0xff]
  %v2627 = vld [vmem:[%s2603 + $0x71] sm:$0xff]
  %v2628 = vld [vmem:[%s2603 + $0xa1] sm:$0xff]
  %v2629 = vld [vmem:[%s2603 + $0xb1] sm:$0xff]
  %v2630 = vld [vmem:[%s2603 + $0xc1] sm:$0xff]
  %v2631 = vld [vmem:[%s2603 + $0xd1] sm:$0xff]
  %v2632 = vld [vmem:[%s2603 + $0xe1] sm:$0xff]
  %v2633 = vld [vmem:[%s2603 + $0xf1] sm:$0xff]
  %v2634 = vld [vmem:[%s2603 + $0x101] sm:$0xff]
  %v2635 = vld [vmem:[%s2603 + $0x111] sm:$0xff]
  %v2636 = vld [vmem:[%s2603 + $0x2] sm:$0xff]
  %v2637 = vld [vmem:[%s2603 + $0x12] sm:$0xff]
  %v2638 = vld [vmem:[%s2603 + $0x22] sm:$0xff]
  %v2639 = vld [vmem:[%s2603 + $0x32] sm:$0xff]
  %v2640 = vld [vmem:[%s2603 + $0x42] sm:$0xff]
  %v2641 = vld [vmem:[%s2603 + $0x52] sm:$0xff]
  %v2642 = vld [vmem:[%s2603 + $0x62] sm:$0xff]
  %v2643 = vld [vmem:[%s2603 + $0x72] sm:$0xff]
  %v2644 = vld [vmem:[%s2603 + $0xa2] sm:$0xff]
  %v2645 = vld [vmem:[%s2603 + $0xb2] sm:$0xff]
  %v2646 = vld [vmem:[%s2603 + $0xc2] sm:$0xff]
  %v2647 = vld [vmem:[%s2603 + $0xd2] sm:$0xff]
  %v2648 = vld [vmem:[%s2603 + $0xe2] sm:$0xff]
  %v2649 = vld [vmem:[%s2603 + $0xf2] sm:$0xff]
  %v2650 = vld [vmem:[%s2603 + $0x102] sm:$0xff]
  %v2651 = vld [vmem:[%s2603 + $0x112] sm:$0xff]
  %v2652 = vpack.c.bf16 %v2508, %v2507
  %v2653 = vpack.c.bf16 %v2524, %v2523
  %v2654 = vpack.c.bf16 %v2540, %v2539
  %v2655 = vpack.c.bf16 %v2556, %v2555
  %v2656 = vpack.c.bf16 %v2572, %v2571
  %v2657 = vpack.c.bf16 %v2588, %v2587
  %v2658 = vpack.c.bf16 %v2605, %v2604
  %v2659 = vpack.c.bf16 %v2621, %v2620
  %v2660 = vpack.c.bf16 %v2637, %v2636
  %v2661 = vpack.c.bf16 %v2510, %v2509
  %v2662 = vpack.c.bf16 %v2526, %v2525
  %v2663 = vpack.c.bf16 %v2542, %v2541
  %v2664 = vpack.c.bf16 %v2558, %v2557
  %v2665 = vpack.c.bf16 %v2574, %v2573
  %v2666 = vpack.c.bf16 %v2590, %v2589
  %v2667 = vpack.c.bf16 %v2607, %v2606
  %v2668 = vpack.c.bf16 %v2623, %v2622
  %v2669 = vpack.c.bf16 %v2639, %v2638
  %v2670 = vpack.c.bf16 %v2512, %v2511
  %v2671 = vpack.c.bf16 %v2528, %v2527
  %v2672 = vpack.c.bf16 %v2544, %v2543
  %v2673 = vpack.c.bf16 %v2560, %v2559
  %v2674 = vpack.c.bf16 %v2576, %v2575
  %v2675 = vpack.c.bf16 %v2592, %v2591
  %v2676 = vpack.c.bf16 %v2609, %v2608
  %v2677 = vpack.c.bf16 %v2625, %v2624
  %v2678 = vpack.c.bf16 %v2641, %v2640
  %v2679 = vpack.c.bf16 %v2514, %v2513
  %v2680 = vpack.c.bf16 %v2530, %v2529
  %v2681 = vpack.c.bf16 %v2546, %v2545
  %v2682 = vpack.c.bf16 %v2562, %v2561
  %v2683 = vpack.c.bf16 %v2578, %v2577
  %v2684 = vpack.c.bf16 %v2594, %v2593
  %v2685 = vpack.c.bf16 %v2611, %v2610
  %v2686 = vpack.c.bf16 %v2627, %v2626
  %v2687 = vpack.c.bf16 %v2643, %v2642
  %v2688 = vpack.c.bf16 %v2516, %v2515
  %v2689 = vpack.c.bf16 %v2532, %v2531
  %v2690 = vpack.c.bf16 %v2548, %v2547
  %v2691 = vpack.c.bf16 %v2564, %v2563
  %v2692 = vpack.c.bf16 %v2580, %v2579
  %v2693 = vpack.c.bf16 %v2596, %v2595
  %v2694 = vpack.c.bf16 %v2613, %v2612
  %v2695 = vpack.c.bf16 %v2629, %v2628
  %v2696 = vpack.c.bf16 %v2645, %v2644
  %v2697 = vpack.c.bf16 %v2518, %v2517
  %v2698 = vpack.c.bf16 %v2534, %v2533
  %v2699 = vpack.c.bf16 %v2550, %v2549
  %v2700 = vpack.c.bf16 %v2566, %v2565
  %v2701 = vpack.c.bf16 %v2582, %v2581
  %v2702 = vpack.c.bf16 %v2598, %v2597
  %v2703 = vpack.c.bf16 %v2615, %v2614
  %v2704 = vpack.c.bf16 %v2631, %v2630
  %v2705 = vpack.c.bf16 %v2647, %v2646
  %v2706 = vpack.c.bf16 %v2520, %v2519
  %v2707 = vpack.c.bf16 %v2536, %v2535
  %v2708 = vpack.c.bf16 %v2552, %v2551
  %v2709 = vpack.c.bf16 %v2568, %v2567
  %v2710 = vpack.c.bf16 %v2584, %v2583
  %v2711 = vpack.c.bf16 %v2600, %v2599
  %v2712 = vpack.c.bf16 %v2617, %v2616
  %v2713 = vpack.c.bf16 %v2633, %v2632
  %v2714 = vpack.c.bf16 %v2649, %v2648
  %v2715 = vpack.c.bf16 %v2522, %v2521
  %v2716 = vpack.c.bf16 %v2538, %v2537
  %v2717 = vpack.c.bf16 %v2554, %v2553
  %v2718 = vpack.c.bf16 %v2570, %v2569
  %v2719 = vpack.c.bf16 %v2586, %v2585
  %v2720 = vpack.c.bf16 %v2602, %v2601
  %v2721 = vpack.c.bf16 %v2619, %v2618
  %v2722 = vpack.c.bf16 %v2635, %v2634
  %v2723 = vpack.c.bf16 %v2651, %v2650
  %v2724 = vld [vmem:[%s2] sm:$0xf]
  %v2725 = vld [vmem:[%s2 + $0x4] sm:$0xf]
  %v2726 = vld [vmem:[%s2 + $0x8] sm:$0xf]
  %v2727 = vld [vmem:[%s2 + $0xc] sm:$0xf]
  %v2728 = vld [vmem:[%s2 + $0x10] sm:$0xf]
  %v2729 = vld [vmem:[%s2 + $0x14] sm:$0xf]
  %v2730 = vld [vmem:[%s2 + $0x18] sm:$0xf]
  %v2731 = vld [vmem:[%s2 + $0x1c] sm:$0xf]
  %v2732 = vld [vmem:[%s2 + $0x20] sm:$0xf]
  %v2733 = vld [vmem:[%s2 + $0x24] sm:$0xf]
  %v2734 = vld [vmem:[%s2 + $0x28] sm:$0xf]
  %v2735 = vld [vmem:[%s2 + $0x2c] sm:$0xf]
  %v2736 = vld [vmem:[%s2 + $0x30] sm:$0xf]
  %v2737 = vld [vmem:[%s2 + $0x34] sm:$0xf]
  %v2738 = vld [vmem:[%s2 + $0x38] sm:$0xf]
  %v2739 = vld [vmem:[%s2 + $0x3c] sm:$0xf]
  %v2740 = vld [vmem:[%s2 + $0x40] sm:$0xf]
  %v2741 = vld [vmem:[%s2 + $0x44] sm:$0xf]
  %v2742 = vld [vmem:[%s2 + $0x48] sm:$0xf]
  %v2743 = vld [vmem:[%s2 + $0x4c] sm:$0xf]
  %v2744 = vld [vmem:[%s2 + $0x50] sm:$0xf]
  %v2745 = vld [vmem:[%s2 + $0x54] sm:$0xf]
  %v2746 = vld [vmem:[%s2 + $0x58] sm:$0xf]
  %v2747 = vld [vmem:[%s2 + $0x5c] sm:$0xf]
  %v2748 = vld [vmem:[%s2 + $0x60] sm:$0xf]
  %v2749 = vld [vmem:[%s2 + $0x64] sm:$0xf]
  %v2750 = vld [vmem:[%s2 + $0x68] sm:$0xf]
  %v2751 = vld [vmem:[%s2 + $0x6c] sm:$0xf]
  %v2752 = vld [vmem:[%s2 + $0x70] sm:$0xf]
  %v2753 = vld [vmem:[%s2 + $0x74] sm:$0xf]
  %v2754 = vld [vmem:[%s2 + $0x78] sm:$0xf]
  %v2755 = vld [vmem:[%s2 + $0x7c] sm:$0xf]
  %v2756 = vld [vmem:[%s2 + $0x80] sm:$0xf]
  %v2757 = vld [vmem:[%s2 + $0x84] sm:$0xf]
  %v2758 = vld [vmem:[%s2 + $0x88] sm:$0xf]
  %v2759 = vld [vmem:[%s2 + $0x8c] sm:$0xf]
  %v2760 = vld [vmem:[%s2 + $0x90] sm:$0xf]
  %v2761 = vld [vmem:[%s2 + $0x94] sm:$0xf]
  %v2762 = vld [vmem:[%s2 + $0x98] sm:$0xf]
  %v2763 = vld [vmem:[%s2 + $0x9c] sm:$0xf]
  %v2764 = vld [vmem:[%s2 + $0xa0] sm:$0xf]
  %v2765 = vld [vmem:[%s2 + $0xa4] sm:$0xf]
  %v2766 = vld [vmem:[%s2 + $0xa8] sm:$0xf]
  %v2767 = vld [vmem:[%s2 + $0xac] sm:$0xf]
  %v2768 = vld [vmem:[%s2 + $0xb0] sm:$0xf]
  %v2769 = vld [vmem:[%s2 + $0xb4] sm:$0xf]
  %v2770 = vld [vmem:[%s2 + $0xb8] sm:$0xf]
  %v2771 = vld [vmem:[%s2 + $0xbc] sm:$0xf]
  %v2772 = vld [vmem:[%s2 + $0xc0] sm:$0xf]
  %v2773 = vld [vmem:[%s2 + $0xc4] sm:$0xf]
  %v2774 = vld [vmem:[%s2 + $0xc8] sm:$0xf]
  %v2775 = vld [vmem:[%s2 + $0xcc] sm:$0xf]
  %v2776 = vld [vmem:[%s2 + $0xd0] sm:$0xf]
  %v2777 = vld [vmem:[%s2 + $0xd4] sm:$0xf]
  %v2778 = vld [vmem:[%s2 + $0xd8] sm:$0xf]
  %v2779 = vld [vmem:[%s2 + $0xdc] sm:$0xf]
  %v2780 = vld [vmem:[%s2 + $0xe0] sm:$0xf]
  %v2781 = vld [vmem:[%s2 + $0xe4] sm:$0xf]
  %v2782 = vld [vmem:[%s2 + $0xe8] sm:$0xf]
  %v2783 = vld [vmem:[%s2 + $0xec] sm:$0xf]
  %v2784 = vld [vmem:[%s2 + $0xf0] sm:$0xf]
  %v2785 = vld [vmem:[%s2 + $0xf4] sm:$0xf]
  %v2786 = vld [vmem:[%s2 + $0xf8] sm:$0xf]
  %v2787 = vld [vmem:[%s2 + $0xfc] sm:$0xf]
  %v2788 = vld [vmem:[%s2 + $0x100] sm:$0xf]
  %v2789 = vld [vmem:[%s2 + $0x104] sm:$0xf]
  %v2790 = vld [vmem:[%s2 + $0x108] sm:$0xf]
  %v2791 = vld [vmem:[%s2 + $0x10c] sm:$0xf]
  %v2792 = vld [vmem:[%s2 + $0x110] sm:$0xf]
  %v2793 = vld [vmem:[%s2 + $0x114] sm:$0xf]
  %v2794 = vld [vmem:[%s2 + $0x118] sm:$0xf]
  %v2795 = vld [vmem:[%s2 + $0x11c] sm:$0xf]
  %v2796 = vld [vmem:[%s2 + $0x120] sm:$0xf]
  %v2797 = vld [vmem:[%s2 + $0x124] sm:$0xf]
  %v2798 = vld [vmem:[%s2 + $0x128] sm:$0xf]
  %v2799 = vld [vmem:[%s2 + $0x12c] sm:$0xf]
  %v2800 = vld [vmem:[%s2 + $0x130] sm:$0xf]
  %v2801 = vld [vmem:[%s2 + $0x134] sm:$0xf]
  %v2802 = vld [vmem:[%s2 + $0x138] sm:$0xf]
  %v2803 = vld [vmem:[%s2 + $0x13c] sm:$0xf]
  %v2804 = vld [vmem:[%s2 + $0x140] sm:$0xf]
  %v2805 = vld [vmem:[%s2 + $0x144] sm:$0xf]
  %v2806 = vld [vmem:[%s2 + $0x148] sm:$0xf]
  %v2807 = vld [vmem:[%s2 + $0x14c] sm:$0xf]
  %v2808 = vld [vmem:[%s2 + $0x150] sm:$0xf]
  %v2809 = vld [vmem:[%s2 + $0x154] sm:$0xf]
  %v2810 = vld [vmem:[%s2 + $0x158] sm:$0xf]
  %v2811 = vld [vmem:[%s2 + $0x15c] sm:$0xf]
  %v2812 = vld [vmem:[%s2 + $0x160] sm:$0xf]
  %v2813 = vld [vmem:[%s2 + $0x164] sm:$0xf]
  %v2814 = vld [vmem:[%s2 + $0x168] sm:$0xf]
  %v2815 = vld [vmem:[%s2 + $0x16c] sm:$0xf]
  %v2816 = vld [vmem:[%s2 + $0x170] sm:$0xf]
  %v2817 = vld [vmem:[%s2 + $0x174] sm:$0xf]
  %v2818 = vld [vmem:[%s2 + $0x178] sm:$0xf]
  %v2819 = vld [vmem:[%s2 + $0x17c] sm:$0xf]
  %v2820 = vld [vmem:[%s2 + $0x180] sm:$0xf]
  %v2821 = vld [vmem:[%s2 + $0x184] sm:$0xf]
  %v2822 = vld [vmem:[%s2 + $0x188] sm:$0xf]
  %v2823 = vld [vmem:[%s2 + $0x18c] sm:$0xf]
  %v2824 = vld [vmem:[%s2 + $0x190] sm:$0xf]
  %v2825 = vld [vmem:[%s2 + $0x194] sm:$0xf]
  %v2826 = vld [vmem:[%s2 + $0x198] sm:$0xf]
  %v2827 = vld [vmem:[%s2 + $0x19c] sm:$0xf]
  %v2828 = vld [vmem:[%s2 + $0x1a0] sm:$0xf]
  %v2829 = vld [vmem:[%s2 + $0x1a4] sm:$0xf]
  %v2830 = vld [vmem:[%s2 + $0x1a8] sm:$0xf]
  %v2831 = vld [vmem:[%s2 + $0x1ac] sm:$0xf]
  %v2832 = vld [vmem:[%s2 + $0x1b0] sm:$0xf]
  %v2833 = vld [vmem:[%s2 + $0x1b4] sm:$0xf]
  %v2834 = vld [vmem:[%s2 + $0x1b8] sm:$0xf]
  %v2835 = vld [vmem:[%s2 + $0x1bc] sm:$0xf]
  %v2836 = vld [vmem:[%s2 + $0x1c0] sm:$0xf]
  %v2837 = vld [vmem:[%s2 + $0x1c4] sm:$0xf]
  %v2838 = vld [vmem:[%s2 + $0x1c8] sm:$0xf]
  %v2839 = vld [vmem:[%s2 + $0x1cc] sm:$0xf]
  %v2840 = vld [vmem:[%s2 + $0x1d0] sm:$0xf]
  %v2841 = vld [vmem:[%s2 + $0x1d4] sm:$0xf]
  %v2842 = vld [vmem:[%s2 + $0x1d8] sm:$0xf]
  %v2843 = vld [vmem:[%s2 + $0x1dc] sm:$0xf]
  %v2844 = vld [vmem:[%s2 + $0x1e0] sm:$0xf]
  %v2845 = vld [vmem:[%s2 + $0x1e4] sm:$0xf]
  %v2846 = vld [vmem:[%s2 + $0x1e8] sm:$0xf]
  %v2847 = vld [vmem:[%s2 + $0x1ec] sm:$0xf]
  %v2848 = vld [vmem:[%s2 + $0x1f0] sm:$0xf]
  %v2849 = vld [vmem:[%s2 + $0x1f4] sm:$0xf]
  %v2850 = vld [vmem:[%s2 + $0x1f8] sm:$0xf]
  %v2851 = vld [vmem:[%s2 + $0x1fc] sm:$0xf]
  %v2852 = vld [vmem:[%s2 + $0x200] sm:$0xf]
  %v2853 = vld [vmem:[%s2 + $0x204] sm:$0xf]
  %v2854 = vld [vmem:[%s2 + $0x208] sm:$0xf]
  %v2855 = vld [vmem:[%s2 + $0x20c] sm:$0xf]
  %v2856 = vld [vmem:[%s2 + $0x210] sm:$0xf]
  %v2857 = vld [vmem:[%s2 + $0x214] sm:$0xf]
  %v2858 = vld [vmem:[%s2 + $0x218] sm:$0xf]
  %v2859 = vld [vmem:[%s2 + $0x21c] sm:$0xf]
  %v2860 = vld [vmem:[%s2 + $0x220] sm:$0xf]
  %v2861 = vld [vmem:[%s2 + $0x224] sm:$0xf]
  %v2862 = vld [vmem:[%s2 + $0x228] sm:$0xf]
  %v2863 = vld [vmem:[%s2 + $0x22c] sm:$0xf]
  %v2864 = vld [vmem:[%s2 + $0x230] sm:$0xf]
  %v2865 = vld [vmem:[%s2 + $0x234] sm:$0xf]
  %v2866 = vld [vmem:[%s2 + $0x238] sm:$0xf]
  %v2867 = vld [vmem:[%s2 + $0x23c] sm:$0xf]
  %v3012 = vunpack.c.l.b16 %v2724
  %v3013 = vunpack.c.l.b16 %v2725
  %v3014 = vunpack.c.l.b16 %v2726
  %v3015 = vunpack.c.l.b16 %v2727
  %v3016 = vunpack.c.l.b16 %v2728
  %v3017 = vunpack.c.l.b16 %v2729
  %v3018 = vunpack.c.l.b16 %v2730
  %v3019 = vunpack.c.l.b16 %v2731
  %v3020 = vunpack.c.l.b16 %v2732
  %v3021 = vunpack.c.l.b16 %v2733
  %v3022 = vunpack.c.l.b16 %v2734
  %v3023 = vunpack.c.l.b16 %v2735
  %v3024 = vunpack.c.l.b16 %v2736
  %v3025 = vunpack.c.l.b16 %v2737
  %v3026 = vunpack.c.l.b16 %v2738
  %v3027 = vunpack.c.l.b16 %v2739
  %v3028 = vunpack.c.l.b16 %v2740
  %v3029 = vunpack.c.l.b16 %v2741
  %v3030 = vunpack.c.l.b16 %v2742
  %v3031 = vunpack.c.l.b16 %v2743
  %v3032 = vunpack.c.l.b16 %v2744
  %v3033 = vunpack.c.l.b16 %v2745
  %v3034 = vunpack.c.l.b16 %v2746
  %v3035 = vunpack.c.l.b16 %v2747
  %v3036 = vunpack.c.l.b16 %v2748
  %v3037 = vunpack.c.l.b16 %v2749
  %v3038 = vunpack.c.l.b16 %v2750
  %v3039 = vunpack.c.l.b16 %v2751
  %v3040 = vunpack.c.l.b16 %v2752
  %v3041 = vunpack.c.l.b16 %v2753
  %v3042 = vunpack.c.l.b16 %v2754
  %v3043 = vunpack.c.l.b16 %v2755
  %v3044 = vunpack.c.l.b16 %v2756
  %v3045 = vunpack.c.l.b16 %v2757
  %v3046 = vunpack.c.l.b16 %v2758
  %v3047 = vunpack.c.l.b16 %v2759
  %v3048 = vunpack.c.l.b16 %v2760
  %v3049 = vunpack.c.l.b16 %v2761
  %v3050 = vunpack.c.l.b16 %v2762
  %v3051 = vunpack.c.l.b16 %v2763
  %v3052 = vunpack.c.l.b16 %v2764
  %v3053 = vunpack.c.l.b16 %v2765
  %v3054 = vunpack.c.l.b16 %v2766
  %v3055 = vunpack.c.l.b16 %v2767
  %v3056 = vunpack.c.l.b16 %v2768
  %v3057 = vunpack.c.l.b16 %v2769
  %v3058 = vunpack.c.l.b16 %v2770
  %v3059 = vunpack.c.l.b16 %v2771
  %v3060 = vunpack.c.l.b16 %v2772
  %v3061 = vunpack.c.l.b16 %v2773
  %v3062 = vunpack.c.l.b16 %v2774
  %v3063 = vunpack.c.l.b16 %v2775
  %v3064 = vunpack.c.l.b16 %v2776
  %v3065 = vunpack.c.l.b16 %v2777
  %v3066 = vunpack.c.l.b16 %v2778
  %v3067 = vunpack.c.l.b16 %v2779
  %v3068 = vunpack.c.l.b16 %v2780
  %v3069 = vunpack.c.l.b16 %v2781
  %v3070 = vunpack.c.l.b16 %v2782
  %v3071 = vunpack.c.l.b16 %v2783
  %v3072 = vunpack.c.l.b16 %v2784
  %v3073 = vunpack.c.l.b16 %v2785
  %v3074 = vunpack.c.l.b16 %v2786
  %v3075 = vunpack.c.l.b16 %v2787
  %v3076 = vunpack.c.l.b16 %v2788
  %v3077 = vunpack.c.l.b16 %v2789
  %v3078 = vunpack.c.l.b16 %v2790
  %v3079 = vunpack.c.l.b16 %v2791
  %v3080 = vunpack.c.l.b16 %v2792
  %v3081 = vunpack.c.l.b16 %v2793
  %v3082 = vunpack.c.l.b16 %v2794
  %v3083 = vunpack.c.l.b16 %v2795
  %v3084 = vunpack.c.l.b16 %v2796
  %v3085 = vunpack.c.l.b16 %v2797
  %v3086 = vunpack.c.l.b16 %v2798
  %v3087 = vunpack.c.l.b16 %v2799
  %v3088 = vunpack.c.l.b16 %v2800
  %v3089 = vunpack.c.l.b16 %v2801
  %v3090 = vunpack.c.l.b16 %v2802
  %v3091 = vunpack.c.l.b16 %v2803
  %v3092 = vunpack.c.l.b16 %v2804
  %v3093 = vunpack.c.l.b16 %v2805
  %v3094 = vunpack.c.l.b16 %v2806
  %v3095 = vunpack.c.l.b16 %v2807
  %v3096 = vunpack.c.l.b16 %v2808
  %v3097 = vunpack.c.l.b16 %v2809
  %v3098 = vunpack.c.l.b16 %v2810
  %v3099 = vunpack.c.l.b16 %v2811
  %v3100 = vunpack.c.l.b16 %v2812
  %v3101 = vunpack.c.l.b16 %v2813
  %v3102 = vunpack.c.l.b16 %v2814
  %v3103 = vunpack.c.l.b16 %v2815
  %v3104 = vunpack.c.l.b16 %v2816
  %v3105 = vunpack.c.l.b16 %v2817
  %v3106 = vunpack.c.l.b16 %v2818
  %v3107 = vunpack.c.l.b16 %v2819
  %v3108 = vunpack.c.l.b16 %v2820
  %v3109 = vunpack.c.l.b16 %v2821
  %v3110 = vunpack.c.l.b16 %v2822
  %v3111 = vunpack.c.l.b16 %v2823
  %v3112 = vunpack.c.l.b16 %v2824
  %v3113 = vunpack.c.l.b16 %v2825
  %v3114 = vunpack.c.l.b16 %v2826
  %v3115 = vunpack.c.l.b16 %v2827
  %v3116 = vunpack.c.l.b16 %v2828
  %v3117 = vunpack.c.l.b16 %v2829
  %v3118 = vunpack.c.l.b16 %v2830
  %v3119 = vunpack.c.l.b16 %v2831
  %v3120 = vunpack.c.l.b16 %v2832
  %v3121 = vunpack.c.l.b16 %v2833
  %v3122 = vunpack.c.l.b16 %v2834
  %v3123 = vunpack.c.l.b16 %v2835
  %v3124 = vunpack.c.l.b16 %v2836
  %v3125 = vunpack.c.l.b16 %v2837
  %v3126 = vunpack.c.l.b16 %v2838
  %v3127 = vunpack.c.l.b16 %v2839
  %v3128 = vunpack.c.l.b16 %v2840
  %v3129 = vunpack.c.l.b16 %v2841
  %v3130 = vunpack.c.l.b16 %v2842
  %v3131 = vunpack.c.l.b16 %v2843
  %v3132 = vunpack.c.l.b16 %v2844
  %v3133 = vunpack.c.l.b16 %v2845
  %v3134 = vunpack.c.l.b16 %v2846
  %v3135 = vunpack.c.l.b16 %v2847
  %v3136 = vunpack.c.l.b16 %v2848
  %v3137 = vunpack.c.l.b16 %v2849
  %v3138 = vunpack.c.l.b16 %v2850
  %v3139 = vunpack.c.l.b16 %v2851
  %v3140 = vunpack.c.l.b16 %v2852
  %v3141 = vunpack.c.l.b16 %v2853
  %v3142 = vunpack.c.l.b16 %v2854
  %v3143 = vunpack.c.l.b16 %v2855
  %v3144 = vunpack.c.l.b16 %v2856
  %v3145 = vunpack.c.l.b16 %v2857
  %v3146 = vunpack.c.l.b16 %v2858
  %v3147 = vunpack.c.l.b16 %v2859
  %v3148 = vunpack.c.l.b16 %v2860
  %v3149 = vunpack.c.l.b16 %v2861
  %v3150 = vunpack.c.l.b16 %v2862
  %v3151 = vunpack.c.l.b16 %v2863
  %v3152 = vunpack.c.l.b16 %v2864
  %v3153 = vunpack.c.l.b16 %v2865
  %v3154 = vunpack.c.l.b16 %v2866
  %v3155 = vunpack.c.l.b16 %v2867
  %v3156 = vpack.c.b16 %v3013, %v3012
  %v3157 = vpack.c.b16 %v3015, %v3014
  %v3158 = vpack.c.b16 %v3017, %v3016
  %v3159 = vpack.c.b16 %v3019, %v3018
  %v3160 = vpack.c.b16 %v3021, %v3020
  %v3161 = vpack.c.b16 %v3023, %v3022
  %v3162 = vpack.c.b16 %v3025, %v3024
  %v3163 = vpack.c.b16 %v3027, %v3026
  %v3164 = vpack.c.b16 %v3029, %v3028
  %v3165 = vpack.c.b16 %v3031, %v3030
  %v3166 = vpack.c.b16 %v3033, %v3032
  %v3167 = vpack.c.b16 %v3035, %v3034
  %v3168 = vpack.c.b16 %v3037, %v3036
  %v3169 = vpack.c.b16 %v3039, %v3038
  %v3170 = vpack.c.b16 %v3041, %v3040
  %v3171 = vpack.c.b16 %v3043, %v3042
  %v3172 = vpack.c.b16 %v3045, %v3044
  %v3173 = vpack.c.b16 %v3047, %v3046
  %v3174 = vpack.c.b16 %v3049, %v3048
  %v3175 = vpack.c.b16 %v3051, %v3050
  %v3176 = vpack.c.b16 %v3053, %v3052
  %v3177 = vpack.c.b16 %v3055, %v3054
  %v3178 = vpack.c.b16 %v3057, %v3056
  %v3179 = vpack.c.b16 %v3059, %v3058
  %v3180 = vpack.c.b16 %v3061, %v3060
  %v3181 = vpack.c.b16 %v3063, %v3062
  %v3182 = vpack.c.b16 %v3065, %v3064
  %v3183 = vpack.c.b16 %v3067, %v3066
  %v3184 = vpack.c.b16 %v3069, %v3068
  %v3185 = vpack.c.b16 %v3071, %v3070
  %v3186 = vpack.c.b16 %v3073, %v3072
  %v3187 = vpack.c.b16 %v3075, %v3074
  %v3188 = vpack.c.b16 %v3077, %v3076
  %v3189 = vpack.c.b16 %v3079, %v3078
  %v3190 = vpack.c.b16 %v3081, %v3080
  %v3191 = vpack.c.b16 %v3083, %v3082
  %v3192 = vpack.c.b16 %v3085, %v3084
  %v3193 = vpack.c.b16 %v3087, %v3086
  %v3194 = vpack.c.b16 %v3089, %v3088
  %v3195 = vpack.c.b16 %v3091, %v3090
  %v3196 = vpack.c.b16 %v3093, %v3092
  %v3197 = vpack.c.b16 %v3095, %v3094
  %v3198 = vpack.c.b16 %v3097, %v3096
  %v3199 = vpack.c.b16 %v3099, %v3098
  %v3200 = vpack.c.b16 %v3101, %v3100
  %v3201 = vpack.c.b16 %v3103, %v3102
  %v3202 = vpack.c.b16 %v3105, %v3104
  %v3203 = vpack.c.b16 %v3107, %v3106
  %v3204 = vpack.c.b16 %v3109, %v3108
  %v3205 = vpack.c.b16 %v3111, %v3110
  %v3206 = vpack.c.b16 %v3113, %v3112
  %v3207 = vpack.c.b16 %v3115, %v3114
  %v3208 = vpack.c.b16 %v3117, %v3116
  %v3209 = vpack.c.b16 %v3119, %v3118
  %v3210 = vpack.c.b16 %v3121, %v3120
  %v3211 = vpack.c.b16 %v3123, %v3122
  %v3212 = vpack.c.b16 %v3125, %v3124
  %v3213 = vpack.c.b16 %v3127, %v3126
  %v3214 = vpack.c.b16 %v3129, %v3128
  %v3215 = vpack.c.b16 %v3131, %v3130
  %v3216 = vpack.c.b16 %v3133, %v3132
  %v3217 = vpack.c.b16 %v3135, %v3134
  %v3218 = vpack.c.b16 %v3137, %v3136
  %v3219 = vpack.c.b16 %v3139, %v3138
  %v3220 = vpack.c.b16 %v3141, %v3140
  %v3221 = vpack.c.b16 %v3143, %v3142
  %v3222 = vpack.c.b16 %v3145, %v3144
  %v3223 = vpack.c.b16 %v3147, %v3146
  %v3224 = vpack.c.b16 %v3149, %v3148
  %v3225 = vpack.c.b16 %v3151, %v3150
  %v3226 = vpack.c.b16 %v3153, %v3152
  %v3227 = vpack.c.b16 %v3155, %v3154
  %3300 = vmatprep.subr.bf16.mxu0 0
  %3301 = vmatpush1.bf16.msra.mxu0 %v3163
  %3302 = vmatprep.subr.bf16.mxu0 0
  %3303 = vmatpush1.bf16.msra.mxu0 %v3162
  %3304 = vmatprep.subr.bf16.mxu0 0
  %3305 = vmatpush1.bf16.msra.mxu0 %v3161
  %3306 = vmatprep.subr.bf16.mxu0 0
  %3307 = vmatpush1.bf16.msra.mxu0 %v3160
  %3308 = vmatprep.subr.bf16.mxu0 0
  %3309 = vmatpush1.bf16.msra.mxu0 %v3159
  %3310 = vmatprep.subr.bf16.mxu0 0
  %3311 = vmatpush1.bf16.msra.mxu0 %v3158
  %3312 = vmatprep.subr.bf16.mxu0 0
  %3313 = vmatpush1.bf16.msra.mxu0 %v3157
  %3314 = vmatprep.subr.bf16.mxu0 0
  %3315 = vmatpush1.bf16.msra.mxu0 %v3156
  %3316 = vmatprep.subr.bf16.mxu0 0
  %3317 = vmatpush2.bf16.msra.mxu0 %v3171
  %3318 = vmatprep.subr.bf16.mxu0 0
  %3319 = vmatpush2.bf16.msra.mxu0 %v3170
  %3320 = vmatprep.subr.bf16.mxu0 0
  %3321 = vmatpush2.bf16.msra.mxu0 %v3169
  %3322 = vmatprep.subr.bf16.mxu0 0
  %3323 = vmatpush2.bf16.msra.mxu0 %v3168
  %3324 = vmatprep.subr.bf16.mxu0 0
  %3325 = vmatpush2.bf16.msra.mxu0 %v3167
  %3326 = vmatprep.subr.bf16.mxu0 0
  %3327 = vmatpush2.bf16.msra.mxu0 %v3166
  %3328 = vmatprep.subr.bf16.mxu0 0
  %3329 = vmatpush2.bf16.msra.mxu0 %v3165
  %3330 = vmatprep.subr.bf16.mxu0 0
  %3331 = vmatpush2.bf16.msra.mxu0 %v3164
  %3332 = vmatprep.mubr.bf16.mxu0 %v2653
  %3333 = vmatmul.mubr.bf16.gmra.mxu0 %v2652
  %v3334 = vpop.f32.mrf.mxu0
  %v3335 = vadd.f32 0.0, %v3334
  %v3336 = vpop.f32.mrf.mxu0
  %v3337 = vpop.f32.mrf.mxu0
  %v3338 = vadd.f32 0.0, %v3337
  %v3339 = vpop.f32.mrf.mxu0
  %3340 = vmatprep.mubr.bf16.mxu0 %v2662
  %3341 = vmatmul.mubr.bf16.gmra.mxu0 %v2661
  %v3342 = vpop.f32.mrf.mxu0
  %v3343 = vadd.f32 0.0, %v3342
  %v3344 = vpop.f32.mrf.mxu0
  %v3345 = vpop.f32.mrf.mxu0
  %v3346 = vadd.f32 0.0, %v3345
  %v3347 = vpop.f32.mrf.mxu0
  %3348 = vmatprep.mubr.bf16.mxu0 %v2671
  %3349 = vmatmul.mubr.bf16.gmra.mxu0 %v2670
  %v3350 = vpop.f32.mrf.mxu0
  %v3351 = vadd.f32 0.0, %v3350
  %v3352 = vpop.f32.mrf.mxu0
  %v3353 = vpop.f32.mrf.mxu0
  %v3354 = vadd.f32 0.0, %v3353
  %v3355 = vpop.f32.mrf.mxu0
  %3356 = vmatprep.mubr.bf16.mxu0 %v2680
  %3357 = vmatmul.mubr.bf16.gmra.mxu0 %v2679
  %v3358 = vpop.f32.mrf.mxu0
  %v3359 = vadd.f32 0.0, %v3358
  %v3360 = vpop.f32.mrf.mxu0
  %v3361 = vpop.f32.mrf.mxu0
  %v3362 = vadd.f32 0.0, %v3361
  %v3363 = vpop.f32.mrf.mxu0
  %3364 = vmatprep.mubr.bf16.mxu0 %v2689
  %3365 = vmatmul.mubr.bf16.gmra.mxu0 %v2688
  %v3366 = vpop.f32.mrf.mxu0
  %v3367 = vadd.f32 0.0, %v3366
  %v3368 = vpop.f32.mrf.mxu0
  %v3369 = vpop.f32.mrf.mxu0
  %v3370 = vadd.f32 0.0, %v3369
  %v3371 = vpop.f32.mrf.mxu0
  %3372 = vmatprep.mubr.bf16.mxu0 %v2698
  %3373 = vmatmul.mubr.bf16.gmra.mxu0 %v2697
  %v3374 = vpop.f32.mrf.mxu0
  %v3375 = vadd.f32 0.0, %v3374
  %v3376 = vpop.f32.mrf.mxu0
  %v3377 = vpop.f32.mrf.mxu0
  %v3378 = vadd.f32 0.0, %v3377
  %v3379 = vpop.f32.mrf.mxu0
  %3380 = vmatprep.mubr.bf16.mxu0 %v2707
  %3381 = vmatmul.mubr.bf16.gmra.mxu0 %v2706
  %v3382 = vpop.f32.mrf.mxu0
  %v3383 = vadd.f32 0.0, %v3382
  %v3384 = vpop.f32.mrf.mxu0
  %v3385 = vpop.f32.mrf.mxu0
  %v3386 = vadd.f32 0.0, %v3385
  %v3387 = vpop.f32.mrf.mxu0
  %3388 = vmatprep.mubr.bf16.mxu0 %v2716
  %3389 = vmatmul.mubr.bf16.gmra.mxu0 %v2715
  %v3390 = vpop.f32.mrf.mxu0
  %v3391 = vadd.f32 0.0, %v3390
  %v3392 = vpop.f32.mrf.mxu0
  %v3393 = vpop.f32.mrf.mxu0
  %v3394 = vadd.f32 0.0, %v3393
  %v3395 = vpop.f32.mrf.mxu0
  %3396 = vdwg.mxu0
  %3397 = vmatprep.subr.bf16.mxu0 0
  %3398 = vmatpush1.bf16.msra.mxu0 %v3179
  %3399 = vmatprep.subr.bf16.mxu0 0
  %3400 = vmatpush1.bf16.msra.mxu0 %v3178
  %3401 = vmatprep.subr.bf16.mxu0 0
  %3402 = vmatpush1.bf16.msra.mxu0 %v3177
  %3403 = vmatprep.subr.bf16.mxu0 0
  %3404 = vmatpush1.bf16.msra.mxu0 %v3176
  %3405 = vmatprep.subr.bf16.mxu0 0
  %3406 = vmatpush1.bf16.msra.mxu0 %v3175
  %3407 = vmatprep.subr.bf16.mxu0 0
  %3408 = vmatpush1.bf16.msra.mxu0 %v3174
  %3409 = vmatprep.subr.bf16.mxu0 0
  %3410 = vmatpush1.bf16.msra.mxu0 %v3173
  %3411 = vmatprep.subr.bf16.mxu0 0
  %3412 = vmatpush1.bf16.msra.mxu0 %v3172
  %3413 = vmatprep.subr.bf16.mxu0 0
  %3414 = vmatpush2.bf16.msra.mxu0 %v3187
  %3415 = vmatprep.subr.bf16.mxu0 0
  %3416 = vmatpush2.bf16.msra.mxu0 %v3186
  %3417 = vmatprep.subr.bf16.mxu0 0
  %3418 = vmatpush2.bf16.msra.mxu0 %v3185
  %3419 = vmatprep.subr.bf16.mxu0 0
  %3420 = vmatpush2.bf16.msra.mxu0 %v3184
  %3421 = vmatprep.subr.bf16.mxu0 0
  %3422 = vmatpush2.bf16.msra.mxu0 %v3183
  %3423 = vmatprep.subr.bf16.mxu0 0
  %3424 = vmatpush2.bf16.msra.mxu0 %v3182
  %3425 = vmatprep.subr.bf16.mxu0 0
  %3426 = vmatpush2.bf16.msra.mxu0 %v3181
  %3427 = vmatprep.subr.bf16.mxu0 0
  %3428 = vmatpush2.bf16.msra.mxu0 %v3180
  %3429 = vmatprep.mubr.bf16.mxu0 %v2655
  %3430 = vmatmul.mubr.bf16.gmra.mxu0 %v2654
  %v3431 = vpop.f32.mrf.mxu0
  %v3432 = vadd.f32 %v3335, %v3431
  %v3433 = vpop.f32.mrf.mxu0
  %v3434 = vpop.f32.mrf.mxu0
  %v3435 = vadd.f32 %v3338, %v3434
  %v3436 = vpop.f32.mrf.mxu0
  %3437 = vmatprep.mubr.bf16.mxu0 %v2664
  %3438 = vmatmul.mubr.bf16.gmra.mxu0 %v2663
  %v3439 = vpop.f32.mrf.mxu0
  %v3440 = vadd.f32 %v3343, %v3439
  %v3441 = vpop.f32.mrf.mxu0
  %v3442 = vpop.f32.mrf.mxu0
  %v3443 = vadd.f32 %v3346, %v3442
  %v3444 = vpop.f32.mrf.mxu0
  %3445 = vmatprep.mubr.bf16.mxu0 %v2673
  %3446 = vmatmul.mubr.bf16.gmra.mxu0 %v2672
  %v3447 = vpop.f32.mrf.mxu0
  %v3448 = vadd.f32 %v3351, %v3447
  %v3449 = vpop.f32.mrf.mxu0
  %v3450 = vpop.f32.mrf.mxu0
  %v3451 = vadd.f32 %v3354, %v3450
  %v3452 = vpop.f32.mrf.mxu0
  %3453 = vmatprep.mubr.bf16.mxu0 %v2682
  %3454 = vmatmul.mubr.bf16.gmra.mxu0 %v2681
  %v3455 = vpop.f32.mrf.mxu0
  %v3456 = vadd.f32 %v3359, %v3455
  %v3457 = vpop.f32.mrf.mxu0
  %v3458 = vpop.f32.mrf.mxu0
  %v3459 = vadd.f32 %v3362, %v3458
  %v3460 = vpop.f32.mrf.mxu0
  %3461 = vmatprep.mubr.bf16.mxu0 %v2691
  %3462 = vmatmul.mubr.bf16.gmra.mxu0 %v2690
  %v3463 = vpop.f32.mrf.mxu0
  %v3464 = vadd.f32 %v3367, %v3463
  %v3465 = vpop.f32.mrf.mxu0
  %v3466 = vpop.f32.mrf.mxu0
  %v3467 = vadd.f32 %v3370, %v3466
  %v3468 = vpop.f32.mrf.mxu0
  %3469 = vmatprep.mubr.bf16.mxu0 %v2700
  %3470 = vmatmul.mubr.bf16.gmra.mxu0 %v2699
  %v3471 = vpop.f32.mrf.mxu0
  %v3472 = vadd.f32 %v3375, %v3471
  %v3473 = vpop.f32.mrf.mxu0
  %v3474 = vpop.f32.mrf.mxu0
  %v3475 = vadd.f32 %v3378, %v3474
  %v3476 = vpop.f32.mrf.mxu0
  %3477 = vmatprep.mubr.bf16.mxu0 %v2709
  %3478 = vmatmul.mubr.bf16.gmra.mxu0 %v2708
  %v3479 = vpop.f32.mrf.mxu0
  %v3480 = vadd.f32 %v3383, %v3479
  %v3481 = vpop.f32.mrf.mxu0
  %v3482 = vpop.f32.mrf.mxu0
  %v3483 = vadd.f32 %v3386, %v3482
  %v3484 = vpop.f32.mrf.mxu0
  %3485 = vmatprep.mubr.bf16.mxu0 %v2718
  %3486 = vmatmul.mubr.bf16.gmra.mxu0 %v2717
  %v3487 = vpop.f32.mrf.mxu0
  %v3488 = vadd.f32 %v3391, %v3487
  %v3489 = vpop.f32.mrf.mxu0
  %v3490 = vpop.f32.mrf.mxu0
  %v3491 = vadd.f32 %v3394, %v3490
  %v3492 = vpop.f32.mrf.mxu0
  %3493 = vdwg.mxu0
  %3494 = vmatprep.subr.bf16.mxu0 0
  %3495 = vmatpush1.bf16.msra.mxu0 %v3195
  %3496 = vmatprep.subr.bf16.mxu0 0
  %3497 = vmatpush1.bf16.msra.mxu0 %v3194
  %3498 = vmatprep.subr.bf16.mxu0 0
  %3499 = vmatpush1.bf16.msra.mxu0 %v3193
  %3500 = vmatprep.subr.bf16.mxu0 0
  %3501 = vmatpush1.bf16.msra.mxu0 %v3192
  %3502 = vmatprep.subr.bf16.mxu0 0
  %3503 = vmatpush1.bf16.msra.mxu0 %v3191
  %3504 = vmatprep.subr.bf16.mxu0 0
  %3505 = vmatpush1.bf16.msra.mxu0 %v3190
  %3506 = vmatprep.subr.bf16.mxu0 0
  %3507 = vmatpush1.bf16.msra.mxu0 %v3189
  %3508 = vmatprep.subr.bf16.mxu0 0
  %3509 = vmatpush1.bf16.msra.mxu0 %v3188
  %3510 = vmatprep.subr.bf16.mxu0 0
  %3511 = vmatpush2.bf16.msra.mxu0 %v3203
  %3512 = vmatprep.subr.bf16.mxu0 0
  %3513 = vmatpush2.bf16.msra.mxu0 %v3202
  %3514 = vmatprep.subr.bf16.mxu0 0
  %3515 = vmatpush2.bf16.msra.mxu0 %v3201
  %3516 = vmatprep.subr.bf16.mxu0 0
  %3517 = vmatpush2.bf16.msra.mxu0 %v3200
  %3518 = vmatprep.subr.bf16.mxu0 0
  %3519 = vmatpush2.bf16.msra.mxu0 %v3199
  %3520 = vmatprep.subr.bf16.mxu0 0
  %3521 = vmatpush2.bf16.msra.mxu0 %v3198
  %3522 = vmatprep.subr.bf16.mxu0 0
  %3523 = vmatpush2.bf16.msra.mxu0 %v3197
  %3524 = vmatprep.subr.bf16.mxu0 0
  %3525 = vmatpush2.bf16.msra.mxu0 %v3196
  %3526 = vmatprep.mubr.bf16.mxu0 %v2657
  %3527 = vmatmul.mubr.bf16.gmra.mxu0 %v2656
  %v3528 = vpop.f32.mrf.mxu0
  %v3529 = vadd.f32 %v3432, %v3528
  %v3530 = vpop.f32.mrf.mxu0
  %v3531 = vpop.f32.mrf.mxu0
  %v3532 = vadd.f32 %v3435, %v3531
  %v3533 = vpop.f32.mrf.mxu0
  %3534 = vmatprep.mubr.bf16.mxu0 %v2666
  %3535 = vmatmul.mubr.bf16.gmra.mxu0 %v2665
  %v3536 = vpop.f32.mrf.mxu0
  %v3537 = vadd.f32 %v3440, %v3536
  %v3538 = vpop.f32.mrf.mxu0
  %v3539 = vpop.f32.mrf.mxu0
  %v3540 = vadd.f32 %v3443, %v3539
  %v3541 = vpop.f32.mrf.mxu0
  %3542 = vmatprep.mubr.bf16.mxu0 %v2675
  %3543 = vmatmul.mubr.bf16.gmra.mxu0 %v2674
  %v3544 = vpop.f32.mrf.mxu0
  %v3545 = vadd.f32 %v3448, %v3544
  %v3546 = vpop.f32.mrf.mxu0
  %v3547 = vpop.f32.mrf.mxu0
  %v3548 = vadd.f32 %v3451, %v3547
  %v3549 = vpop.f32.mrf.mxu0
  %3550 = vmatprep.mubr.bf16.mxu0 %v2684
  %3551 = vmatmul.mubr.bf16.gmra.mxu0 %v2683
  %v3552 = vpop.f32.mrf.mxu0
  %v3553 = vadd.f32 %v3456, %v3552
  %v3554 = vpop.f32.mrf.mxu0
  %v3555 = vpop.f32.mrf.mxu0
  %v3556 = vadd.f32 %v3459, %v3555
  %v3557 = vpop.f32.mrf.mxu0
  %3558 = vmatprep.mubr.bf16.mxu0 %v2693
  %3559 = vmatmul.mubr.bf16.gmra.mxu0 %v2692
  %v3560 = vpop.f32.mrf.mxu0
  %v3561 = vadd.f32 %v3464, %v3560
  %v3562 = vpop.f32.mrf.mxu0
  %v3563 = vpop.f32.mrf.mxu0
  %v3564 = vadd.f32 %v3467, %v3563
  %v3565 = vpop.f32.mrf.mxu0
  %3566 = vmatprep.mubr.bf16.mxu0 %v2702
  %3567 = vmatmul.mubr.bf16.gmra.mxu0 %v2701
  %v3568 = vpop.f32.mrf.mxu0
  %v3569 = vadd.f32 %v3472, %v3568
  %v3570 = vpop.f32.mrf.mxu0
  %v3571 = vpop.f32.mrf.mxu0
  %v3572 = vadd.f32 %v3475, %v3571
  %v3573 = vpop.f32.mrf.mxu0
  %3574 = vmatprep.mubr.bf16.mxu0 %v2711
  %3575 = vmatmul.mubr.bf16.gmra.mxu0 %v2710
  %v3576 = vpop.f32.mrf.mxu0
  %v3577 = vadd.f32 %v3480, %v3576
  %v3578 = vpop.f32.mrf.mxu0
  %v3579 = vpop.f32.mrf.mxu0
  %v3580 = vadd.f32 %v3483, %v3579
  %v3581 = vpop.f32.mrf.mxu0
  %3582 = vmatprep.mubr.bf16.mxu0 %v2720
  %3583 = vmatmul.mubr.bf16.gmra.mxu0 %v2719
  %v3584 = vpop.f32.mrf.mxu0
  %v3585 = vadd.f32 %v3488, %v3584
  %v3586 = vpop.f32.mrf.mxu0
  %v3587 = vpop.f32.mrf.mxu0
  %v3588 = vadd.f32 %v3491, %v3587
  %v3589 = vpop.f32.mrf.mxu0
  %3590 = vdwg.mxu0
  %3591 = vmatprep.subr.bf16.mxu0 0
  %3592 = vmatpush1.bf16.msra.mxu0 %v3211
  %3593 = vmatprep.subr.bf16.mxu0 0
  %3594 = vmatpush1.bf16.msra.mxu0 %v3210
  %3595 = vmatprep.subr.bf16.mxu0 0
  %3596 = vmatpush1.bf16.msra.mxu0 %v3209
  %3597 = vmatprep.subr.bf16.mxu0 0
  %3598 = vmatpush1.bf16.msra.mxu0 %v3208
  %3599 = vmatprep.subr.bf16.mxu0 0
  %3600 = vmatpush1.bf16.msra.mxu0 %v3207
  %3601 = vmatprep.subr.bf16.mxu0 0
  %3602 = vmatpush1.bf16.msra.mxu0 %v3206
  %3603 = vmatprep.subr.bf16.mxu0 0
  %3604 = vmatpush1.bf16.msra.mxu0 %v3205
  %3605 = vmatprep.subr.bf16.mxu0 0
  %3606 = vmatpush1.bf16.msra.mxu0 %v3204
  %3607 = vmatprep.subr.bf16.mxu0 0
  %3608 = vmatpush2.bf16.msra.mxu0 %v3219
  %3609 = vmatprep.subr.bf16.mxu0 0
  %3610 = vmatpush2.bf16.msra.mxu0 %v3218
  %3611 = vmatprep.subr.bf16.mxu0 0
  %3612 = vmatpush2.bf16.msra.mxu0 %v3217
  %3613 = vmatprep.subr.bf16.mxu0 0
  %3614 = vmatpush2.bf16.msra.mxu0 %v3216
  %3615 = vmatprep.subr.bf16.mxu0 0
  %3616 = vmatpush2.bf16.msra.mxu0 %v3215
  %3617 = vmatprep.subr.bf16.mxu0 0
  %3618 = vmatpush2.bf16.msra.mxu0 %v3214
  %3619 = vmatprep.subr.bf16.mxu0 0
  %3620 = vmatpush2.bf16.msra.mxu0 %v3213
  %3621 = vmatprep.subr.bf16.mxu0 0
  %3622 = vmatpush2.bf16.msra.mxu0 %v3212
  %3623 = vmatprep.mubr.bf16.mxu0 %v2659
  %3624 = vmatmul.mubr.bf16.gmra.mxu0 %v2658
  %v3625 = vpop.f32.mrf.mxu0
  %v3626 = vadd.f32 %v3529, %v3625
  %v3627 = vpop.f32.mrf.mxu0
  %v3628 = vpop.f32.mrf.mxu0
  %v3629 = vadd.f32 %v3532, %v3628
  %v3630 = vpop.f32.mrf.mxu0
  %3631 = vmatprep.mubr.bf16.mxu0 %v2668
  %3632 = vmatmul.mubr.bf16.gmra.mxu0 %v2667
  %v3633 = vpop.f32.mrf.mxu0
  %v3634 = vadd.f32 %v3537, %v3633
  %v3635 = vpop.f32.mrf.mxu0
  %v3636 = vpop.f32.mrf.mxu0
  %v3637 = vadd.f32 %v3540, %v3636
  %v3638 = vpop.f32.mrf.mxu0
  %3639 = vmatprep.mubr.bf16.mxu0 %v2677
  %3640 = vmatmul.mubr.bf16.gmra.mxu0 %v2676
  %v3641 = vpop.f32.mrf.mxu0
  %v3642 = vadd.f32 %v3545, %v3641
  %v3643 = vpop.f32.mrf.mxu0
  %v3644 = vpop.f32.mrf.mxu0
  %v3645 = vadd.f32 %v3548, %v3644
  %v3646 = vpop.f32.mrf.mxu0
  %3647 = vmatprep.mubr.bf16.mxu0 %v2686
  %3648 = vmatmul.mubr.bf16.gmra.mxu0 %v2685
  %v3649 = vpop.f32.mrf.mxu0
  %v3650 = vadd.f32 %v3553, %v3649
  %v3651 = vpop.f32.mrf.mxu0
  %v3652 = vpop.f32.mrf.mxu0
  %v3653 = vadd.f32 %v3556, %v3652
  %v3654 = vpop.f32.mrf.mxu0
  %3655 = vmatprep.mubr.bf16.mxu0 %v2695
  %3656 = vmatmul.mubr.bf16.gmra.mxu0 %v2694
  %v3657 = vpop.f32.mrf.mxu0
  %v3658 = vadd.f32 %v3561, %v3657
  %v3659 = vpop.f32.mrf.mxu0
  %v3660 = vpop.f32.mrf.mxu0
  %v3661 = vadd.f32 %v3564, %v3660
  %v3662 = vpop.f32.mrf.mxu0
  %3663 = vmatprep.mubr.bf16.mxu0 %v2704
  %3664 = vmatmul.mubr.bf16.gmra.mxu0 %v2703
  %v3665 = vpop.f32.mrf.mxu0
  %v3666 = vadd.f32 %v3569, %v3665
  %v3667 = vpop.f32.mrf.mxu0
  %v3668 = vpop.f32.mrf.mxu0
  %v3669 = vadd.f32 %v3572, %v3668
  %v3670 = vpop.f32.mrf.mxu0
  %3671 = vmatprep.mubr.bf16.mxu0 %v2713
  %3672 = vmatmul.mubr.bf16.gmra.mxu0 %v2712
  %v3673 = vpop.f32.mrf.mxu0
  %v3674 = vadd.f32 %v3577, %v3673
  %v3675 = vpop.f32.mrf.mxu0
  %v3676 = vpop.f32.mrf.mxu0
  %v3677 = vadd.f32 %v3580, %v3676
  %v3678 = vpop.f32.mrf.mxu0
  %3679 = vmatprep.mubr.bf16.mxu0 %v2722
  %3680 = vmatmul.mubr.bf16.gmra.mxu0 %v2721
  %v3681 = vpop.f32.mrf.mxu0
  %v3682 = vadd.f32 %v3585, %v3681
  %v3683 = vpop.f32.mrf.mxu0
  %v3684 = vpop.f32.mrf.mxu0
  %v3685 = vadd.f32 %v3588, %v3684
  %v3686 = vpop.f32.mrf.mxu0
  %3687 = vdwg.mxu0
  %3688 = vmatprep.subr.bf16.mxu0 0
  %3689 = vmatpush1.bf16.msra.mxu0 %v3227
  %3690 = vmatprep.subr.bf16.mxu0 0
  %3691 = vmatpush1.bf16.msra.mxu0 %v3226
  %3692 = vmatprep.subr.bf16.mxu0 0
  %3693 = vmatpush1.bf16.msra.mxu0 %v3225
  %3694 = vmatprep.subr.bf16.mxu0 0
  %3695 = vmatpush1.bf16.msra.mxu0 %v3224
  %3696 = vmatprep.subr.bf16.mxu0 0
  %3697 = vmatpush1.bf16.msra.mxu0 %v3223
  %3698 = vmatprep.subr.bf16.mxu0 0
  %3699 = vmatpush1.bf16.msra.mxu0 %v3222
  %3700 = vmatprep.subr.bf16.mxu0 0
  %3701 = vmatpush1.bf16.msra.mxu0 %v3221
  %3702 = vmatprep.subr.bf16.mxu0 0
  %3703 = vmatpush1.bf16.msra.mxu0 %v3220
  %3704 = vmatprep.subr.bf16.mxu0 0
  %3705 = vmatpush2.bf16.msra.mxu0 0
  %3706 = vmatprep.subr.bf16.mxu0 0
  %3707 = vmatpush2.bf16.msra.mxu0 0
  %3708 = vmatprep.subr.bf16.mxu0 0
  %3709 = vmatpush2.bf16.msra.mxu0 0
  %3710 = vmatprep.subr.bf16.mxu0 0
  %3711 = vmatpush2.bf16.msra.mxu0 0
  %3712 = vmatprep.subr.bf16.mxu0 0
  %3713 = vmatpush2.bf16.msra.mxu0 0
  %3714 = vmatprep.subr.bf16.mxu0 0
  %3715 = vmatpush2.bf16.msra.mxu0 0
  %3716 = vmatprep.subr.bf16.mxu0 0
  %3717 = vmatpush2.bf16.msra.mxu0 0
  %3718 = vmatprep.subr.bf16.mxu0 0
  %3719 = vmatpush2.bf16.msra.mxu0 0
  %3720 = vmatprep.mubr.bf16.mxu0 0
  %3721 = vmatmul.mubr.bf16.gmra.mxu0 %v2660
  %v3722 = vpop.f32.mrf.mxu0
  %v3723 = vadd.f32 %v3626, %v3722
  %v3724 = vpop.f32.mrf.mxu0
  %v3725 = vpop.f32.mrf.mxu0
  %v3726 = vadd.f32 %v3629, %v3725
  %v3727 = vpop.f32.mrf.mxu0
  %3728 = vmatprep.mubr.bf16.mxu0 0
  %3729 = vmatmul.mubr.bf16.gmra.mxu0 %v2669
  %v3730 = vpop.f32.mrf.mxu0
  %v3731 = vadd.f32 %v3634, %v3730
  %v3732 = vpop.f32.mrf.mxu0
  %v3733 = vpop.f32.mrf.mxu0
  %v3734 = vadd.f32 %v3637, %v3733
  %v3735 = vpop.f32.mrf.mxu0
  %3736 = vmatprep.mubr.bf16.mxu0 0
  %3737 = vmatmul.mubr.bf16.gmra.mxu0 %v2678
  %v3738 = vpop.f32.mrf.mxu0
  %v3739 = vadd.f32 %v3642, %v3738
  %v3740 = vpop.f32.mrf.mxu0
  %v3741 = vpop.f32.mrf.mxu0
  %v3742 = vadd.f32 %v3645, %v3741
  %v3743 = vpop.f32.mrf.mxu0
  %3744 = vmatprep.mubr.bf16.mxu0 0
  %3745 = vmatmul.mubr.bf16.gmra.mxu0 %v2687
  %v3746 = vpop.f32.mrf.mxu0
  %v3747 = vadd.f32 %v3650, %v3746
  %v3748 = vpop.f32.mrf.mxu0
  %v3749 = vpop.f32.mrf.mxu0
  %v3750 = vadd.f32 %v3653, %v3749
  %v3751 = vpop.f32.mrf.mxu0
  %3752 = vmatprep.mubr.bf16.mxu0 0
  %3753 = vmatmul.mubr.bf16.gmra.mxu0 %v2696
  %v3754 = vpop.f32.mrf.mxu0
  %v3755 = vadd.f32 %v3658, %v3754
  %v3756 = vpop.f32.mrf.mxu0
  %v3757 = vpop.f32.mrf.mxu0
  %v3758 = vadd.f32 %v3661, %v3757
  %v3759 = vpop.f32.mrf.mxu0
  %3760 = vmatprep.mubr.bf16.mxu0 0
  %3761 = vmatmul.mubr.bf16.gmra.mxu0 %v2705
  %v3762 = vpop.f32.mrf.mxu0
  %v3763 = vadd.f32 %v3666, %v3762
  %v3764 = vpop.f32.mrf.mxu0
  %v3765 = vpop.f32.mrf.mxu0
  %v3766 = vadd.f32 %v3669, %v3765
  %v3767 = vpop.f32.mrf.mxu0
  %3768 = vmatprep.mubr.bf16.mxu0 0
  %3769 = vmatmul.mubr.bf16.gmra.mxu0 %v2714
  %v3770 = vpop.f32.mrf.mxu0
  %v3771 = vadd.f32 %v3674, %v3770
  %v3772 = vpop.f32.mrf.mxu0
  %v3773 = vpop.f32.mrf.mxu0
  %v3774 = vadd.f32 %v3677, %v3773
  %v3775 = vpop.f32.mrf.mxu0
  %3776 = vmatprep.mubr.bf16.mxu0 0
  %3777 = vmatmul.mubr.bf16.gmra.mxu0 %v2723
  %v3778 = vpop.f32.mrf.mxu0
  %v3779 = vadd.f32 %v3682, %v3778
  %v3780 = vpop.f32.mrf.mxu0
  %v3781 = vpop.f32.mrf.mxu0
  %v3782 = vadd.f32 %v3685, %v3781
  %v3783 = vpop.f32.mrf.mxu0
  %3784 = vdwg.mxu0
  %v3785 = vadd.f32 %v3723, %v3726
  %v3786 = vadd.f32 %v3785, %v3731
  %v3787 = vadd.f32 %v3786, %v3734
  %v3788 = vadd.f32 %v3787, %v3739
  %v3789 = vadd.f32 %v3788, %v3742
  %v3790 = vadd.f32 %v3789, %v3747
  %v3791 = vadd.f32 %v3790, %v3750
  %v3792 = vadd.f32 %v3791, %v3755
  %v3793 = vadd.f32 %v3792, %v3758
  %v3794 = vadd.f32 %v3793, %v3763
  %v3795 = vadd.f32 %v3794, %v3766
  %v3796 = vadd.f32 %v3795, %v3771
  %v3797 = vadd.f32 %v3796, %v3774
  %v3798 = vadd.f32 %v3797, %v3779
  %v3799 = vadd.f32 %v3798, %v3782
  %v3800 = vrot.slane %v3799, 4
  %v3801 = vadd.f32 %v3799, %v3800
  %v3802 = vrot.slane %v3801, 2
  %v3803 = vadd.f32 %v3801, %v3802
  %v3804 = vrot.slane %v3803, 1
  %v3805 = vadd.f32 %v3803, %v3804
  %v3806 = vmul.f32 %v3805, %v2326
  %v3807 = vmul.f32 %v3723, %v3723
  %v3808 = vmul.f32 %v3726, %v3726
  %v3809 = vmul.f32 %v3731, %v3731
  %v3810 = vmul.f32 %v3734, %v3734
  %v3811 = vmul.f32 %v3739, %v3739
  %v3812 = vmul.f32 %v3742, %v3742
  %v3813 = vmul.f32 %v3747, %v3747
  %v3814 = vmul.f32 %v3750, %v3750
  %v3815 = vmul.f32 %v3755, %v3755
  %v3816 = vmul.f32 %v3758, %v3758
  %v3817 = vmul.f32 %v3763, %v3763
  %v3818 = vmul.f32 %v3766, %v3766
  %v3819 = vmul.f32 %v3771, %v3771
  %v3820 = vmul.f32 %v3774, %v3774
  %v3821 = vmul.f32 %v3779, %v3779
  %v3822 = vmul.f32 %v3782, %v3782
  %v3823 = vadd.f32 %v3807, %v3808
  %v3824 = vadd.f32 %v3823, %v3809
  %v3825 = vadd.f32 %v3824, %v3810
  %v3826 = vadd.f32 %v3825, %v3811
  %v3827 = vadd.f32 %v3826, %v3812
  %v3828 = vadd.f32 %v3827, %v3813
  %v3829 = vadd.f32 %v3828, %v3814
  %v3830 = vadd.f32 %v3829, %v3815
  %v3831 = vadd.f32 %v3830, %v3816
  %v3832 = vadd.f32 %v3831, %v3817
  %v3833 = vadd.f32 %v3832, %v3818
  %v3834 = vadd.f32 %v3833, %v3819
  %v3835 = vadd.f32 %v3834, %v3820
  %v3836 = vadd.f32 %v3835, %v3821
  %v3837 = vadd.f32 %v3836, %v3822
  %v3838 = vrot.slane %v3837, 4
  %v3839 = vadd.f32 %v3837, %v3838
  %v3840 = vrot.slane %v3839, 2
  %v3841 = vadd.f32 %v3839, %v3840
  %v3842 = vrot.slane %v3841, 1
  %v3843 = vadd.f32 %v3841, %v3842
  %v3844 = vmul.f32 %v3843, %v2326
  %v3845 = vmul.f32 %v3806, %v3806
  %v3846 = vsub.f32 %v3844, %v3845
  %v3847 = vsub.f32 %v3723, %v3806
  %v3848 = vsub.f32 %v3726, %v3806
  %v3849 = vsub.f32 %v3731, %v3806
  %v3850 = vsub.f32 %v3734, %v3806
  %v3851 = vsub.f32 %v3739, %v3806
  %v3852 = vsub.f32 %v3742, %v3806
  %v3853 = vsub.f32 %v3747, %v3806
  %v3854 = vsub.f32 %v3750, %v3806
  %v3855 = vsub.f32 %v3755, %v3806
  %v3856 = vsub.f32 %v3758, %v3806
  %v3857 = vsub.f32 %v3763, %v3806
  %v3858 = vsub.f32 %v3766, %v3806
  %v3859 = vsub.f32 %v3771, %v3806
  %v3860 = vsub.f32 %v3774, %v3806
  %v3861 = vsub.f32 %v3779, %v3806
  %v3862 = vsub.f32 %v3782, %v3806
  %v3863 = vld [vmem:[%s5] sm:$0x1]
  %v3864 = vadd.f32 %v3846, 1e-05
  %v3865 = vrsqrt.pop %v3864
  %v3866 = vmul.f32 %v3863, %v3865
  %v3868 = vlaneseq
  %v3869 = vshrl.u32 %v3868, 7
  %v3870 = vsub.s32 0, %v3869
  %v3871 = vrot.slane %v3866, %v3870
  %v3873 = vmul.f32 %v3847, %v3871
  %v3874 = vmul.f32 %v3848, %v3871
  %v3875 = vmul.f32 %v3849, %v3871
  %v3876 = vmul.f32 %v3850, %v3871
  %v3877 = vmul.f32 %v3851, %v3871
  %v3878 = vmul.f32 %v3852, %v3871
  %v3879 = vmul.f32 %v3853, %v3871
  %v3880 = vmul.f32 %v3854, %v3871
  %v3881 = vmul.f32 %v3855, %v3871
  %v3882 = vmul.f32 %v3856, %v3871
  %v3883 = vmul.f32 %v3857, %v3871
  %v3884 = vmul.f32 %v3858, %v3871
  %v3885 = vmul.f32 %v3859, %v3871
  %v3886 = vmul.f32 %v3860, %v3871
  %v3887 = vmul.f32 %v3861, %v3871
  %v3888 = vmul.f32 %v3862, %v3871
  %v3889 = vld [vmem:[%s6] sm:$0x1]
  %v3891 = vlaneseq
  %v3892 = vshrl.u32 %v3891, 7
  %v3893 = vsub.s32 0, %v3892
  %v3894 = vrot.slane %v3889, %v3893
  %v3896 = vadd.f32 %v3873, %v3894
  %v3897 = vadd.f32 %v3874, %v3894
  %v3898 = vadd.f32 %v3875, %v3894
  %v3899 = vadd.f32 %v3876, %v3894
  %v3900 = vadd.f32 %v3877, %v3894
  %v3901 = vadd.f32 %v3878, %v3894
  %v3902 = vadd.f32 %v3879, %v3894
  %v3903 = vadd.f32 %v3880, %v3894
  %v3904 = vadd.f32 %v3881, %v3894
  %v3905 = vadd.f32 %v3882, %v3894
  %v3906 = vadd.f32 %v3883, %v3894
  %v3907 = vadd.f32 %v3884, %v3894
  %v3908 = vadd.f32 %v3885, %v3894
  %v3909 = vadd.f32 %v3886, %v3894
  %v3910 = vadd.f32 %v3887, %v3894
  %v3911 = vadd.f32 %v3888, %v3894
  %v3912 = vld [vmem:[%s329] sm:$0xf]
  %v3913 = vld [vmem:[%s329 + $0x8] sm:$0xf]
  %v3914 = vld [vmem:[%s329 + $0x10] sm:$0xf]
  %v3915 = vld [vmem:[%s329 + $0x18] sm:$0xf]
  %v3916 = vld [vmem:[%s329 + $0x20] sm:$0xf]
  %v3917 = vld [vmem:[%s329 + $0x28] sm:$0xf]
  %v3918 = vld [vmem:[%s329 + $0x30] sm:$0xf]
  %v3919 = vld [vmem:[%s329 + $0x38] sm:$0xf]
  %v3920 = vld [vmem:[%s329 + $0x48] sm:$0xf]
  %v3921 = vld [vmem:[%s329 + $0x50] sm:$0xf]
  %v3922 = vld [vmem:[%s329 + $0x58] sm:$0xf]
  %v3923 = vld [vmem:[%s329 + $0x60] sm:$0xf]
  %v3924 = vld [vmem:[%s329 + $0x68] sm:$0xf]
  %v3925 = vld [vmem:[%s329 + $0x70] sm:$0xf]
  %v3926 = vld [vmem:[%s329 + $0x78] sm:$0xf]
  %v3927 = vld [vmem:[%s329 + $0x80] sm:$0xf]
  %v3928 = vld [vmem:[%s7] sm:$0xf]
  %v3929 = vld [vmem:[%s7 + $0x4] sm:$0xf]
  %v3930 = vld [vmem:[%s7 + $0x8] sm:$0xf]
  %v3931 = vld [vmem:[%s7 + $0xc] sm:$0xf]
  %v3932 = vld [vmem:[%s7 + $0x10] sm:$0xf]
  %v3933 = vld [vmem:[%s7 + $0x14] sm:$0xf]
  %v3934 = vld [vmem:[%s7 + $0x18] sm:$0xf]
  %v3935 = vld [vmem:[%s7 + $0x1c] sm:$0xf]
  %v3936 = vld [vmem:[%s7 + $0x20] sm:$0xf]
  %v3937 = vld [vmem:[%s7 + $0x24] sm:$0xf]
  %v3938 = vld [vmem:[%s7 + $0x28] sm:$0xf]
  %v3939 = vld [vmem:[%s7 + $0x2c] sm:$0xf]
  %v3940 = vld [vmem:[%s7 + $0x30] sm:$0xf]
  %v3941 = vld [vmem:[%s7 + $0x34] sm:$0xf]
  %v3942 = vld [vmem:[%s7 + $0x38] sm:$0xf]
  %v3943 = vld [vmem:[%s7 + $0x3c] sm:$0xf]
  %v3960 = vunpack.c.l.b16 %v3912
  %v3961 = vunpack.c.l.b16 %v3913
  %v3962 = vunpack.c.l.b16 %v3914
  %v3963 = vunpack.c.l.b16 %v3915
  %v3964 = vunpack.c.l.b16 %v3916
  %v3965 = vunpack.c.l.b16 %v3917
  %v3966 = vunpack.c.l.b16 %v3918
  %v3967 = vunpack.c.l.b16 %v3919
  %v3968 = vunpack.c.l.b16 %v3920
  %v3969 = vunpack.c.l.b16 %v3921
  %v3970 = vunpack.c.l.b16 %v3922
  %v3971 = vunpack.c.l.b16 %v3923
  %v3972 = vunpack.c.l.b16 %v3924
  %v3973 = vunpack.c.l.b16 %v3925
  %v3974 = vunpack.c.l.b16 %v3926
  %v3975 = vunpack.c.l.b16 %v3927
  %v3976 = vpack.c.b16 %v3961, %v3960
  %v3977 = vpack.c.b16 %v3963, %v3962
  %v3978 = vpack.c.b16 %v3965, %v3964
  %v3979 = vpack.c.b16 %v3967, %v3966
  %v3980 = vpack.c.b16 %v3969, %v3968
  %v3981 = vpack.c.b16 %v3971, %v3970
  %v3982 = vpack.c.b16 %v3973, %v3972
  %v3983 = vpack.c.b16 %v3975, %v3974
  %v4008 = vunpack.c.l.b16 %v3928
  %v4009 = vunpack.c.l.b16 %v3929
  %v4010 = vunpack.c.l.b16 %v3930
  %v4011 = vunpack.c.l.b16 %v3931
  %v4012 = vunpack.c.l.b16 %v3932
  %v4013 = vunpack.c.l.b16 %v3933
  %v4014 = vunpack.c.l.b16 %v3934
  %v4015 = vunpack.c.l.b16 %v3935
  %v4016 = vunpack.c.l.b16 %v3936
  %v4017 = vunpack.c.l.b16 %v3937
  %v4018 = vunpack.c.l.b16 %v3938
  %v4019 = vunpack.c.l.b16 %v3939
  %v4020 = vunpack.c.l.b16 %v3940
  %v4021 = vunpack.c.l.b16 %v3941
  %v4022 = vunpack.c.l.b16 %v3942
  %v4023 = vunpack.c.l.b16 %v3943
  %v4024 = vpack.c.b16 %v4009, %v4008
  %v4025 = vpack.c.b16 %v4011, %v4010
  %v4026 = vpack.c.b16 %v4013, %v4012
  %v4027 = vpack.c.b16 %v4015, %v4014
  %v4028 = vpack.c.b16 %v4017, %v4016
  %v4029 = vpack.c.b16 %v4019, %v4018
  %v4030 = vpack.c.b16 %v4021, %v4020
  %v4031 = vpack.c.b16 %v4023, %v4022
  %4040 = vmatprep.subr.bf16.mxu0 0
  %4041 = vmatpush1.bf16.msra.mxu0 %v4031
  %4042 = vmatprep.subr.bf16.mxu0 0
  %4043 = vmatpush1.bf16.msra.mxu0 %v4030
  %4044 = vmatprep.subr.bf16.mxu0 0
  %4045 = vmatpush1.bf16.msra.mxu0 %v4029
  %4046 = vmatprep.subr.bf16.mxu0 0
  %4047 = vmatpush1.bf16.msra.mxu0 %v4028
  %4048 = vmatprep.subr.bf16.mxu0 0
  %4049 = vmatpush1.bf16.msra.mxu0 %v4027
  %4050 = vmatprep.subr.bf16.mxu0 0
  %4051 = vmatpush1.bf16.msra.mxu0 %v4026
  %4052 = vmatprep.subr.bf16.mxu0 0
  %4053 = vmatpush1.bf16.msra.mxu0 %v4025
  %4054 = vmatprep.subr.bf16.mxu0 0
  %4055 = vmatpush1.bf16.msra.mxu0 %v4024
  %4056 = vmatprep.subr.bf16.mxu0 0
  %4057 = vmatpush2.bf16.msra.mxu0 0
  %4058 = vmatprep.subr.bf16.mxu0 0
  %4059 = vmatpush2.bf16.msra.mxu0 0
  %4060 = vmatprep.subr.bf16.mxu0 0
  %4061 = vmatpush2.bf16.msra.mxu0 0
  %4062 = vmatprep.subr.bf16.mxu0 0
  %4063 = vmatpush2.bf16.msra.mxu0 0
  %4064 = vmatprep.subr.bf16.mxu0 0
  %4065 = vmatpush2.bf16.msra.mxu0 0
  %4066 = vmatprep.subr.bf16.mxu0 0
  %4067 = vmatpush2.bf16.msra.mxu0 0
  %4068 = vmatprep.subr.bf16.mxu0 0
  %4069 = vmatpush2.bf16.msra.mxu0 0
  %4070 = vmatprep.subr.bf16.mxu0 0
  %4071 = vmatpush2.bf16.msra.mxu0 0
  %4072 = vmatprep.mubr.bf16.mxu0 0
  %4073 = vmatmul.mubr.bf16.gmra.mxu0 %v3976
  %v4074 = vpop.f32.mrf.mxu0
  %v4075 = vadd.f32 0.0, %v4074
  %v4076 = vpop.f32.mrf.mxu0
  %v4077 = vpop.f32.mrf.mxu0
  %v4078 = vadd.f32 0.0, %v4077
  %v4079 = vpop.f32.mrf.mxu0
  %4080 = vmatprep.mubr.bf16.mxu0 0
  %4081 = vmatmul.mubr.bf16.gmra.mxu0 %v3977
  %v4082 = vpop.f32.mrf.mxu0
  %v4083 = vadd.f32 0.0, %v4082
  %v4084 = vpop.f32.mrf.mxu0
  %v4085 = vpop.f32.mrf.mxu0
  %v4086 = vadd.f32 0.0, %v4085
  %v4087 = vpop.f32.mrf.mxu0
  %4088 = vmatprep.mubr.bf16.mxu0 0
  %4089 = vmatmul.mubr.bf16.gmra.mxu0 %v3978
  %v4090 = vpop.f32.mrf.mxu0
  %v4091 = vadd.f32 0.0, %v4090
  %v4092 = vpop.f32.mrf.mxu0
  %v4093 = vpop.f32.mrf.mxu0
  %v4094 = vadd.f32 0.0, %v4093
  %v4095 = vpop.f32.mrf.mxu0
  %4096 = vmatprep.mubr.bf16.mxu0 0
  %4097 = vmatmul.mubr.bf16.gmra.mxu0 %v3979
  %v4098 = vpop.f32.mrf.mxu0
  %v4099 = vadd.f32 0.0, %v4098
  %v4100 = vpop.f32.mrf.mxu0
  %v4101 = vpop.f32.mrf.mxu0
  %v4102 = vadd.f32 0.0, %v4101
  %v4103 = vpop.f32.mrf.mxu0
  %4104 = vmatprep.mubr.bf16.mxu0 0
  %4105 = vmatmul.mubr.bf16.gmra.mxu0 %v3980
  %v4106 = vpop.f32.mrf.mxu0
  %v4107 = vadd.f32 0.0, %v4106
  %v4108 = vpop.f32.mrf.mxu0
  %v4109 = vpop.f32.mrf.mxu0
  %v4110 = vadd.f32 0.0, %v4109
  %v4111 = vpop.f32.mrf.mxu0
  %4112 = vmatprep.mubr.bf16.mxu0 0
  %4113 = vmatmul.mubr.bf16.gmra.mxu0 %v3981
  %v4114 = vpop.f32.mrf.mxu0
  %v4115 = vadd.f32 0.0, %v4114
  %v4116 = vpop.f32.mrf.mxu0
  %v4117 = vpop.f32.mrf.mxu0
  %v4118 = vadd.f32 0.0, %v4117
  %v4119 = vpop.f32.mrf.mxu0
  %4120 = vmatprep.mubr.bf16.mxu0 0
  %4121 = vmatmul.mubr.bf16.gmra.mxu0 %v3982
  %v4122 = vpop.f32.mrf.mxu0
  %v4123 = vadd.f32 0.0, %v4122
  %v4124 = vpop.f32.mrf.mxu0
  %v4125 = vpop.f32.mrf.mxu0
  %v4126 = vadd.f32 0.0, %v4125
  %v4127 = vpop.f32.mrf.mxu0
  %4128 = vmatprep.mubr.bf16.mxu0 0
  %4129 = vmatmul.mubr.bf16.gmra.mxu0 %v3983
  %v4130 = vpop.f32.mrf.mxu0
  %v4131 = vadd.f32 0.0, %v4130
  %v4132 = vpop.f32.mrf.mxu0
  %v4133 = vpop.f32.mrf.mxu0
  %v4134 = vadd.f32 0.0, %v4133
  %v4135 = vpop.f32.mrf.mxu0
  %4136 = vdwg.mxu0
  %v4137 = vadd.f32 %v4075, %v4078
  %v4138 = vadd.f32 %v4137, %v4083
  %v4139 = vadd.f32 %v4138, %v4086
  %v4140 = vadd.f32 %v4139, %v4091
  %v4141 = vadd.f32 %v4140, %v4094
  %v4142 = vadd.f32 %v4141, %v4099
  %v4143 = vadd.f32 %v4142, %v4102
  %v4144 = vadd.f32 %v4143, %v4107
  %v4145 = vadd.f32 %v4144, %v4110
  %v4146 = vadd.f32 %v4145, %v4115
  %v4147 = vadd.f32 %v4146, %v4118
  %v4148 = vadd.f32 %v4147, %v4123
  %v4149 = vadd.f32 %v4148, %v4126
  %v4150 = vadd.f32 %v4149, %v4131
  %v4151 = vadd.f32 %v4150, %v4134
  %v4152 = vrot.slane %v4151, 4
  %v4153 = vadd.f32 %v4151, %v4152
  %v4154 = vrot.slane %v4153, 2
  %v4155 = vadd.f32 %v4153, %v4154
  %v4156 = vrot.slane %v4155, 1
  %v4157 = vadd.f32 %v4155, %v4156
  %v4158 = vmul.f32 %v4157, %v2326
  %v4159 = vmul.f32 %v4075, %v4075
  %v4160 = vmul.f32 %v4078, %v4078
  %v4161 = vmul.f32 %v4083, %v4083
  %v4162 = vmul.f32 %v4086, %v4086
  %v4163 = vmul.f32 %v4091, %v4091
  %v4164 = vmul.f32 %v4094, %v4094
  %v4165 = vmul.f32 %v4099, %v4099
  %v4166 = vmul.f32 %v4102, %v4102
  %v4167 = vmul.f32 %v4107, %v4107
  %v4168 = vmul.f32 %v4110, %v4110
  %v4169 = vmul.f32 %v4115, %v4115
  %v4170 = vmul.f32 %v4118, %v4118
  %v4171 = vmul.f32 %v4123, %v4123
  %v4172 = vmul.f32 %v4126, %v4126
  %v4173 = vmul.f32 %v4131, %v4131
  %v4174 = vmul.f32 %v4134, %v4134
  %v4175 = vadd.f32 %v4159, %v4160
  %v4176 = vadd.f32 %v4175, %v4161
  %v4177 = vadd.f32 %v4176, %v4162
  %v4178 = vadd.f32 %v4177, %v4163
  %v4179 = vadd.f32 %v4178, %v4164
  %v4180 = vadd.f32 %v4179, %v4165
  %v4181 = vadd.f32 %v4180, %v4166
  %v4182 = vadd.f32 %v4181, %v4167
  %v4183 = vadd.f32 %v4182, %v4168
  %v4184 = vadd.f32 %v4183, %v4169
  %v4185 = vadd.f32 %v4184, %v4170
  %v4186 = vadd.f32 %v4185, %v4171
  %v4187 = vadd.f32 %v4186, %v4172
  %v4188 = vadd.f32 %v4187, %v4173
  %v4189 = vadd.f32 %v4188, %v4174
  %v4190 = vrot.slane %v4189, 4
  %v4191 = vadd.f32 %v4189, %v4190
  %v4192 = vrot.slane %v4191, 2
  %v4193 = vadd.f32 %v4191, %v4192
  %v4194 = vrot.slane %v4193, 1
  %v4195 = vadd.f32 %v4193, %v4194
  %v4196 = vmul.f32 %v4195, %v2326
  %v4197 = vmul.f32 %v4158, %v4158
  %v4198 = vsub.f32 %v4196, %v4197
  %v4199 = vsub.f32 %v4075, %v4158
  %v4200 = vsub.f32 %v4078, %v4158
  %v4201 = vsub.f32 %v4083, %v4158
  %v4202 = vsub.f32 %v4086, %v4158
  %v4203 = vsub.f32 %v4091, %v4158
  %v4204 = vsub.f32 %v4094, %v4158
  %v4205 = vsub.f32 %v4099, %v4158
  %v4206 = vsub.f32 %v4102, %v4158
  %v4207 = vsub.f32 %v4107, %v4158
  %v4208 = vsub.f32 %v4110, %v4158
  %v4209 = vsub.f32 %v4115, %v4158
  %v4210 = vsub.f32 %v4118, %v4158
  %v4211 = vsub.f32 %v4123, %v4158
  %v4212 = vsub.f32 %v4126, %v4158
  %v4213 = vsub.f32 %v4131, %v4158
  %v4214 = vsub.f32 %v4134, %v4158
  %v4215 = vld [vmem:[%s8] sm:$0x1]
  %v4216 = vadd.f32 %v4198, 1e-05
  %v4217 = vrsqrt.pop %v4216
  %v4218 = vmul.f32 %v4215, %v4217
  %v4220 = vlaneseq
  %v4221 = vshrl.u32 %v4220, 7
  %v4222 = vsub.s32 0, %v4221
  %v4223 = vrot.slane %v4218, %v4222
  %v4225 = vmul.f32 %v4199, %v4223
  %v4226 = vmul.f32 %v4200, %v4223
  %v4227 = vmul.f32 %v4201, %v4223
  %v4228 = vmul.f32 %v4202, %v4223
  %v4229 = vmul.f32 %v4203, %v4223
  %v4230 = vmul.f32 %v4204, %v4223
  %v4231 = vmul.f32 %v4205, %v4223
  %v4232 = vmul.f32 %v4206, %v4223
  %v4233 = vmul.f32 %v4207, %v4223
  %v4234 = vmul.f32 %v4208, %v4223
  %v4235 = vmul.f32 %v4209, %v4223
  %v4236 = vmul.f32 %v4210, %v4223
  %v4237 = vmul.f32 %v4211, %v4223
  %v4238 = vmul.f32 %v4212, %v4223
  %v4239 = vmul.f32 %v4213, %v4223
  %v4240 = vmul.f32 %v4214, %v4223
  %v4241 = vld [vmem:[%s9] sm:$0x1]
  %v4243 = vlaneseq
  %v4244 = vshrl.u32 %v4243, 7
  %v4245 = vsub.s32 0, %v4244
  %v4246 = vrot.slane %v4241, %v4245
  %v4248 = vadd.f32 %v4225, %v4246
  %v4249 = vadd.f32 %v4226, %v4246
  %v4250 = vadd.f32 %v4227, %v4246
  %v4251 = vadd.f32 %v4228, %v4246
  %v4252 = vadd.f32 %v4229, %v4246
  %v4253 = vadd.f32 %v4230, %v4246
  %v4254 = vadd.f32 %v4231, %v4246
  %v4255 = vadd.f32 %v4232, %v4246
  %v4256 = vadd.f32 %v4233, %v4246
  %v4257 = vadd.f32 %v4234, %v4246
  %v4258 = vadd.f32 %v4235, %v4246
  %v4259 = vadd.f32 %v4236, %v4246
  %v4260 = vadd.f32 %v4237, %v4246
  %v4261 = vadd.f32 %v4238, %v4246
  %v4262 = vadd.f32 %v4239, %v4246
  %v4263 = vadd.f32 %v4240, %v4246
  %v4264 = vadd.f32 %v3896, %v4248
  %v4265 = vadd.f32 %v3897, %v4249
  %v4266 = vadd.f32 %v3898, %v4250
  %v4267 = vadd.f32 %v3899, %v4251
  %v4268 = vadd.f32 %v3900, %v4252
  %v4269 = vadd.f32 %v3901, %v4253
  %v4270 = vadd.f32 %v3902, %v4254
  %v4271 = vadd.f32 %v3903, %v4255
  %v4272 = vadd.f32 %v3904, %v4256
  %v4273 = vadd.f32 %v3905, %v4257
  %v4274 = vadd.f32 %v3906, %v4258
  %v4275 = vadd.f32 %v3907, %v4259
  %v4276 = vadd.f32 %v3908, %v4260
  %v4277 = vadd.f32 %v3909, %v4261
  %v4278 = vadd.f32 %v3910, %v4262
  %v4279 = vadd.f32 %v3911, %v4263
  %v4280 = vmax.f32 %v4264, 0.0
  %v4281 = vmax.f32 %v4265, 0.0
  %v4282 = vmax.f32 %v4266, 0.0
  %v4283 = vmax.f32 %v4267, 0.0
  %v4284 = vmax.f32 %v4268, 0.0
  %v4285 = vmax.f32 %v4269, 0.0
  %v4286 = vmax.f32 %v4270, 0.0
  %v4287 = vmax.f32 %v4271, 0.0
  %v4288 = vmax.f32 %v4272, 0.0
  %v4289 = vmax.f32 %v4273, 0.0
  %v4290 = vmax.f32 %v4274, 0.0
  %v4291 = vmax.f32 %v4275, 0.0
  %v4292 = vmax.f32 %v4276, 0.0
  %v4293 = vmax.f32 %v4277, 0.0
  %v4294 = vmax.f32 %v4278, 0.0
  %v4295 = vmax.f32 %v4279, 0.0
  %4296 = vst [vmem:[%s10] sm:$0xff] %v4280
  %4297 = vst [vmem:[%s10 + $0x8] sm:$0xff] %v4281
  %4298 = vst [vmem:[%s10 + $0x10] sm:$0xff] %v4282
  %4299 = vst [vmem:[%s10 + $0x18] sm:$0xff] %v4283
  %4300 = vst [vmem:[%s10 + $0x20] sm:$0xff] %v4284
  %4301 = vst [vmem:[%s10 + $0x28] sm:$0xff] %v4285
  %4302 = vst [vmem:[%s10 + $0x30] sm:$0xff] %v4286
  %4303 = vst [vmem:[%s10 + $0x38] sm:$0xff] %v4287
  %4304 = vst [vmem:[%s10 + $0x40] sm:$0xff] %v4288
  %4305 = vst [vmem:[%s10 + $0x48] sm:$0xff] %v4289
  %4306 = vst [vmem:[%s10 + $0x50] sm:$0xff] %v4290
  %4307 = vst [vmem:[%s10 + $0x58] sm:$0xff] %v4291
  %4308 = vst [vmem:[%s10 + $0x60] sm:$0xff] %v4292
  %4309 = vst [vmem:[%s10 + $0x68] sm:$0xff] %v4293
  %4310 = vst [vmem:[%s10 + $0x70] sm:$0xff] %v4294
  %4311 = vst [vmem:[%s10 + $0x78] sm:$0xff] %v4295
  // Predicated region
  $region42: #{basic_block_pallas.1} parent=0 // pred_check
    _
  $region43: #{basic_block_pallas.1} parent=0 // pred_check_branch
    %4313 = sbr.rel (0) target = $region45
  $region44: #{basic_block_pallas.1} parent=0 // pred_region
    _
  $region45: #{basic_block_pallas.1} parent=0 // pred_fallthru
    _
  // Predicated region
  $region46: #{basic_block_pallas.1} parent=0 // pred_check
    _
  $region47: #{basic_block_pallas.1} parent=0 // pred_check_branch
    %4315 = sbr.rel (0) target = $region49
  $region48: #{basic_block_pallas.1} parent=0 // pred_region
    _
  $region49: #{basic_block_pallas.1} parent=0 // pred_fallthru
    _

</llo_original>
